<compile_context>
chip_gen: v6e
topology: v6e:2x2x1
jax: 0.10.0
libtpu: 0.0.40
codegen_flags: <defaults>
</compile_context>

<pallas_src>
import functools

import jax
import jax.numpy as jnp
from jax.experimental import pallas as pl
from jax.experimental.pallas import tpu as pltpu


# ----------------------------- small helpers --------------------------------

def _round_up(x, m):
    return (x + m - 1) // m * m


def _cdiv(a, b):
    return -(-a // b)


def _vmem_limit(needed_bytes):
    # Per-call budget with headroom; clamp so it is always legal on the
    # 64 MiB/TC v7x part (never binding on v5e/v6e's 128 MiB).
    return int(min(max(2 * needed_bytes + (8 << 20), 32 << 20), 64 << 20))


def _choose_tm(M):
    # Big row tiles cut weight re-reads; prefer exact divisors, else one
    # full-M tile (always layout-legal), else a ragged 512-row grid (the M
    # axis is never reduced, so masked boundary rows are harmless).
    for tm in (1024, 512, 256, 128):
        if M % tm == 0:
            return tm
    if M <= 1024:
        return M
    return 512


def _choose_tn(cout):
    # Keep the output tile as wide as practical: the x tile is re-DMA'd once
    # per Cout tile, so tn=Cout (or 512-wide chunks) minimizes x re-reads.
    if cout > 512 and cout % 512 == 0:
        return 512
    return cout


def _choose_tk(K):
    for tk in (512, 256, 128):
        if K > tk and K % tk == 0:
            return tk
    return K


def _split_for_megacore(M, tm, cout, tn):
    # v7x shards "parallel" grid axes across its 2 TensorCores; make sure at
    # least 2 parallel tiles exist.  Split rows first (no extra x re-reads).
    if _cdiv(M, tm) * (cout // tn) >= 2:
        return tm, tn
    half_m = _round_up(max(M // 2, 8), 8)
    if half_m < M:
        return min(tm, half_m), tn
    if tn % 256 == 0:
        return tm, tn // 2
    return tm, tn


# ----------------------------- Pallas kernels ------------------------------

def _mm_bn_kernel(relu, x_ref, w_ref, b_ref, o_ref, acc_ref):
    k = pl.program_id(2)

    @pl.when(k == 0)
    def _():
        # Bias folded into the accumulator init (saves an epilogue add).
        acc_ref[...] = jnp.broadcast_to(b_ref[...].astype(jnp.float32),
                                        acc_ref.shape)

    acc_ref[...] += jnp.dot(x_ref[...], w_ref[...],
                            preferred_element_type=jnp.float32)

    @pl.when(k == pl.num_programs(2) - 1)
    def _():
        y = acc_ref[...]
        if relu:
            y = jnp.maximum(y, 0.0)
        o_ref[...] = y.astype(o_ref.dtype)


def _mm_bn_res_kernel(relu, x_ref, w_ref, b_ref, r_ref, o_ref, acc_ref):
    k = pl.program_id(2)

    @pl.when(k == 0)
    def _():
        acc_ref[...] = jnp.broadcast_to(b_ref[...].astype(jnp.float32),
                                        acc_ref.shape)

    acc_ref[...] += jnp.dot(x_ref[...], w_ref[...],
                            preferred_element_type=jnp.float32)

    @pl.when(k == pl.num_programs(2) - 1)
    def _():
        y = acc_ref[...] + r_ref[...].astype(jnp.float32)
        if relu:
            y = jnp.maximum(y, 0.0)
        o_ref[...] = y.astype(o_ref.dtype)


def _conv3x3_s1_kernel(Wp, Mo, C, relu, x_ref, w_ref, b_ref, o_ref, acc_ref):
    # x_ref: (rows, C) = one padded image flattened row-major with width Wp.
    # Output row m = h*Wp + w (columns w >= W are garbage, cropped by caller);
    # tap (kh, kw) reads x rows m + kh*Wp + kw, i.e. a statically shifted
    # VMEM window -- no im2col slab is ever written to HBM.
    cout = o_ref.shape[-1]
    acc_ref[...] = jnp.broadcast_to(b_ref[...].astype(jnp.float32), (Mo, cout))
    for kh in range(3):
        for kw in range(3):
            off = kh * Wp + kw
            t = kh * 3 + kw
            acc_ref[...] += jnp.dot(x_ref[pl.ds(off, Mo), :],
                                    w_ref[pl.ds(t * C, C), :],
                                    preferred_element_type=jnp.float32)
    y = acc_ref[...]
    if relu:
        y = jnp.maximum(y, 0.0)
    o_ref[...] = y.astype(o_ref.dtype)


# --------------------------- fused 1x1 conv matmul ---------------------------

def fused_matmul_bn(x2d, w, bias, residual=None, relu=True):
    """relu?((x2d @ w) + bias [+ residual]); bf16 MXU inputs, f32 accumulate."""
    M, K = x2d.shape
    Kw, Cout = w.shape
    assert K == Kw

    x2d = x2d.astype(jnp.bfloat16)
    w = w.astype(jnp.bfloat16)
    bias2 = bias.reshape(1, Cout).astype(jnp.float32)

    tm = _choose_tm(M)
    tn = _choose_tn(Cout)
    tk = _choose_tk(K)
    tm, tn = _split_for_megacore(M, tm, Cout, tn)

    grid = (_cdiv(M, tm), Cout // tn, K // tk)

    x_spec = pl.BlockSpec((tm, tk), lambda i, j, k: (i, k))
    w_spec = pl.BlockSpec((tk, tn), lambda i, j, k: (k, j))
    b_spec = pl.BlockSpec((1, tn), lambda i, j, k: (0, j))
    o_spec = pl.BlockSpec((tm, tn), lambda i, j, k: (i, j))

    # Working set: double-buffered x/w/bias/out tiles (+ residual) + f32 acc.
    needed = 2 * (tm * tk * 2 + tk * tn * 2 + tn * 4 + tm * tn * 2) + tm * tn * 4

    if residual is None:
        kernel = functools.partial(_mm_bn_kernel, relu)
        in_specs = [x_spec, w_spec, b_spec]
        args = (x2d, w, bias2)
    else:
        residual = residual.astype(jnp.bfloat16)
        kernel = functools.partial(_mm_bn_res_kernel, relu)
        in_specs = [x_spec, w_spec, b_spec, o_spec]
        args = (x2d, w, bias2, residual)
        needed += 2 * tm * tn * 2

    return pl.pallas_call(
        kernel,
        out_shape=jax.ShapeDtypeStruct((M, Cout), jnp.bfloat16),
        grid_spec=pltpu.PrefetchScalarGridSpec(
            num_scalar_prefetch=0,
            grid=grid,
            in_specs=in_specs,
            out_specs=o_spec,
            scratch_shapes=[pltpu.VMEM((tm, tn), jnp.float32)],
        ),
        compiler_params=pltpu.CompilerParams(
            dimension_semantics=("parallel", "parallel", "arbitrary"),
            vmem_limit_bytes=_vmem_limit(needed),
        ),
    )(*args)


def ref_matmul_bn(x2d, w, bias, residual=None, relu=True):
    """Pure-JAX reference of the fused kernel (same bf16-in / f32-acc math)."""
    y = jnp.dot(x2d.astype(jnp.bfloat16), w.astype(jnp.bfloat16),
                preferred_element_type=jnp.float32)
    y = y + bias.reshape(1, -1).astype(jnp.float32)
    if residual is not None:
        y = y + residual.astype(jnp.float32)
    if relu:
        y = jnp.maximum(y, 0.0)
    return y.astype(jnp.bfloat16)


# --------------------------- conv / pool glue -------------------------------

def conv1x1(mm, x, w, bias, residual=None, relu=True):
    # x: (N, H, W, Cin); w: (Cin, Cout) with BN scale pre-folded.
    N, H, W, C = x.shape
    x2 = x.reshape(N * H * W, C)
    res2 = None if residual is None else residual.reshape(N * H * W, -1)
    y = mm(x2, w, bias, res2, relu)
    return y.reshape(N, H, W, -1)


def conv3x3(x, w9, bias, stride, relu=True, use_pallas=True):
    """3x3 conv (pad=1) + folded-BN bias + ReLU on an NHWC input."""
    N, H, W, C = x.shape
    Cout = w9.shape[1]

    if use_pallas and stride == 1:
        Wp = W + 2
        rows = (H + 3) * Wp  # pad H by (1, 2): the extra bottom row keeps every
                             # tap window of the garbage columns in-bounds.
        Mo = H * Wp
        needed = (2 * (rows * C * 2 + 9 * C * Cout * 2 + Cout * 4 +
                       Mo * Cout * 2) + Mo * Cout * 4 + Mo * C * 2)
        if needed <= (40 << 20):
            xp = jnp.pad(x.astype(jnp.bfloat16),
                         ((0, 0), (1, 2), (1, 1), (0, 0))).reshape(N, rows, C)
            out = pl.pallas_call(
                functools.partial(_conv3x3_s1_kernel, Wp, Mo, C, relu),
                out_shape=jax.ShapeDtypeStruct((N, Mo, Cout), jnp.bfloat16),
                grid_spec=pltpu.PrefetchScalarGridSpec(
                    num_scalar_prefetch=0,
                    grid=(N,),
                    in_specs=[
                        pl.BlockSpec((None, rows, C), lambda n: (n, 0, 0)),
                        pl.BlockSpec((9 * C, Cout), lambda n: (0, 0)),
                        pl.BlockSpec((1, Cout), lambda n: (0, 0)),
                    ],
                    out_specs=pl.BlockSpec((None, Mo, Cout),
                                           lambda n: (n, 0, 0)),
                    scratch_shapes=[pltpu.VMEM((Mo, Cout), jnp.float32)],
                ),
                compiler_params=pltpu.CompilerParams(
                    dimension_semantics=("parallel",),
                    vmem_limit_bytes=_vmem_limit(needed),
                ),
            )(xp, w9.astype(jnp.bfloat16),
              bias.reshape(1, Cout).astype(jnp.float32))
            # Crop the Wp-stride garbage columns back to (N, H, W, Cout).
            return out.reshape(N, H, Wp, Cout)[:, :, :W, :]
        # TODO(synk): tile the per-image slab over output rows for very large
        #             spatial sizes instead of falling back to im2col.

    # Stride-2 (block0) and pure-JAX reference path: im2col + fused matmul.
    # TODO(synk): stride-2 could also avoid im2col via even/odd W/H phases.
    mm = fused_matmul_bn if use_pallas else ref_matmul_bn
    xp = jnp.pad(x, ((0, 0), (1, 1), (1, 1), (0, 0)))
    Ho = (H - 1) // stride + 1
    Wo = (W - 1) // stride + 1
    cols = []
    for kh in range(3):
        for kw in range(3):
            patch = xp[:, kh:kh + (Ho - 1) * stride + 1:stride,
                          kw:kw + (Wo - 1) * stride + 1:stride, :]
            cols.append(patch)
    x2 = jnp.concatenate(cols, axis=-1).reshape(N * Ho * Wo, 9 * C)
    y = mm(x2, w9, bias, None, relu)
    return y.reshape(N, Ho, Wo, Cout)


def avgpool2x2(x):
    # AvgPool2d(2,2) on the shortcut; small relative to the convs, left to XLA.
    # TODO(synk): could be folded into the downsample 1x1 conv as a 4-tap
    #             K-axis reduction to drop the pooled intermediate.
    N, H, W, C = x.shape
    y = x.reshape(N, H // 2, 2, W // 2, 2, C)
    return jnp.mean(y.astype(jnp.float32), axis=(2, 4)).astype(jnp.bfloat16)


# ----------------------------- parameter init -------------------------------

def _fold_bn(key, c, eps=1e-5):
    k1, k2, k3, k4 = jax.random.split(key, 4)
    gamma = 1.0 + 0.1 * jax.random.normal(k1, (c,), jnp.float32)
    beta = 0.1 * jax.random.normal(k2, (c,), jnp.float32)
    mean = 0.1 * jax.random.normal(k3, (c,), jnp.float32)
    var = 0.5 + jax.random.uniform(k4, (c,), jnp.float32)
    scale = gamma / jnp.sqrt(var + eps)
    bias = beta - mean * scale
    return scale, bias


def _conv_w(key, cin, cout, k=1):
    fan_in = cin * k * k
    w = jax.random.normal(key, (k, k, cin, cout), jnp.float32) * (2.0 / fan_in) ** 0.5
    if k == 1:
        return w.reshape(cin, cout)
    return w.reshape(k * k * cin, cout)  # (kh, kw, cin) flatten == tap order


def init_layer4_params(key, inplanes, planes, expansion=4):
    outplanes = planes * expansion
    params = []
    for b in range(3):
        cin = inplanes if b == 0 else outplanes
        keys = jax.random.split(jax.random.fold_in(key, b), 8)
        blk = dict(
            conv1_w=_conv_w(keys[0], cin, planes, 1),
            bn1=_fold_bn(keys[1], planes),
            conv2_w=_conv_w(keys[2], planes, planes, 3),
            bn2=_fold_bn(keys[3], planes),
            conv3_w=_conv_w(keys[4], planes, outplanes, 1),
            bn3=_fold_bn(keys[5], outplanes),
        )
        if b == 0:
            blk["down_w"] = _conv_w(keys[6], cin, outplanes, 1)
            blk["down_bn"] = _fold_bn(keys[7], outplanes)
        params.append(blk)
    return params


def prepare_params(raw):
    """Fold BN scale into weight columns (f32) then cast weights to bf16."""
    prepared = []
    for blk in raw:
        p = {}
        for i, name in enumerate(("conv1", "conv2", "conv3"), start=1):
            w = blk[name + "_w"]
            scale, bias = blk["bn%d" % i]
            p[name + "_w"] = (w * scale[None, :]).astype(jnp.bfloat16)
            p[name + "_b"] = bias.astype(jnp.float32)
        if "down_w" in blk:
            scale, bias = blk["down_bn"]
            p["down_w"] = (blk["down_w"] * scale[None, :]).astype(jnp.bfloat16)
            p["down_b"] = bias.astype(jnp.float32)
        prepared.append(p)
    return prepared


# ------------------------------- forward pass -------------------------------

def _bottleneck(x, p, stride, has_down, use_pallas):
    mm = fused_matmul_bn if use_pallas else ref_matmul_bn
    out = conv1x1(mm, x, p["conv1_w"], p["conv1_b"], relu=True)
    out = conv3x3(out, p["conv2_w"], p["conv2_b"], stride=stride, relu=True,
                  use_pallas=use_pallas)
    if has_down:
        idn = avgpool2x2(x) if stride == 2 else x
        idn = conv1x1(mm, idn, p["down_w"], p["down_b"], relu=False)
    else:
        idn = x
    out = conv1x1(mm, out, p["conv3_w"], p["conv3_b"], residual=idn, relu=True)
    return out


def center_back_forward(x_nchw, params, use_pallas=True):
    # Cast before the boundary transposes so the pure-layout shuffles move
    # half the bytes.
    x = jnp.transpose(x_nchw.astype(jnp.bfloat16), (0, 2, 3, 1))  # NCHW->NHWC
    x = _bottleneck(x, params[0], stride=2, has_down=True, use_pallas=use_pallas)
    x = _bottleneck(x, params[1], stride=1, has_down=False, use_pallas=use_pallas)
    x = _bottleneck(x, params[2], stride=1, has_down=False, use_pallas=use_pallas)
    return jnp.transpose(x, (0, 3, 1, 2)).astype(jnp.float32)      # NHWC->NCHW


# ----------------------------------- main ------------------------------------

if __name__ == "__main__":
    # Scaled-down layer4: real resnet50d uses inplanes=1024, planes=512
    # (expansion 4 -> 2048 out, spatial /2). Here inplanes=32, planes=16.
    INPLANES, PLANES = 32, 16
    key = jax.random.PRNGKey(0)
    kx, kp = jax.random.split(key)

    x = jax.random.normal(kx, (2, INPLANES, 16, 16), jnp.float32)  # NCHW
    raw = init_layer4_params(kp, INPLANES, PLANES)
    params = prepare_params(raw)

    out = jax.jit(center_back_forward)(x, params)
    out = jax.block_until_ready(out)

    assert out.shape == (2, PLANES * 4, 8, 8), out.shape

    ref = center_back_forward(x, params, use_pallas=False)
    err = float(jnp.max(jnp.abs(out - ref)))
    scale = float(jnp.max(jnp.abs(ref))) + 1.0
    assert err <= 2e-2 * scale, f"mismatch vs reference: {err} (scale {scale})"

    print("KERNEL_OK")
</pallas_src>

<mosaic_0001>
module attributes {stable_mosaic.version = 11 : i64} {
  func.func @_mm_bn_kernel(%arg0: i32, %arg1: i32, %arg2: i32, %arg3: memref<64x32xbf16, #tpu.memory_space<vmem>>, %arg4: memref<32x64xbf16, #tpu.memory_space<vmem>>, %arg5: memref<1x64xf32, #tpu.memory_space<vmem>>, %arg6: memref<64x64xbf16, #tpu.memory_space<vmem>>, %arg7: memref<64x64xf32, #tpu.memory_space<vmem>>) attributes {dimension_semantics = [#tpu.dimension_semantics<parallel>, #tpu.dimension_semantics<parallel>, #tpu.dimension_semantics<arbitrary>], iteration_bounds = array<i64: 2, 1, 1>, scalar_prefetch = 0 : i64, scratch_operands = 1 : i64, tpu.core_type = #tpu.core_type<tc>, window_params = [{transform_indices = @transform_0, window_bounds = array<i64: 64, 32>}, {transform_indices = @transform_1, window_bounds = array<i64: 32, 64>}, {transform_indices = @transform_2, window_bounds = array<i64: 1, 64>}, {transform_indices = @transform_3, window_bounds = array<i64: 64, 64>}]} {
    %c0_i32 = arith.constant 0 : i32
    %0 = arith.cmpi eq, %arg2, %c0_i32 : i32
    %1 = arith.extui %0 : i1 to i32
    %c0_i32_0 = arith.constant 0 : i32
    %2 = arith.cmpi ne, %1, %c0_i32_0 : i32
    scf.if %2 {
      %c0_10 = arith.constant 0 : index
      %c0_11 = arith.constant 0 : index
      %12 = vector.load %arg5[%c0_10, %c0_11] : memref<1x64xf32, #tpu.memory_space<vmem>>, vector<1x64xf32>
      %13 = vector.shape_cast %12 : vector<1x64xf32> to vector<1x64xf32>
      %14 = vector.broadcast %13 : vector<1x64xf32> to vector<64x64xf32>
      %c0_12 = arith.constant 0 : index
      %c0_13 = arith.constant 0 : index
      %15 = vector.load %arg7[%c0_12, %c0_13] : memref<64x64xf32, #tpu.memory_space<vmem>>, vector<64x64xf32>
      tpu.vector_store %arg7[%c0_12, %c0_13], %14 {strides = array<i32>} : memref<64x64xf32, #tpu.memory_space<vmem>>, vector<64x64xf32>,
    } else {
    }
    %c0 = arith.constant 0 : index
    %c0_1 = arith.constant 0 : index
    %3 = vector.load %arg7[%c0, %c0_1] : memref<64x64xf32, #tpu.memory_space<vmem>>, vector<64x64xf32>
    %c0_2 = arith.constant 0 : index
    %c0_3 = arith.constant 0 : index
    %4 = vector.load %arg3[%c0_2, %c0_3] : memref<64x32xbf16, #tpu.memory_space<vmem>>, vector<64x32xbf16>
    %c0_4 = arith.constant 0 : index
    %c0_5 = arith.constant 0 : index
    %5 = vector.load %arg4[%c0_4, %c0_5] : memref<32x64xbf16, #tpu.memory_space<vmem>>, vector<32x64xbf16>
    %cst = arith.constant dense<0.000000e+00> : vector<64x64xf32>
    %6 = tpu.matmul %4, %5, %cst {dimension_numbers = #tpu.dot_dimension_numbers<[1], [0], [0], [1], [0, 0, 1, 1], [], []>} : vector<64x32xbf16>, vector<32x64xbf16>, vector<64x64xf32> -> vector<64x64xf32>
    %7 = arith.addf %3, %6 : vector<64x64xf32>
    %c0_6 = arith.constant 0 : index
    %c0_7 = arith.constant 0 : index
    %8 = vector.load %arg7[%c0_6, %c0_7] : memref<64x64xf32, #tpu.memory_space<vmem>>, vector<64x64xf32>
    tpu.vector_store %arg7[%c0_6, %c0_7], %7 {strides = array<i32>} : memref<64x64xf32, #tpu.memory_space<vmem>>, vector<64x64xf32>,
    %c0_i32_8 = arith.constant 0 : i32
    %9 = arith.cmpi eq, %arg2, %c0_i32_8 : i32
    %10 = arith.extui %9 : i1 to i32
    %c0_i32_9 = arith.constant 0 : i32
    %11 = arith.cmpi ne, %10, %c0_i32_9 : i32
    scf.if %11 {
      %c0_10 = arith.constant 0 : index
      %c0_11 = arith.constant 0 : index
      %12 = vector.load %arg7[%c0_10, %c0_11] : memref<64x64xf32, #tpu.memory_space<vmem>>, vector<64x64xf32>
      %13 = arith.truncf %12 : vector<64x64xf32> to vector<64x64xbf16>
      %c0_12 = arith.constant 0 : index
      %c0_13 = arith.constant 0 : index
      %14 = vector.load %arg6[%c0_12, %c0_13] : memref<64x64xbf16, #tpu.memory_space<vmem>>, vector<64x64xbf16>
      tpu.vector_store %arg6[%c0_12, %c0_13], %13 {strides = array<i32>} : memref<64x64xbf16, #tpu.memory_space<vmem>>, vector<64x64xbf16>,
    } else {
    }
    return
  }
  func.func @transform_0(%arg0: i32, %arg1: i32, %arg2: i32) -> (i32, i32) {
    %c0_i32 = arith.constant 0 : i32
    return %arg0, %arg2 : i32, i32
  }
  func.func @transform_1(%arg0: i32, %arg1: i32, %arg2: i32) -> (i32, i32) {
    %c0_i32 = arith.constant 0 : i32
    return %arg2, %arg1 : i32, i32
  }
  func.func @transform_2(%arg0: i32, %arg1: i32, %arg2: i32) -> (i32, i32) {
    %c0_i32 = arith.constant 0 : i32
    %c0_i32_0 = arith.constant 0 : i32
    return %c0_i32, %arg1 : i32, i32
  }
  func.func @transform_3(%arg0: i32, %arg1: i32, %arg2: i32) -> (i32, i32) {
    %c0_i32 = arith.constant 0 : i32
    return %arg0, %arg1 : i32, i32
  }
}

module attributes {stable_mosaic.version = 11 : i64} {
  func.func @_mm_bn_kernel(%arg0: i32, %arg1: i32, %arg2: i32, %arg3: memref<256x32xbf16, #tpu.memory_space<vmem>>, %arg4: memref<32x16xbf16, #tpu.memory_space<vmem>>, %arg5: memref<1x16xf32, #tpu.memory_space<vmem>>, %arg6: memref<256x16xbf16, #tpu.memory_space<vmem>>, %arg7: memref<256x16xf32, #tpu.memory_space<vmem>>) attributes {dimension_semantics = [#tpu.dimension_semantics<parallel>, #tpu.dimension_semantics<parallel>, #tpu.dimension_semantics<arbitrary>], iteration_bounds = array<i64: 2, 1, 1>, scalar_prefetch = 0 : i64, scratch_operands = 1 : i64, tpu.core_type = #tpu.core_type<tc>, window_params = [{transform_indices = @transform_0, window_bounds = array<i64: 256, 32>}, {transform_indices = @transform_1, window_bounds = array<i64: 32, 16>}, {transform_indices = @transform_2, window_bounds = array<i64: 1, 16>}, {transform_indices = @transform_3, window_bounds = array<i64: 256, 16>}]} {
    %c0_i32 = arith.constant 0 : i32
    %0 = arith.cmpi eq, %arg2, %c0_i32 : i32
    %1 = arith.extui %0 : i1 to i32
    %c0_i32_0 = arith.constant 0 : i32
    %2 = arith.cmpi ne, %1, %c0_i32_0 : i32
    scf.if %2 {
      %c0_10 = arith.constant 0 : index
      %c0_11 = arith.constant 0 : index
      %12 = vector.load %arg5[%c0_10, %c0_11] : memref<1x16xf32, #tpu.memory_space<vmem>>, vector<1x16xf32>
      %13 = vector.shape_cast %12 : vector<1x16xf32> to vector<1x16xf32>
      %14 = vector.broadcast %13 : vector<1x16xf32> to vector<256x16xf32>
      %c0_12 = arith.constant 0 : index
      %c0_13 = arith.constant 0 : index
      %15 = vector.load %arg7[%c0_12, %c0_13] : memref<256x16xf32, #tpu.memory_space<vmem>>, vector<256x16xf32>
      tpu.vector_store %arg7[%c0_12, %c0_13], %14 {strides = array<i32>} : memref<256x16xf32, #tpu.memory_space<vmem>>, vector<256x16xf32>,
    } else {
    }
    %c0 = arith.constant 0 : index
    %c0_1 = arith.constant 0 : index
    %3 = vector.load %arg7[%c0, %c0_1] : memref<256x16xf32, #tpu.memory_space<vmem>>, vector<256x16xf32>
    %c0_2 = arith.constant 0 : index
    %c0_3 = arith.constant 0 : index
    %4 = vector.load %arg3[%c0_2, %c0_3] : memref<256x32xbf16, #tpu.memory_space<vmem>>, vector<256x32xbf16>
    %c0_4 = arith.constant 0 : index
    %c0_5 = arith.constant 0 : index
    %5 = vector.load %arg4[%c0_4, %c0_5] : memref<32x16xbf16, #tpu.memory_space<vmem>>, vector<32x16xbf16>
    %cst = arith.constant dense<0.000000e+00> : vector<256x16xf32>
    %6 = tpu.matmul %4, %5, %cst {dimension_numbers = #tpu.dot_dimension_numbers<[1], [0], [0], [1], [0, 0, 1, 1], [], []>} : vector<256x32xbf16>, vector<32x16xbf16>, vector<256x16xf32> -> vector<256x16xf32>
    %7 = arith.addf %3, %6 : vector<256x16xf32>
    %c0_6 = arith.constant 0 : index
    %c0_7 = arith.constant 0 : index
    %8 = vector.load %arg7[%c0_6, %c0_7] : memref<256x16xf32, #tpu.memory_space<vmem>>, vector<256x16xf32>
    tpu.vector_store %arg7[%c0_6, %c0_7], %7 {strides = array<i32>} : memref<256x16xf32, #tpu.memory_space<vmem>>, vector<256x16xf32>,
    %c0_i32_8 = arith.constant 0 : i32
    %9 = arith.cmpi eq, %arg2, %c0_i32_8 : i32
    %10 = arith.extui %9 : i1 to i32
    %c0_i32_9 = arith.constant 0 : i32
    %11 = arith.cmpi ne, %10, %c0_i32_9 : i32
    scf.if %11 {
      %c0_10 = arith.constant 0 : index
      %c0_11 = arith.constant 0 : index
      %12 = vector.load %arg7[%c0_10, %c0_11] : memref<256x16xf32, #tpu.memory_space<vmem>>, vector<256x16xf32>
      %cst_12 = arith.constant 0.000000e+00 : f32
      %13 = vector.broadcast %cst_12 : f32 to vector<256x16xf32>
      %14 = arith.maximumf %12, %13 : vector<256x16xf32>
      %15 = arith.truncf %14 : vector<256x16xf32> to vector<256x16xbf16>
      %c0_13 = arith.constant 0 : index
      %c0_14 = arith.constant 0 : index
      %16 = vector.load %arg6[%c0_13, %c0_14] : memref<256x16xbf16, #tpu.memory_space<vmem>>, vector<256x16xbf16>
      tpu.vector_store %arg6[%c0_13, %c0_14], %15 {strides = array<i32>} : memref<256x16xbf16, #tpu.memory_space<vmem>>, vector<256x16xbf16>,
    } else {
    }
    return
  }
  func.func @transform_0(%arg0: i32, %arg1: i32, %arg2: i32) -> (i32, i32) {
    %c0_i32 = arith.constant 0 : i32
    return %arg0, %arg2 : i32, i32
  }
  func.func @transform_1(%arg0: i32, %arg1: i32, %arg2: i32) -> (i32, i32) {
    %c0_i32 = arith.constant 0 : i32
    return %arg2, %arg1 : i32, i32
  }
  func.func @transform_2(%arg0: i32, %arg1: i32, %arg2: i32) -> (i32, i32) {
    %c0_i32 = arith.constant 0 : i32
    %c0_i32_0 = arith.constant 0 : i32
    return %c0_i32, %arg1 : i32, i32
  }
  func.func @transform_3(%arg0: i32, %arg1: i32, %arg2: i32) -> (i32, i32) {
    %c0_i32 = arith.constant 0 : i32
    return %arg0, %arg1 : i32, i32
  }
}

module attributes {stable_mosaic.version = 11 : i64} {
  func.func @_mm_bn_res_kernel(%arg0: i32, %arg1: i32, %arg2: i32, %arg3: memref<64x16xbf16, #tpu.memory_space<vmem>>, %arg4: memref<16x64xbf16, #tpu.memory_space<vmem>>, %arg5: memref<1x64xf32, #tpu.memory_space<vmem>>, %arg6: memref<64x64xbf16, #tpu.memory_space<vmem>>, %arg7: memref<64x64xbf16, #tpu.memory_space<vmem>>, %arg8: memref<64x64xf32, #tpu.memory_space<vmem>>) attributes {dimension_semantics = [#tpu.dimension_semantics<parallel>, #tpu.dimension_semantics<parallel>, #tpu.dimension_semantics<arbitrary>], iteration_bounds = array<i64: 2, 1, 1>, scalar_prefetch = 0 : i64, scratch_operands = 1 : i64, tpu.core_type = #tpu.core_type<tc>, window_params = [{transform_indices = @transform_0, window_bounds = array<i64: 64, 16>}, {transform_indices = @transform_1, window_bounds = array<i64: 16, 64>}, {transform_indices = @transform_2, window_bounds = array<i64: 1, 64>}, {transform_indices = @transform_3, window_bounds = array<i64: 64, 64>}, {transform_indices = @transform_4, window_bounds = array<i64: 64, 64>}]} {
    %c0_i32 = arith.constant 0 : i32
    %0 = arith.cmpi eq, %arg2, %c0_i32 : i32
    %1 = arith.extui %0 : i1 to i32
    %c0_i32_0 = arith.constant 0 : i32
    %2 = arith.cmpi ne, %1, %c0_i32_0 : i32
    scf.if %2 {
      %c0_10 = arith.constant 0 : index
      %c0_11 = arith.constant 0 : index
      %12 = vector.load %arg5[%c0_10, %c0_11] : memref<1x64xf32, #tpu.memory_space<vmem>>, vector<1x64xf32>
      %13 = vector.shape_cast %12 : vector<1x64xf32> to vector<1x64xf32>
      %14 = vector.broadcast %13 : vector<1x64xf32> to vector<64x64xf32>
      %c0_12 = arith.constant 0 : index
      %c0_13 = arith.constant 0 : index
      %15 = vector.load %arg8[%c0_12, %c0_13] : memref<64x64xf32, #tpu.memory_space<vmem>>, vector<64x64xf32>
      tpu.vector_store %arg8[%c0_12, %c0_13], %14 {strides = array<i32>} : memref<64x64xf32, #tpu.memory_space<vmem>>, vector<64x64xf32>,
    } else {
    }
    %c0 = arith.constant 0 : index
    %c0_1 = arith.constant 0 : index
    %3 = vector.load %arg8[%c0, %c0_1] : memref<64x64xf32, #tpu.memory_space<vmem>>, vector<64x64xf32>
    %c0_2 = arith.constant 0 : index
    %c0_3 = arith.constant 0 : index
    %4 = vector.load %arg3[%c0_2, %c0_3] : memref<64x16xbf16, #tpu.memory_space<vmem>>, vector<64x16xbf16>
    %c0_4 = arith.constant 0 : index
    %c0_5 = arith.constant 0 : index
    %5 = vector.load %arg4[%c0_4, %c0_5] : memref<16x64xbf16, #tpu.memory_space<vmem>>, vector<16x64xbf16>
    %cst = arith.constant dense<0.000000e+00> : vector<64x64xf32>
    %6 = tpu.matmul %4, %5, %cst {dimension_numbers = #tpu.dot_dimension_numbers<[1], [0], [0], [1], [0, 0, 1, 1], [], []>} : vector<64x16xbf16>, vector<16x64xbf16>, vector<64x64xf32> -> vector<64x64xf32>
    %7 = arith.addf %3, %6 : vector<64x64xf32>
    %c0_6 = arith.constant 0 : index
    %c0_7 = arith.constant 0 : index
    %8 = vector.load %arg8[%c0_6, %c0_7] : memref<64x64xf32, #tpu.memory_space<vmem>>, vector<64x64xf32>
    tpu.vector_store %arg8[%c0_6, %c0_7], %7 {strides = array<i32>} : memref<64x64xf32, #tpu.memory_space<vmem>>, vector<64x64xf32>,
    %c0_i32_8 = arith.constant 0 : i32
    %9 = arith.cmpi eq, %arg2, %c0_i32_8 : i32
    %10 = arith.extui %9 : i1 to i32
    %c0_i32_9 = arith.constant 0 : i32
    %11 = arith.cmpi ne, %10, %c0_i32_9 : i32
    scf.if %11 {
      %c0_10 = arith.constant 0 : index
      %c0_11 = arith.constant 0 : index
      %12 = vector.load %arg8[%c0_10, %c0_11] : memref<64x64xf32, #tpu.memory_space<vmem>>, vector<64x64xf32>
      %c0_12 = arith.constant 0 : index
      %c0_13 = arith.constant 0 : index
      %13 = vector.load %arg6[%c0_12, %c0_13] : memref<64x64xbf16, #tpu.memory_space<vmem>>, vector<64x64xbf16>
      %14 = arith.extf %13 : vector<64x64xbf16> to vector<64x64xf32>
      %15 = arith.addf %12, %14 : vector<64x64xf32>
      %cst_14 = arith.constant 0.000000e+00 : f32
      %16 = vector.broadcast %cst_14 : f32 to vector<64x64xf32>
      %17 = arith.maximumf %15, %16 : vector<64x64xf32>
      %18 = arith.truncf %17 : vector<64x64xf32> to vector<64x64xbf16>
      %c0_15 = arith.constant 0 : index
      %c0_16 = arith.constant 0 : index
      %19 = vector.load %arg7[%c0_15, %c0_16] : memref<64x64xbf16, #tpu.memory_space<vmem>>, vector<64x64xbf16>
      tpu.vector_store %arg7[%c0_15, %c0_16], %18 {strides = array<i32>} : memref<64x64xbf16, #tpu.memory_space<vmem>>, vector<64x64xbf16>,
    } else {
    }
    return
  }
  func.func @transform_0(%arg0: i32, %arg1: i32, %arg2: i32) -> (i32, i32) {
    %c0_i32 = arith.constant 0 : i32
    return %arg0, %arg2 : i32, i32
  }
  func.func @transform_1(%arg0: i32, %arg1: i32, %arg2: i32) -> (i32, i32) {
    %c0_i32 = arith.constant 0 : i32
    return %arg2, %arg1 : i32, i32
  }
  func.func @transform_2(%arg0: i32, %arg1: i32, %arg2: i32) -> (i32, i32) {
    %c0_i32 = arith.constant 0 : i32
    %c0_i32_0 = arith.constant 0 : i32
    return %c0_i32, %arg1 : i32, i32
  }
  func.func @transform_3(%arg0: i32, %arg1: i32, %arg2: i32) -> (i32, i32) {
    %c0_i32 = arith.constant 0 : i32
    return %arg0, %arg1 : i32, i32
  }
  func.func @transform_4(%arg0: i32, %arg1: i32, %arg2: i32) -> (i32, i32) {
    %c0_i32 = arith.constant 0 : i32
    return %arg0, %arg1 : i32, i32
  }
}

module attributes {stable_mosaic.version = 11 : i64} {
  func.func @_mm_bn_kernel(%arg0: i32, %arg1: i32, %arg2: i32, %arg3: memref<64x144xbf16, #tpu.memory_space<vmem>>, %arg4: memref<144x16xbf16, #tpu.memory_space<vmem>>, %arg5: memref<1x16xf32, #tpu.memory_space<vmem>>, %arg6: memref<64x16xbf16, #tpu.memory_space<vmem>>, %arg7: memref<64x16xf32, #tpu.memory_space<vmem>>) attributes {dimension_semantics = [#tpu.dimension_semantics<parallel>, #tpu.dimension_semantics<parallel>, #tpu.dimension_semantics<arbitrary>], iteration_bounds = array<i64: 2, 1, 1>, scalar_prefetch = 0 : i64, scratch_operands = 1 : i64, tpu.core_type = #tpu.core_type<tc>, window_params = [{transform_indices = @transform_0, window_bounds = array<i64: 64, 144>}, {transform_indices = @transform_1, window_bounds = array<i64: 144, 16>}, {transform_indices = @transform_2, window_bounds = array<i64: 1, 16>}, {transform_indices = @transform_3, window_bounds = array<i64: 64, 16>}]} {
    %c0_i32 = arith.constant 0 : i32
    %0 = arith.cmpi eq, %arg2, %c0_i32 : i32
    %1 = arith.extui %0 : i1 to i32
    %c0_i32_0 = arith.constant 0 : i32
    %2 = arith.cmpi ne, %1, %c0_i32_0 : i32
    scf.if %2 {
      %c0_10 = arith.constant 0 : index
      %c0_11 = arith.constant 0 : index
      %12 = vector.load %arg5[%c0_10, %c0_11] : memref<1x16xf32, #tpu.memory_space<vmem>>, vector<1x16xf32>
      %13 = vector.shape_cast %12 : vector<1x16xf32> to vector<1x16xf32>
      %14 = vector.broadcast %13 : vector<1x16xf32> to vector<64x16xf32>
      %c0_12 = arith.constant 0 : index
      %c0_13 = arith.constant 0 : index
      %15 = vector.load %arg7[%c0_12, %c0_13] : memref<64x16xf32, #tpu.memory_space<vmem>>, vector<64x16xf32>
      tpu.vector_store %arg7[%c0_12, %c0_13], %14 {strides = array<i32>} : memref<64x16xf32, #tpu.memory_space<vmem>>, vector<64x16xf32>,
    } else {
    }
    %c0 = arith.constant 0 : index
    %c0_1 = arith.constant 0 : index
    %3 = vector.load %arg7[%c0, %c0_1] : memref<64x16xf32, #tpu.memory_space<vmem>>, vector<64x16xf32>
    %c0_2 = arith.constant 0 : index
    %c0_3 = arith.constant 0 : index
    %4 = vector.load %arg3[%c0_2, %c0_3] : memref<64x144xbf16, #tpu.memory_space<vmem>>, vector<64x144xbf16>
    %c0_4 = arith.constant 0 : index
    %c0_5 = arith.constant 0 : index
    %5 = vector.load %arg4[%c0_4, %c0_5] : memref<144x16xbf16, #tpu.memory_space<vmem>>, vector<144x16xbf16>
    %cst = arith.constant dense<0.000000e+00> : vector<64x16xf32>
    %6 = tpu.matmul %4, %5, %cst {dimension_numbers = #tpu.dot_dimension_numbers<[1], [0], [0], [1], [0, 0, 1, 1], [], []>} : vector<64x144xbf16>, vector<144x16xbf16>, vector<64x16xf32> -> vector<64x16xf32>
    %7 = arith.addf %3, %6 : vector<64x16xf32>
    %c0_6 = arith.constant 0 : index
    %c0_7 = arith.constant 0 : index
    %8 = vector.load %arg7[%c0_6, %c0_7] : memref<64x16xf32, #tpu.memory_space<vmem>>, vector<64x16xf32>
    tpu.vector_store %arg7[%c0_6, %c0_7], %7 {strides = array<i32>} : memref<64x16xf32, #tpu.memory_space<vmem>>, vector<64x16xf32>,
    %c0_i32_8 = arith.constant 0 : i32
    %9 = arith.cmpi eq, %arg2, %c0_i32_8 : i32
    %10 = arith.extui %9 : i1 to i32
    %c0_i32_9 = arith.constant 0 : i32
    %11 = arith.cmpi ne, %10, %c0_i32_9 : i32
    scf.if %11 {
      %c0_10 = arith.constant 0 : index
      %c0_11 = arith.constant 0 : index
      %12 = vector.load %arg7[%c0_10, %c0_11] : memref<64x16xf32, #tpu.memory_space<vmem>>, vector<64x16xf32>
      %cst_12 = arith.constant 0.000000e+00 : f32
      %13 = vector.broadcast %cst_12 : f32 to vector<64x16xf32>
      %14 = arith.maximumf %12, %13 : vector<64x16xf32>
      %15 = arith.truncf %14 : vector<64x16xf32> to vector<64x16xbf16>
      %c0_13 = arith.constant 0 : index
      %c0_14 = arith.constant 0 : index
      %16 = vector.load %arg6[%c0_13, %c0_14] : memref<64x16xbf16, #tpu.memory_space<vmem>>, vector<64x16xbf16>
      tpu.vector_store %arg6[%c0_13, %c0_14], %15 {strides = array<i32>} : memref<64x16xbf16, #tpu.memory_space<vmem>>, vector<64x16xbf16>,
    } else {
    }
    return
  }
  func.func @transform_0(%arg0: i32, %arg1: i32, %arg2: i32) -> (i32, i32) {
    %c0_i32 = arith.constant 0 : i32
    return %arg0, %arg2 : i32, i32
  }
  func.func @transform_1(%arg0: i32, %arg1: i32, %arg2: i32) -> (i32, i32) {
    %c0_i32 = arith.constant 0 : i32
    return %arg2, %arg1 : i32, i32
  }
  func.func @transform_2(%arg0: i32, %arg1: i32, %arg2: i32) -> (i32, i32) {
    %c0_i32 = arith.constant 0 : i32
    %c0_i32_0 = arith.constant 0 : i32
    return %c0_i32, %arg1 : i32, i32
  }
  func.func @transform_3(%arg0: i32, %arg1: i32, %arg2: i32) -> (i32, i32) {
    %c0_i32 = arith.constant 0 : i32
    return %arg0, %arg1 : i32, i32
  }
}

module attributes {stable_mosaic.version = 11 : i64} {
  func.func @_mm_bn_kernel(%arg0: i32, %arg1: i32, %arg2: i32, %arg3: memref<64x64xbf16, #tpu.memory_space<vmem>>, %arg4: memref<64x16xbf16, #tpu.memory_space<vmem>>, %arg5: memref<1x16xf32, #tpu.memory_space<vmem>>, %arg6: memref<64x16xbf16, #tpu.memory_space<vmem>>, %arg7: memref<64x16xf32, #tpu.memory_space<vmem>>) attributes {dimension_semantics = [#tpu.dimension_semantics<parallel>, #tpu.dimension_semantics<parallel>, #tpu.dimension_semantics<arbitrary>], iteration_bounds = array<i64: 2, 1, 1>, scalar_prefetch = 0 : i64, scratch_operands = 1 : i64, tpu.core_type = #tpu.core_type<tc>, window_params = [{transform_indices = @transform_0, window_bounds = array<i64: 64, 64>}, {transform_indices = @transform_1, window_bounds = array<i64: 64, 16>}, {transform_indices = @transform_2, window_bounds = array<i64: 1, 16>}, {transform_indices = @transform_3, window_bounds = array<i64: 64, 16>}]} {
    %c0_i32 = arith.constant 0 : i32
    %0 = arith.cmpi eq, %arg2, %c0_i32 : i32
    %1 = arith.extui %0 : i1 to i32
    %c0_i32_0 = arith.constant 0 : i32
    %2 = arith.cmpi ne, %1, %c0_i32_0 : i32
    scf.if %2 {
      %c0_10 = arith.constant 0 : index
      %c0_11 = arith.constant 0 : index
      %12 = vector.load %arg5[%c0_10, %c0_11] : memref<1x16xf32, #tpu.memory_space<vmem>>, vector<1x16xf32>
      %13 = vector.shape_cast %12 : vector<1x16xf32> to vector<1x16xf32>
      %14 = vector.broadcast %13 : vector<1x16xf32> to vector<64x16xf32>
      %c0_12 = arith.constant 0 : index
      %c0_13 = arith.constant 0 : index
      %15 = vector.load %arg7[%c0_12, %c0_13] : memref<64x16xf32, #tpu.memory_space<vmem>>, vector<64x16xf32>
      tpu.vector_store %arg7[%c0_12, %c0_13], %14 {strides = array<i32>} : memref<64x16xf32, #tpu.memory_space<vmem>>, vector<64x16xf32>,
    } else {
    }
    %c0 = arith.constant 0 : index
    %c0_1 = arith.constant 0 : index
    %3 = vector.load %arg7[%c0, %c0_1] : memref<64x16xf32, #tpu.memory_space<vmem>>, vector<64x16xf32>
    %c0_2 = arith.constant 0 : index
    %c0_3 = arith.constant 0 : index
    %4 = vector.load %arg3[%c0_2, %c0_3] : memref<64x64xbf16, #tpu.memory_space<vmem>>, vector<64x64xbf16>
    %c0_4 = arith.constant 0 : index
    %c0_5 = arith.constant 0 : index
    %5 = vector.load %arg4[%c0_4, %c0_5] : memref<64x16xbf16, #tpu.memory_space<vmem>>, vector<64x16xbf16>
    %cst = arith.constant dense<0.000000e+00> : vector<64x16xf32>
    %6 = tpu.matmul %4, %5, %cst {dimension_numbers = #tpu.dot_dimension_numbers<[1], [0], [0], [1], [0, 0, 1, 1], [], []>} : vector<64x64xbf16>, vector<64x16xbf16>, vector<64x16xf32> -> vector<64x16xf32>
    %7 = arith.addf %3, %6 : vector<64x16xf32>
    %c0_6 = arith.constant 0 : index
    %c0_7 = arith.constant 0 : index
    %8 = vector.load %arg7[%c0_6, %c0_7] : memref<64x16xf32, #tpu.memory_space<vmem>>, vector<64x16xf32>
    tpu.vector_store %arg7[%c0_6, %c0_7], %7 {strides = array<i32>} : memref<64x16xf32, #tpu.memory_space<vmem>>, vector<64x16xf32>,
    %c0_i32_8 = arith.constant 0 : i32
    %9 = arith.cmpi eq, %arg2, %c0_i32_8 : i32
    %10 = arith.extui %9 : i1 to i32
    %c0_i32_9 = arith.constant 0 : i32
    %11 = arith.cmpi ne, %10, %c0_i32_9 : i32
    scf.if %11 {
      %c0_10 = arith.constant 0 : index
      %c0_11 = arith.constant 0 : index
      %12 = vector.load %arg7[%c0_10, %c0_11] : memref<64x16xf32, #tpu.memory_space<vmem>>, vector<64x16xf32>
      %cst_12 = arith.constant 0.000000e+00 : f32
      %13 = vector.broadcast %cst_12 : f32 to vector<64x16xf32>
      %14 = arith.maximumf %12, %13 : vector<64x16xf32>
      %15 = arith.truncf %14 : vector<64x16xf32> to vector<64x16xbf16>
      %c0_13 = arith.constant 0 : index
      %c0_14 = arith.constant 0 : index
      %16 = vector.load %arg6[%c0_13, %c0_14] : memref<64x16xbf16, #tpu.memory_space<vmem>>, vector<64x16xbf16>
      tpu.vector_store %arg6[%c0_13, %c0_14], %15 {strides = array<i32>} : memref<64x16xbf16, #tpu.memory_space<vmem>>, vector<64x16xbf16>,
    } else {
    }
    return
  }
  func.func @transform_0(%arg0: i32, %arg1: i32, %arg2: i32) -> (i32, i32) {
    %c0_i32 = arith.constant 0 : i32
    return %arg0, %arg2 : i32, i32
  }
  func.func @transform_1(%arg0: i32, %arg1: i32, %arg2: i32) -> (i32, i32) {
    %c0_i32 = arith.constant 0 : i32
    return %arg2, %arg1 : i32, i32
  }
  func.func @transform_2(%arg0: i32, %arg1: i32, %arg2: i32) -> (i32, i32) {
    %c0_i32 = arith.constant 0 : i32
    %c0_i32_0 = arith.constant 0 : i32
    return %c0_i32, %arg1 : i32, i32
  }
  func.func @transform_3(%arg0: i32, %arg1: i32, %arg2: i32) -> (i32, i32) {
    %c0_i32 = arith.constant 0 : i32
    return %arg0, %arg1 : i32, i32
  }
}

module attributes {stable_mosaic.version = 11 : i64} {
  func.func @_conv3x3_s1_kernel(%arg0: i32, %arg1: memref<1x110x16xbf16, #tpu.memory_space<vmem>>, %arg2: memref<144x16xbf16, #tpu.memory_space<vmem>>, %arg3: memref<1x16xf32, #tpu.memory_space<vmem>>, %arg4: memref<1x80x16xbf16, #tpu.memory_space<vmem>>, %arg5: memref<80x16xf32, #tpu.memory_space<vmem>>) attributes {dimension_semantics = [#tpu.dimension_semantics<parallel>], iteration_bounds = array<i64: 2>, scalar_prefetch = 0 : i64, scratch_operands = 1 : i64, tpu.core_type = #tpu.core_type<tc>, window_params = [{transform_indices = @transform_0, window_bounds = array<i64: 1, 110, 16>}, {pipeline_mode = #tpu.pipeline_mode<synchronous>, transform_indices = @transform_1, window_bounds = array<i64: 144, 16>}, {pipeline_mode = #tpu.pipeline_mode<synchronous>, transform_indices = @transform_2, window_bounds = array<i64: 1, 16>}, {transform_indices = @transform_3, window_bounds = array<i64: 1, 80, 16>}]} {
    %c0 = arith.constant 0 : index
    %c0_0 = arith.constant 0 : index
    %0 = vector.load %arg3[%c0, %c0_0] : memref<1x16xf32, #tpu.memory_space<vmem>>, vector<1x16xf32>
    %1 = vector.shape_cast %0 : vector<1x16xf32> to vector<1x16xf32>
    %2 = vector.broadcast %1 : vector<1x16xf32> to vector<80x16xf32>
    %c0_1 = arith.constant 0 : index
    %c0_2 = arith.constant 0 : index
    %3 = vector.load %arg5[%c0_1, %c0_2] : memref<80x16xf32, #tpu.memory_space<vmem>>, vector<80x16xf32>
    tpu.vector_store %arg5[%c0_1, %c0_2], %2 {strides = array<i32>} : memref<80x16xf32, #tpu.memory_space<vmem>>, vector<80x16xf32>,
    %c0_3 = arith.constant 0 : index
    %c0_4 = arith.constant 0 : index
    %4 = vector.load %arg5[%c0_3, %c0_4] : memref<80x16xf32, #tpu.memory_space<vmem>>, vector<80x16xf32>
    %c0_5 = arith.constant 0 : index
    %c0_6 = arith.constant 0 : index
    %c0_7 = arith.constant 0 : index
    %5 = vector.load %arg1[%c0_5, %c0_6, %c0_7] : memref<1x110x16xbf16, #tpu.memory_space<vmem>>, vector<1x80x16xbf16>
    %6 = vector.shape_cast %5 : vector<1x80x16xbf16> to vector<80x16xbf16>
    %c0_8 = arith.constant 0 : index
    %c0_9 = arith.constant 0 : index
    %7 = vector.load %arg2[%c0_8, %c0_9] : memref<144x16xbf16, #tpu.memory_space<vmem>>, vector<16x16xbf16>
    %cst = arith.constant dense<0.000000e+00> : vector<80x16xf32>
    %8 = tpu.matmul %6, %7, %cst {dimension_numbers = #tpu.dot_dimension_numbers<[1], [0], [0], [1], [0, 0, 1, 1], [], []>} : vector<80x16xbf16>, vector<16x16xbf16>, vector<80x16xf32> -> vector<80x16xf32>
    %9 = arith.addf %4, %8 : vector<80x16xf32>
    %c0_10 = arith.constant 0 : index
    %c0_11 = arith.constant 0 : index
    %10 = vector.load %arg5[%c0_10, %c0_11] : memref<80x16xf32, #tpu.memory_space<vmem>>, vector<80x16xf32>
    tpu.vector_store %arg5[%c0_10, %c0_11], %9 {strides = array<i32>} : memref<80x16xf32, #tpu.memory_space<vmem>>, vector<80x16xf32>,
    %c0_12 = arith.constant 0 : index
    %c0_13 = arith.constant 0 : index
    %11 = vector.load %arg5[%c0_12, %c0_13] : memref<80x16xf32, #tpu.memory_space<vmem>>, vector<80x16xf32>
    %c0_14 = arith.constant 0 : index
    %c1 = arith.constant 1 : index
    %c0_15 = arith.constant 0 : index
    %12 = vector.load %arg1[%c0_14, %c1, %c0_15] : memref<1x110x16xbf16, #tpu.memory_space<vmem>>, vector<1x80x16xbf16>
    %13 = vector.shape_cast %12 : vector<1x80x16xbf16> to vector<80x16xbf16>
    %c16 = arith.constant 16 : index
    %c0_16 = arith.constant 0 : index
    %14 = vector.load %arg2[%c16, %c0_16] : memref<144x16xbf16, #tpu.memory_space<vmem>>, vector<16x16xbf16>
    %cst_17 = arith.constant dense<0.000000e+00> : vector<80x16xf32>
    %15 = tpu.matmul %13, %14, %cst_17 {dimension_numbers = #tpu.dot_dimension_numbers<[1], [0], [0], [1], [0, 0, 1, 1], [], []>} : vector<80x16xbf16>, vector<16x16xbf16>, vector<80x16xf32> -> vector<80x16xf32>
    %16 = arith.addf %11, %15 : vector<80x16xf32>
    %c0_18 = arith.constant 0 : index
    %c0_19 = arith.constant 0 : index
    %17 = vector.load %arg5[%c0_18, %c0_19] : memref<80x16xf32, #tpu.memory_space<vmem>>, vector<80x16xf32>
    tpu.vector_store %arg5[%c0_18, %c0_19], %16 {strides = array<i32>} : memref<80x16xf32, #tpu.memory_space<vmem>>, vector<80x16xf32>,
    %c0_20 = arith.constant 0 : index
    %c0_21 = arith.constant 0 : index
    %18 = vector.load %arg5[%c0_20, %c0_21] : memref<80x16xf32, #tpu.memory_space<vmem>>, vector<80x16xf32>
    %c0_22 = arith.constant 0 : index
    %c2 = arith.constant 2 : index
    %c0_23 = arith.constant 0 : index
    %19 = vector.load %arg1[%c0_22, %c2, %c0_23] : memref<1x110x16xbf16, #tpu.memory_space<vmem>>, vector<1x80x16xbf16>
    %20 = vector.shape_cast %19 : vector<1x80x16xbf16> to vector<80x16xbf16>
    %c32 = arith.constant 32 : index
    %c0_24 = arith.constant 0 : index
    %21 = vector.load %arg2[%c32, %c0_24] : memref<144x16xbf16, #tpu.memory_space<vmem>>, vector<16x16xbf16>
    %cst_25 = arith.constant dense<0.000000e+00> : vector<80x16xf32>
    %22 = tpu.matmul %20, %21, %cst_25 {dimension_numbers = #tpu.dot_dimension_numbers<[1], [0], [0], [1], [0, 0, 1, 1], [], []>} : vector<80x16xbf16>, vector<16x16xbf16>, vector<80x16xf32> -> vector<80x16xf32>
    %23 = arith.addf %18, %22 : vector<80x16xf32>
    %c0_26 = arith.constant 0 : index
    %c0_27 = arith.constant 0 : index
    %24 = vector.load %arg5[%c0_26, %c0_27] : memref<80x16xf32, #tpu.memory_space<vmem>>, vector<80x16xf32>
    tpu.vector_store %arg5[%c0_26, %c0_27], %23 {strides = array<i32>} : memref<80x16xf32, #tpu.memory_space<vmem>>, vector<80x16xf32>,
    %c0_28 = arith.constant 0 : index
    %c0_29 = arith.constant 0 : index
    %25 = vector.load %arg5[%c0_28, %c0_29] : memref<80x16xf32, #tpu.memory_space<vmem>>, vector<80x16xf32>
    %c0_30 = arith.constant 0 : index
    %c10 = arith.constant 10 : index
    %c0_31 = arith.constant 0 : index
    %26 = vector.load %arg1[%c0_30, %c10, %c0_31] : memref<1x110x16xbf16, #tpu.memory_space<vmem>>, vector<1x80x16xbf16>
    %27 = vector.shape_cast %26 : vector<1x80x16xbf16> to vector<80x16xbf16>
    %c48 = arith.constant 48 : index
    %c0_32 = arith.constant 0 : index
    %28 = vector.load %arg2[%c48, %c0_32] : memref<144x16xbf16, #tpu.memory_space<vmem>>, vector<16x16xbf16>
    %cst_33 = arith.constant dense<0.000000e+00> : vector<80x16xf32>
    %29 = tpu.matmul %27, %28, %cst_33 {dimension_numbers = #tpu.dot_dimension_numbers<[1], [0], [0], [1], [0, 0, 1, 1], [], []>} : vector<80x16xbf16>, vector<16x16xbf16>, vector<80x16xf32> -> vector<80x16xf32>
    %30 = arith.addf %25, %29 : vector<80x16xf32>
    %c0_34 = arith.constant 0 : index
    %c0_35 = arith.constant 0 : index
    %31 = vector.load %arg5[%c0_34, %c0_35] : memref<80x16xf32, #tpu.memory_space<vmem>>, vector<80x16xf32>
    tpu.vector_store %arg5[%c0_34, %c0_35], %30 {strides = array<i32>} : memref<80x16xf32, #tpu.memory_space<vmem>>, vector<80x16xf32>,
    %c0_36 = arith.constant 0 : index
    %c0_37 = arith.constant 0 : index
    %32 = vector.load %arg5[%c0_36, %c0_37] : memref<80x16xf32, #tpu.memory_space<vmem>>, vector<80x16xf32>
    %c0_38 = arith.constant 0 : index
    %c11 = arith.constant 11 : index
    %c0_39 = arith.constant 0 : index
    %33 = vector.load %arg1[%c0_38, %c11, %c0_39] : memref<1x110x16xbf16, #tpu.memory_space<vmem>>, vector<1x80x16xbf16>
    %34 = vector.shape_cast %33 : vector<1x80x16xbf16> to vector<80x16xbf16>
    %c64 = arith.constant 64 : index
    %c0_40 = arith.constant 0 : index
    %35 = vector.load %arg2[%c64, %c0_40] : memref<144x16xbf16, #tpu.memory_space<vmem>>, vector<16x16xbf16>
    %cst_41 = arith.constant dense<0.000000e+00> : vector<80x16xf32>
    %36 = tpu.matmul %34, %35, %cst_41 {dimension_numbers = #tpu.dot_dimension_numbers<[1], [0], [0], [1], [0, 0, 1, 1], [], []>} : vector<80x16xbf16>, vector<16x16xbf16>, vector<80x16xf32> -> vector<80x16xf32>
    %37 = arith.addf %32, %36 : vector<80x16xf32>
    %c0_42 = arith.constant 0 : index
    %c0_43 = arith.constant 0 : index
    %38 = vector.load %arg5[%c0_42, %c0_43] : memref<80x16xf32, #tpu.memory_space<vmem>>, vector<80x16xf32>
    tpu.vector_store %arg5[%c0_42, %c0_43], %37 {strides = array<i32>} : memref<80x16xf32, #tpu.memory_space<vmem>>, vector<80x16xf32>,
    %c0_44 = arith.constant 0 : index
    %c0_45 = arith.constant 0 : index
    %39 = vector.load %arg5[%c0_44, %c0_45] : memref<80x16xf32, #tpu.memory_space<vmem>>, vector<80x16xf32>
    %c0_46 = arith.constant 0 : index
    %c12 = arith.constant 12 : index
    %c0_47 = arith.constant 0 : index
    %40 = vector.load %arg1[%c0_46, %c12, %c0_47] : memref<1x110x16xbf16, #tpu.memory_space<vmem>>, vector<1x80x16xbf16>
    %41 = vector.shape_cast %40 : vector<1x80x16xbf16> to vector<80x16xbf16>
    %c80 = arith.constant 80 : index
    %c0_48 = arith.constant 0 : index
    %42 = vector.load %arg2[%c80, %c0_48] : memref<144x16xbf16, #tpu.memory_space<vmem>>, vector<16x16xbf16>
    %cst_49 = arith.constant dense<0.000000e+00> : vector<80x16xf32>
    %43 = tpu.matmul %41, %42, %cst_49 {dimension_numbers = #tpu.dot_dimension_numbers<[1], [0], [0], [1], [0, 0, 1, 1], [], []>} : vector<80x16xbf16>, vector<16x16xbf16>, vector<80x16xf32> -> vector<80x16xf32>
    %44 = arith.addf %39, %43 : vector<80x16xf32>
    %c0_50 = arith.constant 0 : index
    %c0_51 = arith.constant 0 : index
    %45 = vector.load %arg5[%c0_50, %c0_51] : memref<80x16xf32, #tpu.memory_space<vmem>>, vector<80x16xf32>
    tpu.vector_store %arg5[%c0_50, %c0_51], %44 {strides = array<i32>} : memref<80x16xf32, #tpu.memory_space<vmem>>, vector<80x16xf32>,
    %c0_52 = arith.constant 0 : index
    %c0_53 = arith.constant 0 : index
    %46 = vector.load %arg5[%c0_52, %c0_53] : memref<80x16xf32, #tpu.memory_space<vmem>>, vector<80x16xf32>
    %c0_54 = arith.constant 0 : index
    %c20 = arith.constant 20 : index
    %c0_55 = arith.constant 0 : index
    %47 = vector.load %arg1[%c0_54, %c20, %c0_55] : memref<1x110x16xbf16, #tpu.memory_space<vmem>>, vector<1x80x16xbf16>
    %48 = vector.shape_cast %47 : vector<1x80x16xbf16> to vector<80x16xbf16>
    %c96 = arith.constant 96 : index
    %c0_56 = arith.constant 0 : index
    %49 = vector.load %arg2[%c96, %c0_56] : memref<144x16xbf16, #tpu.memory_space<vmem>>, vector<16x16xbf16>
    %cst_57 = arith.constant dense<0.000000e+00> : vector<80x16xf32>
    %50 = tpu.matmul %48, %49, %cst_57 {dimension_numbers = #tpu.dot_dimension_numbers<[1], [0], [0], [1], [0, 0, 1, 1], [], []>} : vector<80x16xbf16>, vector<16x16xbf16>, vector<80x16xf32> -> vector<80x16xf32>
    %51 = arith.addf %46, %50 : vector<80x16xf32>
    %c0_58 = arith.constant 0 : index
    %c0_59 = arith.constant 0 : index
    %52 = vector.load %arg5[%c0_58, %c0_59] : memref<80x16xf32, #tpu.memory_space<vmem>>, vector<80x16xf32>
    tpu.vector_store %arg5[%c0_58, %c0_59], %51 {strides = array<i32>} : memref<80x16xf32, #tpu.memory_space<vmem>>, vector<80x16xf32>,
    %c0_60 = arith.constant 0 : index
    %c0_61 = arith.constant 0 : index
    %53 = vector.load %arg5[%c0_60, %c0_61] : memref<80x16xf32, #tpu.memory_space<vmem>>, vector<80x16xf32>
    %c0_62 = arith.constant 0 : index
    %c21 = arith.constant 21 : index
    %c0_63 = arith.constant 0 : index
    %54 = vector.load %arg1[%c0_62, %c21, %c0_63] : memref<1x110x16xbf16, #tpu.memory_space<vmem>>, vector<1x80x16xbf16>
    %55 = vector.shape_cast %54 : vector<1x80x16xbf16> to vector<80x16xbf16>
    %c112 = arith.constant 112 : index
    %c0_64 = arith.constant 0 : index
    %56 = vector.load %arg2[%c112, %c0_64] : memref<144x16xbf16, #tpu.memory_space<vmem>>, vector<16x16xbf16>
    %cst_65 = arith.constant dense<0.000000e+00> : vector<80x16xf32>
    %57 = tpu.matmul %55, %56, %cst_65 {dimension_numbers = #tpu.dot_dimension_numbers<[1], [0], [0], [1], [0, 0, 1, 1], [], []>} : vector<80x16xbf16>, vector<16x16xbf16>, vector<80x16xf32> -> vector<80x16xf32>
    %58 = arith.addf %53, %57 : vector<80x16xf32>
    %c0_66 = arith.constant 0 : index
    %c0_67 = arith.constant 0 : index
    %59 = vector.load %arg5[%c0_66, %c0_67] : memref<80x16xf32, #tpu.memory_space<vmem>>, vector<80x16xf32>
    tpu.vector_store %arg5[%c0_66, %c0_67], %58 {strides = array<i32>} : memref<80x16xf32, #tpu.memory_space<vmem>>, vector<80x16xf32>,
    %c0_68 = arith.constant 0 : index
    %c0_69 = arith.constant 0 : index
    %60 = vector.load %arg5[%c0_68, %c0_69] : memref<80x16xf32, #tpu.memory_space<vmem>>, vector<80x16xf32>
    %c0_70 = arith.constant 0 : index
    %c22 = arith.constant 22 : index
    %c0_71 = arith.constant 0 : index
    %61 = vector.load %arg1[%c0_70, %c22, %c0_71] : memref<1x110x16xbf16, #tpu.memory_space<vmem>>, vector<1x80x16xbf16>
    %62 = vector.shape_cast %61 : vector<1x80x16xbf16> to vector<80x16xbf16>
    %c128 = arith.constant 128 : index
    %c0_72 = arith.constant 0 : index
    %63 = vector.load %arg2[%c128, %c0_72] : memref<144x16xbf16, #tpu.memory_space<vmem>>, vector<16x16xbf16>
    %cst_73 = arith.constant dense<0.000000e+00> : vector<80x16xf32>
    %64 = tpu.matmul %62, %63, %cst_73 {dimension_numbers = #tpu.dot_dimension_numbers<[1], [0], [0], [1], [0, 0, 1, 1], [], []>} : vector<80x16xbf16>, vector<16x16xbf16>, vector<80x16xf32> -> vector<80x16xf32>
    %65 = arith.addf %60, %64 : vector<80x16xf32>
    %c0_74 = arith.constant 0 : index
    %c0_75 = arith.constant 0 : index
    %66 = vector.load %arg5[%c0_74, %c0_75] : memref<80x16xf32, #tpu.memory_space<vmem>>, vector<80x16xf32>
    tpu.vector_store %arg5[%c0_74, %c0_75], %65 {strides = array<i32>} : memref<80x16xf32, #tpu.memory_space<vmem>>, vector<80x16xf32>,
    %c0_76 = arith.constant 0 : index
    %c0_77 = arith.constant 0 : index
    %67 = vector.load %arg5[%c0_76, %c0_77] : memref<80x16xf32, #tpu.memory_space<vmem>>, vector<80x16xf32>
    %cst_78 = arith.constant 0.000000e+00 : f32
    %68 = vector.broadcast %cst_78 : f32 to vector<80x16xf32>
    %69 = arith.maximumf %67, %68 : vector<80x16xf32>
    %70 = arith.truncf %69 : vector<80x16xf32> to vector<80x16xbf16>
    %c0_79 = arith.constant 0 : index
    %c0_80 = arith.constant 0 : index
    %c0_81 = arith.constant 0 : index
    %71 = vector.load %arg4[%c0_79, %c0_80, %c0_81] : memref<1x80x16xbf16, #tpu.memory_space<vmem>>, vector<1x80x16xbf16>
    %72 = vector.shape_cast %71 : vector<1x80x16xbf16> to vector<80x16xbf16>
    %73 = vector.shape_cast %70 : vector<80x16xbf16> to vector<1x80x16xbf16>
    tpu.vector_store %arg4[%c0_79, %c0_80, %c0_81], %73 {strides = array<i32>} : memref<1x80x16xbf16, #tpu.memory_space<vmem>>, vector<1x80x16xbf16>,
    return
  }
  func.func @transform_0(%arg0: i32) -> (i32, i32, i32) {
    %c0_i32 = arith.constant 0 : i32
    %c0_i32_0 = arith.constant 0 : i32
    %c0_i32_1 = arith.constant 0 : i32
    return %arg0, %c0_i32, %c0_i32_0 : i32, i32, i32
  }
  func.func @transform_1(%arg0: i32) -> (i32, i32) {
    %c0_i32 = arith.constant 0 : i32
    %c0_i32_0 = arith.constant 0 : i32
    %c0_i32_1 = arith.constant 0 : i32
    return %c0_i32, %c0_i32_0 : i32, i32
  }
  func.func @transform_2(%arg0: i32) -> (i32, i32) {
    %c0_i32 = arith.constant 0 : i32
    %c0_i32_0 = arith.constant 0 : i32
    %c0_i32_1 = arith.constant 0 : i32
    return %c0_i32, %c0_i32_0 : i32, i32
  }
  func.func @transform_3(%arg0: i32) -> (i32, i32, i32) {
    %c0_i32 = arith.constant 0 : i32
    %c0_i32_0 = arith.constant 0 : i32
    %c0_i32_1 = arith.constant 0 : i32
    return %arg0, %c0_i32, %c0_i32_0 : i32, i32, i32
  }
}

</mosaic_0001>

<llo_original>
// kernel: center_back_forward.12
$region0: #{center_back_forward.12}
  #allocation0 [shape = 'u32[]', space=smem, size = 0x4, offset = 0x4, fixed_abs, tag = 'smem constant byte address 0x4 - core index']
  #allocation1 [shape = 'u32[144,128]{1,0:T(1,128)}', space=vmem, size = 0x12000, scoped, tag = 'internal scratch']
  #allocation2 [shape = 'f32[64,64]{1,0:T(8,128)}', space=vmem, size = 0x8000, scoped, tag = 'scratch operand']
  %s0 = inlined_call_operand.vmem [shape: bf16[128,32], index: 0, kind: input, shape index: {}]
  %s1 = inlined_call_operand.vmem [shape: bf16[32,64], index: 1, kind: input, shape index: {}]
  %s2 = inlined_call_operand.vmem [shape: f32[1,64], index: 2, kind: input, shape index: {}]
  %s3 = inlined_call_operand.vmem [shape: bf16[128,64], index: 3, kind: output, shape index: {}]
  %s4 = sld [smem:[#allocation0]]
  $region53: #{center_back_forward.12} parent=0
    _
  %s6 = ssub.s32 1, %s4
  %s7 = scalar_select 0, %s6, %s4
  loop: start=0, step=1, limit=4
  $region2: #{center_back_forward.12} parent=0 // loop_pre_header
    _
  $region3: #{center_back_forward.12} parent=0 // loop_header
    %s9 = sphi 0, %s13
    %p10 = scmp.ge.s32.totalorder %s9, 4
    %s16 = sphi 0, %s35
    %s17 = sphi 0, %s31
    %s18 = sphi 0, %s27
    %s19 = sphi 0, %s16
    %s20 = sphi 0, %s17
    %s21 = sphi 0, %s18
    %s22 = sphi 0, %s19
    %s23 = sphi 0, %s20
    %s24 = sphi 0, %s21
    %s40 = sphi 0, %s42
    %s43 = sphi 0, %s40
    %s44 = sphi 0, %s43
    %s60 = sphi 0, %s44
    %s68 = sphi 0, %s70
    %s71 = sphi 0, %s68
    %s72 = sphi 0, %s71
    %s88 = sphi 0, %s72
    %s94 = sphi 0, %s96
    %s97 = sphi 0, %s94
    %s98 = sphi 0, %s97
    %s114 = sphi 0, %s98
    %s122 = sphi 0, %s124
    %s125 = sphi 0, %s122
    %s126 = sphi 0, %s125
    %s142 = sphi 0, %s126
  $region4: #{center_back_forward.12} parent=0 // loop_header_branch
    %12 = sbr.rel (%p10) target = $region8
  $region5: #{center_back_forward.12} parent=0 // loop_body
    %s14 = ssub.s32 %s9, 1
    %s15 = ssub.s32 %s9, 2
    %s25 = sadd.s32 1, %s18
    %p26 = scmp.ge.s32.totalorder %s25, 1
    %s27 = scalar_select %p26, 0, %s25
    %s28 = sadd.s32 1, %s17
    %s29 = scalar_select %p26, %s28, %s17
    %p30 = scmp.ge.s32.totalorder %s29, 1
    %s31 = scalar_select %p30, 0, %s29
    %s32 = sadd.s32 1, %s16
    %s33 = scalar_select %p30, %s32, %s16
    %p34 = scmp.ge.s32.totalorder %s33, 2
    %s35 = scalar_select %p34, 0, %s33
    %s36 = ssub.s32 %s16, %s35
    %s37 = ssub.s32 %s18, %s27
    %s38 = sor.u32 %s36, %s37
    %p39 = scmp.eq.s32.totalorder %s38, 0
    %s41 = sadd.s32 %s40, 1
    %s42 = scalar_select %p39, %s40, %s41
    %p45 = pneg %p39
    %p46 = scmp.eq.s32.totalorder %s9, 1
    %p47 = por %p45, %p46
    %p48 = scmp.ne.s32.totalorder %s40, %s43
    %p49 = scmp.eq.s32.totalorder %s9, 0
    %p50 = por %p48, %p49
    %p51 = scmp.ne.s32.totalorder %s40, %s43
    %p52 = scmp.eq.s32.totalorder %s14, 1
    %p53 = por %p51, %p52
    %p54 = scmp.ne.s32.totalorder %s43, %s44
    %p55 = scmp.eq.s32.totalorder %s14, 0
    %p56 = por %p54, %p55
    %p57 = scmp.ne.s32.totalorder %s43, %s44
    %p58 = scmp.eq.s32.totalorder %s15, 1
    %p59 = por %p57, %p58
    %p61 = scmp.ne.s32.totalorder %s44, %s60
    %p62 = scmp.eq.s32.totalorder %s15, 0
    %p63 = por %p61, %p62
    %s64 = ssub.s32 %s18, %s27
    %s65 = ssub.s32 %s17, %s31
    %s66 = sor.u32 %s64, %s65
    %p67 = scmp.eq.s32.totalorder %s66, 0
    %s69 = sadd.s32 %s68, 1
    %s70 = scalar_select %p67, %s68, %s69
    %p73 = pneg %p67
    %p74 = scmp.eq.s32.totalorder %s9, 1
    %p75 = por %p73, %p74
    %p76 = scmp.ne.s32.totalorder %s68, %s71
    %p77 = scmp.eq.s32.totalorder %s9, 0
    %p78 = por %p76, %p77
    %p79 = scmp.ne.s32.totalorder %s68, %s71
    %p80 = scmp.eq.s32.totalorder %s14, 1
    %p81 = por %p79, %p80
    %p82 = scmp.ne.s32.totalorder %s71, %s72
    %p83 = scmp.eq.s32.totalorder %s14, 0
    %p84 = por %p82, %p83
    %p85 = scmp.ne.s32.totalorder %s71, %s72
    %p86 = scmp.eq.s32.totalorder %s15, 1
    %p87 = por %p85, %p86
    %p89 = scmp.ne.s32.totalorder %s72, %s88
    %p90 = scmp.eq.s32.totalorder %s15, 0
    %p91 = por %p89, %p90
    %s92 = ssub.s32 %s17, %s31
    %p93 = scmp.eq.s32.totalorder %s92, 0
    %s95 = sadd.s32 %s94, 1
    %s96 = scalar_select %p93, %s94, %s95
    %p99 = pneg %p93
    %p100 = scmp.eq.s32.totalorder %s9, 1
    %p101 = por %p99, %p100
    %p102 = scmp.ne.s32.totalorder %s94, %s97
    %p103 = scmp.eq.s32.totalorder %s9, 0
    %p104 = por %p102, %p103
    %p105 = scmp.ne.s32.totalorder %s94, %s97
    %p106 = scmp.eq.s32.totalorder %s14, 1
    %p107 = por %p105, %p106
    %p108 = scmp.ne.s32.totalorder %s97, %s98
    %p109 = scmp.eq.s32.totalorder %s14, 0
    %p110 = por %p108, %p109
    %p111 = scmp.ne.s32.totalorder %s97, %s98
    %p112 = scmp.eq.s32.totalorder %s15, 1
    %p113 = por %p111, %p112
    %p115 = scmp.ne.s32.totalorder %s98, %s114
    %p116 = scmp.eq.s32.totalorder %s15, 0
    %p117 = por %p115, %p116
    %s118 = ssub.s32 %s16, %s35
    %s119 = ssub.s32 %s17, %s31
    %s120 = sor.u32 %s118, %s119
    %p121 = scmp.eq.s32.totalorder %s120, 0
    %s123 = sadd.s32 %s122, 1
    %s124 = scalar_select %p121, %s122, %s123
    %p127 = pneg %p121
    %p128 = scmp.eq.s32.totalorder %s9, 1
    %p129 = por %p127, %p128
    %p130 = scmp.ne.s32.totalorder %s122, %s125
    %p131 = scmp.eq.s32.totalorder %s9, 0
    %p132 = por %p130, %p131
    %p133 = scmp.ne.s32.totalorder %s122, %s125
    %p134 = scmp.eq.s32.totalorder %s14, 1
    %p135 = por %p133, %p134
    %p136 = scmp.ne.s32.totalorder %s125, %s126
    %p137 = scmp.eq.s32.totalorder %s14, 0
    %p138 = por %p136, %p137
    %p139 = scmp.ne.s32.totalorder %s125, %s126
    %p140 = scmp.eq.s32.totalorder %s15, 1
    %p141 = por %p139, %p140
    %p143 = scmp.ne.s32.totalorder %s126, %s142
    %p144 = scmp.eq.s32.totalorder %s15, 0
    %p145 = por %p143, %p144
    %p146 = scmp.le.s32.totalorder 1, %s9
    %p147 = scmp.lt.s32.totalorder %s9, 3
    %p148 = pnand %p146, %p147
    %p149 = pneg %p148
    // Predicated region
    $region9: #{center_back_forward.12} parent=5 // pred_check
      _
    $region10: #{center_back_forward.12} parent=5 // pred_check_branch
      %151 = sbr.rel (%p148) target = $region12
    $region11: #{center_back_forward.12} parent=5 // pred_region
      %s152 = ssub.s32 %s9, 1
      // Predicated region
      $region13: #{center_back_forward.12} parent=11 // pred_check
        %p153 = pneg %p84
      $region14: #{center_back_forward.12} parent=11 // pred_check_branch
        %155 = sbr.rel (%p153) target = $region16
      $region15: #{center_back_forward.12} parent=11 // pred_region
        %s156 = smul.u32 4, %s21
        %p157 = scmp.lt.s32.totalorder %s156, 3
        %s158 = scalar_select %p157, %s156, 3
        %p159 = scmp.lt.s32.totalorder %s20, 0
        %s160 = scalar_select %p159, %s20, 0
        %s161 = sadd.s32 %s160, %s158
        %s162 = smul.addr %s161, 4
        %s163 = scalar_lea.vmem %s1, %s162
        %s164 = smul.u32 4, %s21
      $region16: #{center_back_forward.12} parent=11 // pred_fallthru
        _
      // Predicated region
      $region17: #{center_back_forward.12} parent=11 // pred_check
        %p165 = pneg %p110
      $region18: #{center_back_forward.12} parent=11 // pred_check_branch
        %167 = sbr.rel (%p165) target = $region20
      $region19: #{center_back_forward.12} parent=11 // pred_region
        %p168 = scmp.lt.s32.totalorder %s20, 0
        %s169 = scalar_select %p168, %s20, 0
        %s170 = scalar_lea.vmem %s2, %s169
      $region20: #{center_back_forward.12} parent=11 // pred_fallthru
        _
    $region12: #{center_back_forward.12} parent=5 // pred_fallthru
      _
    %p171 = scmp.lt.s32.totalorder %s9, 2
    // Predicated region
    $region21: #{center_back_forward.12} parent=5 // pred_check
      %p172 = pneg %p171
    $region22: #{center_back_forward.12} parent=5 // pred_check_branch
      %174 = sbr.rel (%p172) target = $region24
    $region23: #{center_back_forward.12} parent=5 // pred_region
      // Predicated region
      $region25: #{center_back_forward.12} parent=23 // pred_check
        %p175 = pneg %p50
      $region26: #{center_back_forward.12} parent=23 // pred_check_branch
        %177 = sbr.rel (%p175) target = $region28
      $region27: #{center_back_forward.12} parent=23 // pred_region
        %s178 = smul.u32 8, %s16
        %p179 = scmp.lt.s32.totalorder %s178, 15
        %s180 = scalar_select %p179, %s178, 15
        %p181 = scmp.lt.s32.totalorder %s18, 0
        %s182 = scalar_select %p181, %s18, 0
        %s183 = sadd.s32 %s182, %s180
        %s184 = smul.addr %s183, 4
        %s185 = scalar_lea.vmem %s0, %s184
        %s186 = smul.u32 8, %s16
      $region28: #{center_back_forward.12} parent=23 // pred_fallthru
        _
    $region24: #{center_back_forward.12} parent=5 // pred_fallthru
      _
    %p187 = scmp.le.s32.totalorder 1, %s9
    %p188 = scmp.lt.s32.totalorder %s9, 3
    %p189 = pnand %p187, %p188
    %p190 = pneg %p189
    // Predicated region
    $region29: #{center_back_forward.12} parent=5 // pred_check
      _
    $region30: #{center_back_forward.12} parent=5 // pred_check_branch
      %192 = sbr.rel (%p189) target = $region32
    $region31: #{center_back_forward.12} parent=5 // pred_region
      %s193 = ssub.s32 %s9, 1
      %s194 = smul.u32 8, %s19
      %p195 = scmp.lt.s32.totalorder %s194, 15
      %s196 = scalar_select %p195, %s194, 15
      %p197 = scmp.lt.s32.totalorder %s21, 0
      %s198 = scalar_select %p197, %s21, 0
      %s199 = sadd.s32 %s198, %s196
      %s200 = smul.addr %s199, 4
      %s201 = scalar_lea.vmem %s0, %s200
      %p202 = pneg %p56
      %p203 = pneg %p53
      %s204 = smul.u32 4, %s21
      %p205 = scmp.lt.s32.totalorder %s204, 3
      %s206 = scalar_select %p205, %s204, 3
      %p207 = scmp.lt.s32.totalorder %s20, 0
      %s208 = scalar_select %p207, %s20, 0
      %s209 = sadd.s32 %s208, %s206
      %s210 = smul.addr %s209, 4
      %s211 = scalar_lea.vmem %s1, %s210
      %p212 = pneg %p84
      %p213 = pneg %p81
      %p214 = scmp.lt.s32.totalorder %s20, 0
      %s215 = scalar_select %p214, %s20, 0
      %s216 = scalar_lea.vmem %s2, %s215
      %p217 = pneg %p110
      %p218 = pneg %p107
      %p219 = pneg %p138
      %p220 = pneg %p135
      %s221 = smul.u32 8, %s19
      %p222 = scmp.lt.s32.totalorder %s221, 15
      %s223 = scalar_select %p222, %s221, 15
      %p224 = scmp.lt.s32.totalorder %s20, 0
      %s225 = scalar_select %p224, %s20, 0
      %s226 = sadd.s32 %s225, %s223
      %s227 = smul.addr %s226, 4
      %s228 = scalar_lea.vmem %s3, %s227
      %s229 = smul.u32 8, %s19
      %p230 = scmp.lt.s32.totalorder %s229, 15
      %s231 = scalar_select %p230, %s229, 15
      %p232 = scmp.lt.s32.totalorder %s21, 0
      %s233 = scalar_select %p232, %s21, 0
      %s234 = sadd.s32 %s233, %s231
      %s235 = smul.addr %s234, 4
      %s236 = scalar_lea.vmem %s0, %s235
      %s237 = smul.u32 8, %s19
      %s238 = smul.u32 4, %s21
      %p239 = scmp.lt.s32.totalorder %s238, 3
      %s240 = scalar_select %p239, %s238, 3
      %p241 = scmp.lt.s32.totalorder %s20, 0
      %s242 = scalar_select %p241, %s20, 0
      %s243 = sadd.s32 %s242, %s240
      %s244 = smul.addr %s243, 4
      %s245 = scalar_lea.vmem %s1, %s244
      %s246 = smul.u32 4, %s21
      %p247 = scmp.lt.s32.totalorder %s20, 0
      %s248 = scalar_select %p247, %s20, 0
      %s249 = scalar_lea.vmem %s2, %s248
      %s250 = smul.u32 8, %s19
      %p251 = scmp.lt.s32.totalorder %s250, 15
      %s252 = scalar_select %p251, %s250, 15
      %p253 = scmp.lt.s32.totalorder %s20, 0
      %s254 = scalar_select %p253, %s20, 0
      %s255 = sadd.s32 %s254, %s252
      %s256 = smul.addr %s255, 4
      %s257 = scalar_lea.vmem %s3, %s256
      %s258 = smul.u32 8, %s19
      %p260 = scmp.eq.s32.totalorder %s21, 0
      // Predicated region
      $region33: #{center_back_forward.12} parent=31 // pred_check
        %p261 = pneg %p260
      $region34: #{center_back_forward.12} parent=31 // pred_check_branch
        %263 = sbr.rel (%p261) target = $region36
      $region35: #{center_back_forward.12} parent=31 // pred_region
        %v264 = vld [vmem:[%s249] sm:$0x1]
        %v266 = vlaneseq
        %v267 = vshrl.u32 %v266, 7
        %v268 = vsub.s32 0, %v267
        %v269 = vrot.slane %v264, %v268
        %vm271 = vcmask 523264
        %272 = vst.msk [vmem:[#allocation2] sm:$0xff] %vm271, %v269
        %273 = vst.msk [vmem:[#allocation2 + $0x8] sm:$0xff] %vm271, %v269
        %274 = vst.msk [vmem:[#allocation2 + $0x10] sm:$0xff] %vm271, %v269
        %275 = vst.msk [vmem:[#allocation2 + $0x18] sm:$0xff] %vm271, %v269
        %276 = vst.msk [vmem:[#allocation2 + $0x20] sm:$0xff] %vm271, %v269
        %277 = vst.msk [vmem:[#allocation2 + $0x28] sm:$0xff] %vm271, %v269
        %278 = vst.msk [vmem:[#allocation2 + $0x30] sm:$0xff] %vm271, %v269
        %279 = vst.msk [vmem:[#allocation2 + $0x38] sm:$0xff] %vm271, %v269
      $region36: #{center_back_forward.12} parent=31 // pred_fallthru
        _
      %v280 = vld [vmem:[#allocation2] sm:$0xff]
      %v281 = vld [vmem:[#allocation2 + $0x8] sm:$0xff]
      %v282 = vld [vmem:[#allocation2 + $0x10] sm:$0xff]
      %v283 = vld [vmem:[#allocation2 + $0x18] sm:$0xff]
      %v284 = vld [vmem:[#allocation2 + $0x20] sm:$0xff]
      %v285 = vld [vmem:[#allocation2 + $0x28] sm:$0xff]
      %v286 = vld [vmem:[#allocation2 + $0x30] sm:$0xff]
      %v287 = vld [vmem:[#allocation2 + $0x38] sm:$0xff]
      %v288 = vld [vmem:[%s236] sm:$0xf]
      %v289 = vld [vmem:[%s236 + $0x4] sm:$0xf]
      %v290 = vld [vmem:[%s236 + $0x8] sm:$0xf]
      %v291 = vld [vmem:[%s236 + $0xc] sm:$0xf]
      %v292 = vld [vmem:[%s236 + $0x10] sm:$0xf]
      %v293 = vld [vmem:[%s236 + $0x14] sm:$0xf]
      %v294 = vld [vmem:[%s236 + $0x18] sm:$0xf]
      %v295 = vld [vmem:[%s236 + $0x1c] sm:$0xf]
      %v296 = vld [vmem:[%s245] sm:$0xf]
      %v297 = vld [vmem:[%s245 + $0x4] sm:$0xf]
      %v298 = vld [vmem:[%s245 + $0x8] sm:$0xf]
      %v299 = vld [vmem:[%s245 + $0xc] sm:$0xf]
      %v308 = vunpack.c.l.b16 %v288
      %v309 = vunpack.c.l.b16 %v289
      %v310 = vunpack.c.l.b16 %v290
      %v311 = vunpack.c.l.b16 %v291
      %v312 = vunpack.c.l.b16 %v292
      %v313 = vunpack.c.l.b16 %v293
      %v314 = vunpack.c.l.b16 %v294
      %v315 = vunpack.c.l.b16 %v295
      %v316 = vpack.c.b16 %v309, %v308
      %v317 = vpack.c.b16 %v311, %v310
      %v318 = vpack.c.b16 %v313, %v312
      %v319 = vpack.c.b16 %v315, %v314
      %v324 = vunpack.c.l.b16 %v296
      %v325 = vunpack.c.l.b16 %v297
      %v326 = vunpack.c.l.b16 %v298
      %v327 = vunpack.c.l.b16 %v299
      %v328 = vpack.c.b16 %v325, %v324
      %v329 = vpack.c.b16 %v327, %v326
      %vm332 = vcmask 261120
      %v334 = vsel %vm332, %v316, 0
      %v337 = vsel %vm332, %v317, 0
      %v340 = vsel %vm332, %v318, 0
      %v343 = vsel %vm332, %v319, 0
      %345 = vmatprep.subr.bf16.mxu0 0
      %346 = vmatpush1.bf16.msra.mxu0 0
      %347 = vmatprep.subr.bf16.mxu0 0
      %348 = vmatpush1.bf16.msra.mxu0 0
      %349 = vmatprep.subr.bf16.mxu0 0
      %350 = vmatpush1.bf16.msra.mxu0 0
      %351 = vmatprep.subr.bf16.mxu0 0
      %352 = vmatpush1.bf16.msra.mxu0 0
      %353 = vmatprep.subr.bf16.mxu0 0
      %354 = vmatpush1.bf16.msra.mxu0 0
      %355 = vmatprep.subr.bf16.mxu0 0
      %356 = vmatpush1.bf16.msra.mxu0 0
      %357 = vmatprep.subr.bf16.mxu0 0
      %358 = vmatpush1.bf16.msra.mxu0 %v329
      %359 = vmatprep.subr.bf16.mxu0 0
      %360 = vmatpush1.bf16.msra.mxu0 %v328
      %361 = vmatprep.subr.bf16.mxu0 0
      %362 = vmatpush2.bf16.msra.mxu0 0
      %363 = vmatprep.subr.bf16.mxu0 0
      %364 = vmatpush2.bf16.msra.mxu0 0
      %365 = vmatprep.subr.bf16.mxu0 0
      %366 = vmatpush2.bf16.msra.mxu0 0
      %367 = vmatprep.subr.bf16.mxu0 0
      %368 = vmatpush2.bf16.msra.mxu0 0
      %369 = vmatprep.subr.bf16.mxu0 0
      %370 = vmatpush2.bf16.msra.mxu0 0
      %371 = vmatprep.subr.bf16.mxu0 0
      %372 = vmatpush2.bf16.msra.mxu0 0
      %373 = vmatprep.subr.bf16.mxu0 0
      %374 = vmatpush2.bf16.msra.mxu0 0
      %375 = vmatprep.subr.bf16.mxu0 0
      %376 = vmatpush2.bf16.msra.mxu0 0
      %377 = vmatprep.mubr.bf16.mxu0 0
      %378 = vmatmul.mubr.bf16.gmra.mxu0 %v334
      %v379 = vpop.f32.mrf.mxu0
      %v380 = vadd.f32 0.0, %v379
      %v381 = vpop.f32.mrf.mxu0
      %v382 = vpop.f32.mrf.mxu0
      %v383 = vadd.f32 0.0, %v382
      %v384 = vpop.f32.mrf.mxu0
      %385 = vmatprep.mubr.bf16.mxu0 0
      %386 = vmatmul.mubr.bf16.gmra.mxu0 %v337
      %v387 = vpop.f32.mrf.mxu0
      %v388 = vadd.f32 0.0, %v387
      %v389 = vpop.f32.mrf.mxu0
      %v390 = vpop.f32.mrf.mxu0
      %v391 = vadd.f32 0.0, %v390
      %v392 = vpop.f32.mrf.mxu0
      %393 = vmatprep.mubr.bf16.mxu0 0
      %394 = vmatmul.mubr.bf16.gmra.mxu0 %v340
      %v395 = vpop.f32.mrf.mxu0
      %v396 = vadd.f32 0.0, %v395
      %v397 = vpop.f32.mrf.mxu0
      %v398 = vpop.f32.mrf.mxu0
      %v399 = vadd.f32 0.0, %v398
      %v400 = vpop.f32.mrf.mxu0
      %401 = vmatprep.mubr.bf16.mxu0 0
      %402 = vmatmul.mubr.bf16.gmra.mxu0 %v343
      %v403 = vpop.f32.mrf.mxu0
      %v404 = vadd.f32 0.0, %v403
      %v405 = vpop.f32.mrf.mxu0
      %v406 = vpop.f32.mrf.mxu0
      %v407 = vadd.f32 0.0, %v406
      %v408 = vpop.f32.mrf.mxu0
      %409 = vdwg.mxu0
      %v410 = vadd.f32 %v280, %v380
      %v411 = vadd.f32 %v281, %v383
      %v412 = vadd.f32 %v282, %v388
      %v413 = vadd.f32 %v283, %v391
      %v414 = vadd.f32 %v284, %v396
      %v415 = vadd.f32 %v285, %v399
      %v416 = vadd.f32 %v286, %v404
      %v417 = vadd.f32 %v287, %v407
      %vm418 = vcmask 523264
      %419 = vst.msk [vmem:[#allocation2] sm:$0xff] %vm418, %v410
      %420 = vst.msk [vmem:[#allocation2 + $0x8] sm:$0xff] %vm418, %v411
      %421 = vst.msk [vmem:[#allocation2 + $0x10] sm:$0xff] %vm418, %v412
      %422 = vst.msk [vmem:[#allocation2 + $0x18] sm:$0xff] %vm418, %v413
      %423 = vst.msk [vmem:[#allocation2 + $0x20] sm:$0xff] %vm418, %v414
      %424 = vst.msk [vmem:[#allocation2 + $0x28] sm:$0xff] %vm418, %v415
      %425 = vst.msk [vmem:[#allocation2 + $0x30] sm:$0xff] %vm418, %v416
      %426 = vst.msk [vmem:[#allocation2 + $0x38] sm:$0xff] %vm418, %v417
      // Predicated region
      $region37: #{center_back_forward.12} parent=31 // pred_check
        %p427 = pneg %p260
      $region38: #{center_back_forward.12} parent=31 // pred_check_branch
        %429 = sbr.rel (%p427) target = $region40
      $region39: #{center_back_forward.12} parent=31 // pred_region
        %v430 = vld [vmem:[#allocation2] sm:$0xff]
        %v431 = vld [vmem:[#allocation2 + $0x8] sm:$0xff]
        %v432 = vld [vmem:[#allocation2 + $0x10] sm:$0xff]
        %v433 = vld [vmem:[#allocation2 + $0x18] sm:$0xff]
        %v434 = vld [vmem:[#allocation2 + $0x20] sm:$0xff]
        %v435 = vld [vmem:[#allocation2 + $0x28] sm:$0xff]
        %v436 = vld [vmem:[#allocation2 + $0x30] sm:$0xff]
        %v437 = vld [vmem:[#allocation2 + $0x38] sm:$0xff]
        %v438 = vpack.c.bf16 %v431, %v430
        %v439 = vpack.c.bf16 %v433, %v432
        %v440 = vpack.c.bf16 %v435, %v434
        %v441 = vpack.c.bf16 %v437, %v436
        %v446 = vunpack.c.l.b16 %v438
        %v447 = vunpack.c.h.b16 %v438
        %v448 = vunpack.c.l.b16 %v439
        %v449 = vunpack.c.h.b16 %v439
        %v450 = vunpack.c.l.b16 %v440
        %v451 = vunpack.c.h.b16 %v440
        %v452 = vunpack.c.l.b16 %v441
        %v453 = vunpack.c.h.b16 %v441
        %v454 = vpack.c.b16 %v446, %v446
        %v455 = vpack.c.b16 %v447, %v447
        %v456 = vpack.c.b16 %v448, %v448
        %v457 = vpack.c.b16 %v449, %v449
        %v458 = vpack.c.b16 %v450, %v450
        %v459 = vpack.c.b16 %v451, %v451
        %v460 = vpack.c.b16 %v452, %v452
        %v461 = vpack.c.b16 %v453, %v453
        %vm470 = vcmask 519168
        %471 = vst.msk [vmem:[%s257] sm:$0xf] %vm470, %v454
        %472 = vst.msk [vmem:[%s257 + $0x4] sm:$0xf] %vm470, %v455
        %473 = vst.msk [vmem:[%s257 + $0x8] sm:$0xf] %vm470, %v456
        %474 = vst.msk [vmem:[%s257 + $0xc] sm:$0xf] %vm470, %v457
        %475 = vst.msk [vmem:[%s257 + $0x10] sm:$0xf] %vm470, %v458
        %476 = vst.msk [vmem:[%s257 + $0x14] sm:$0xf] %vm470, %v459
        %477 = vst.msk [vmem:[%s257 + $0x18] sm:$0xf] %vm470, %v460
        %478 = vst.msk [vmem:[%s257 + $0x1c] sm:$0xf] %vm470, %v461
      $region40: #{center_back_forward.12} parent=31 // pred_fallthru
        _
      %s479 = smul.u32 8, %s19
      %p480 = scmp.lt.s32.totalorder %s479, 15
      %s481 = scalar_select %p480, %s479, 15
      %p482 = scmp.lt.s32.totalorder %s20, 0
      %s483 = scalar_select %p482, %s20, 0
      %s484 = sadd.s32 %s483, %s481
      %s485 = smul.addr %s484, 4
      %s486 = scalar_lea.vmem %s3, %s485
      // Predicated region
      $region41: #{center_back_forward.12} parent=31 // pred_check
        %p487 = pneg %p135
      $region42: #{center_back_forward.12} parent=31 // pred_check_branch
        %489 = sbr.rel (%p487) target = $region44
      $region43: #{center_back_forward.12} parent=31 // pred_region
        %s490 = smul.u32 8, %s19
      $region44: #{center_back_forward.12} parent=31 // pred_fallthru
        _
    $region32: #{center_back_forward.12} parent=5 // pred_fallthru
      _
    %p491 = scmp.le.s32.totalorder 2, %s9
    // Predicated region
    $region45: #{center_back_forward.12} parent=5 // pred_check
      %p492 = pneg %p491
    $region46: #{center_back_forward.12} parent=5 // pred_check_branch
      %494 = sbr.rel (%p492) target = $region48
    $region47: #{center_back_forward.12} parent=5 // pred_region
      %s495 = ssub.s32 %s9, 2
      // Predicated region
      $region49: #{center_back_forward.12} parent=47 // pred_check
        %p496 = pneg %p141
      $region50: #{center_back_forward.12} parent=47 // pred_check_branch
        %498 = sbr.rel (%p496) target = $region52
      $region51: #{center_back_forward.12} parent=47 // pred_region
        %s499 = smul.u32 8, %s22
        %p500 = scmp.lt.s32.totalorder %s499, 15
        %s501 = scalar_select %p500, %s499, 15
        %p502 = scmp.lt.s32.totalorder %s23, 0
        %s503 = scalar_select %p502, %s23, 0
        %s504 = sadd.s32 %s503, %s501
        %s505 = smul.addr %s504, 4
        %s506 = scalar_lea.vmem %s3, %s505
      $region52: #{center_back_forward.12} parent=47 // pred_fallthru
        _
    $region48: #{center_back_forward.12} parent=5 // pred_fallthru
      _
  $region6: #{center_back_forward.12} parent=0 // loop_footer
    %s13 = sadd.s32 1, %s9
  $region7: #{center_back_forward.12} parent=0 // loop_footer_branch
    %8 = sbr.rel target = $region3
  $region8: #{center_back_forward.12} parent=0 // loop_exit
    _

// kernel: center_back_forward.10
$region0: #{center_back_forward.10}
  #allocation0 [shape = 'u32[]', space=smem, size = 0x4, offset = 0x4, fixed_abs, tag = 'smem constant byte address 0x4 - core index']
  #allocation1 [shape = 'u32[144,128]{1,0:T(1,128)}', space=vmem, size = 0x12000, scoped, tag = 'internal scratch']
  #allocation2 [shape = 'f32[256,16]{1,0:T(8,128)}', space=vmem, size = 0x20000, scoped, tag = 'scratch operand']
  %s0 = inlined_call_operand.vmem [shape: bf16[512,32], index: 0, kind: input, shape index: {}]
  %s1 = inlined_call_operand.vmem [shape: bf16[32,16], index: 1, kind: input, shape index: {}]
  %s2 = inlined_call_operand.vmem [shape: f32[1,16], index: 2, kind: input, shape index: {}]
  %s3 = inlined_call_operand.vmem [shape: bf16[512,16], index: 3, kind: output, shape index: {}]
  %s4 = sld [smem:[#allocation0]]
  $region53: #{center_back_forward.10} parent=0
    _
  %s6 = ssub.s32 1, %s4
  %s7 = scalar_select 0, %s6, %s4
  loop: start=0, step=1, limit=4
  $region2: #{center_back_forward.10} parent=0 // loop_pre_header
    _
  $region3: #{center_back_forward.10} parent=0 // loop_header
    %s9 = sphi 0, %s13
    %p10 = scmp.ge.s32.totalorder %s9, 4
    %s16 = sphi 0, %s35
    %s17 = sphi 0, %s31
    %s18 = sphi 0, %s27
    %s19 = sphi 0, %s16
    %s20 = sphi 0, %s17
    %s21 = sphi 0, %s18
    %s22 = sphi 0, %s19
    %s23 = sphi 0, %s20
    %s24 = sphi 0, %s21
    %s40 = sphi 0, %s42
    %s43 = sphi 0, %s40
    %s44 = sphi 0, %s43
    %s60 = sphi 0, %s44
    %s68 = sphi 0, %s70
    %s71 = sphi 0, %s68
    %s72 = sphi 0, %s71
    %s88 = sphi 0, %s72
    %s94 = sphi 0, %s96
    %s97 = sphi 0, %s94
    %s98 = sphi 0, %s97
    %s114 = sphi 0, %s98
    %s122 = sphi 0, %s124
    %s125 = sphi 0, %s122
    %s126 = sphi 0, %s125
    %s142 = sphi 0, %s126
  $region4: #{center_back_forward.10} parent=0 // loop_header_branch
    %12 = sbr.rel (%p10) target = $region8
  $region5: #{center_back_forward.10} parent=0 // loop_body
    %s14 = ssub.s32 %s9, 1
    %s15 = ssub.s32 %s9, 2
    %s25 = sadd.s32 1, %s18
    %p26 = scmp.ge.s32.totalorder %s25, 1
    %s27 = scalar_select %p26, 0, %s25
    %s28 = sadd.s32 1, %s17
    %s29 = scalar_select %p26, %s28, %s17
    %p30 = scmp.ge.s32.totalorder %s29, 1
    %s31 = scalar_select %p30, 0, %s29
    %s32 = sadd.s32 1, %s16
    %s33 = scalar_select %p30, %s32, %s16
    %p34 = scmp.ge.s32.totalorder %s33, 2
    %s35 = scalar_select %p34, 0, %s33
    %s36 = ssub.s32 %s16, %s35
    %s37 = ssub.s32 %s18, %s27
    %s38 = sor.u32 %s36, %s37
    %p39 = scmp.eq.s32.totalorder %s38, 0
    %s41 = sadd.s32 %s40, 1
    %s42 = scalar_select %p39, %s40, %s41
    %p45 = pneg %p39
    %p46 = scmp.eq.s32.totalorder %s9, 1
    %p47 = por %p45, %p46
    %p48 = scmp.ne.s32.totalorder %s40, %s43
    %p49 = scmp.eq.s32.totalorder %s9, 0
    %p50 = por %p48, %p49
    %p51 = scmp.ne.s32.totalorder %s40, %s43
    %p52 = scmp.eq.s32.totalorder %s14, 1
    %p53 = por %p51, %p52
    %p54 = scmp.ne.s32.totalorder %s43, %s44
    %p55 = scmp.eq.s32.totalorder %s14, 0
    %p56 = por %p54, %p55
    %p57 = scmp.ne.s32.totalorder %s43, %s44
    %p58 = scmp.eq.s32.totalorder %s15, 1
    %p59 = por %p57, %p58
    %p61 = scmp.ne.s32.totalorder %s44, %s60
    %p62 = scmp.eq.s32.totalorder %s15, 0
    %p63 = por %p61, %p62
    %s64 = ssub.s32 %s18, %s27
    %s65 = ssub.s32 %s17, %s31
    %s66 = sor.u32 %s64, %s65
    %p67 = scmp.eq.s32.totalorder %s66, 0
    %s69 = sadd.s32 %s68, 1
    %s70 = scalar_select %p67, %s68, %s69
    %p73 = pneg %p67
    %p74 = scmp.eq.s32.totalorder %s9, 1
    %p75 = por %p73, %p74
    %p76 = scmp.ne.s32.totalorder %s68, %s71
    %p77 = scmp.eq.s32.totalorder %s9, 0
    %p78 = por %p76, %p77
    %p79 = scmp.ne.s32.totalorder %s68, %s71
    %p80 = scmp.eq.s32.totalorder %s14, 1
    %p81 = por %p79, %p80
    %p82 = scmp.ne.s32.totalorder %s71, %s72
    %p83 = scmp.eq.s32.totalorder %s14, 0
    %p84 = por %p82, %p83
    %p85 = scmp.ne.s32.totalorder %s71, %s72
    %p86 = scmp.eq.s32.totalorder %s15, 1
    %p87 = por %p85, %p86
    %p89 = scmp.ne.s32.totalorder %s72, %s88
    %p90 = scmp.eq.s32.totalorder %s15, 0
    %p91 = por %p89, %p90
    %s92 = ssub.s32 %s17, %s31
    %p93 = scmp.eq.s32.totalorder %s92, 0
    %s95 = sadd.s32 %s94, 1
    %s96 = scalar_select %p93, %s94, %s95
    %p99 = pneg %p93
    %p100 = scmp.eq.s32.totalorder %s9, 1
    %p101 = por %p99, %p100
    %p102 = scmp.ne.s32.totalorder %s94, %s97
    %p103 = scmp.eq.s32.totalorder %s9, 0
    %p104 = por %p102, %p103
    %p105 = scmp.ne.s32.totalorder %s94, %s97
    %p106 = scmp.eq.s32.totalorder %s14, 1
    %p107 = por %p105, %p106
    %p108 = scmp.ne.s32.totalorder %s97, %s98
    %p109 = scmp.eq.s32.totalorder %s14, 0
    %p110 = por %p108, %p109
    %p111 = scmp.ne.s32.totalorder %s97, %s98
    %p112 = scmp.eq.s32.totalorder %s15, 1
    %p113 = por %p111, %p112
    %p115 = scmp.ne.s32.totalorder %s98, %s114
    %p116 = scmp.eq.s32.totalorder %s15, 0
    %p117 = por %p115, %p116
    %s118 = ssub.s32 %s16, %s35
    %s119 = ssub.s32 %s17, %s31
    %s120 = sor.u32 %s118, %s119
    %p121 = scmp.eq.s32.totalorder %s120, 0
    %s123 = sadd.s32 %s122, 1
    %s124 = scalar_select %p121, %s122, %s123
    %p127 = pneg %p121
    %p128 = scmp.eq.s32.totalorder %s9, 1
    %p129 = por %p127, %p128
    %p130 = scmp.ne.s32.totalorder %s122, %s125
    %p131 = scmp.eq.s32.totalorder %s9, 0
    %p132 = por %p130, %p131
    %p133 = scmp.ne.s32.totalorder %s122, %s125
    %p134 = scmp.eq.s32.totalorder %s14, 1
    %p135 = por %p133, %p134
    %p136 = scmp.ne.s32.totalorder %s125, %s126
    %p137 = scmp.eq.s32.totalorder %s14, 0
    %p138 = por %p136, %p137
    %p139 = scmp.ne.s32.totalorder %s125, %s126
    %p140 = scmp.eq.s32.totalorder %s15, 1
    %p141 = por %p139, %p140
    %p143 = scmp.ne.s32.totalorder %s126, %s142
    %p144 = scmp.eq.s32.totalorder %s15, 0
    %p145 = por %p143, %p144
    %p146 = scmp.le.s32.totalorder 1, %s9
    %p147 = scmp.lt.s32.totalorder %s9, 3
    %p148 = pnand %p146, %p147
    %p149 = pneg %p148
    // Predicated region
    $region9: #{center_back_forward.10} parent=5 // pred_check
      _
    $region10: #{center_back_forward.10} parent=5 // pred_check_branch
      %151 = sbr.rel (%p148) target = $region12
    $region11: #{center_back_forward.10} parent=5 // pred_region
      %s152 = ssub.s32 %s9, 1
      // Predicated region
      $region13: #{center_back_forward.10} parent=11 // pred_check
        %p153 = pneg %p84
      $region14: #{center_back_forward.10} parent=11 // pred_check_branch
        %155 = sbr.rel (%p153) target = $region16
      $region15: #{center_back_forward.10} parent=11 // pred_region
        %s156 = smul.u32 4, %s21
        %p157 = scmp.lt.s32.totalorder %s156, 3
        %s158 = scalar_select %p157, %s156, 3
        %p159 = scmp.lt.s32.totalorder %s20, 0
        %s160 = scalar_select %p159, %s20, 0
        %s161 = sadd.s32 %s160, %s158
        %s162 = smul.addr %s161, 4
        %s163 = scalar_lea.vmem %s1, %s162
        %s164 = smul.u32 4, %s21
      $region16: #{center_back_forward.10} parent=11 // pred_fallthru
        _
      // Predicated region
      $region17: #{center_back_forward.10} parent=11 // pred_check
        %p165 = pneg %p110
      $region18: #{center_back_forward.10} parent=11 // pred_check_branch
        %167 = sbr.rel (%p165) target = $region20
      $region19: #{center_back_forward.10} parent=11 // pred_region
        %p168 = scmp.lt.s32.totalorder %s20, 0
        %s169 = scalar_select %p168, %s20, 0
        %s170 = scalar_lea.vmem %s2, %s169
      $region20: #{center_back_forward.10} parent=11 // pred_fallthru
        _
    $region12: #{center_back_forward.10} parent=5 // pred_fallthru
      _
    %p171 = scmp.lt.s32.totalorder %s9, 2
    // Predicated region
    $region21: #{center_back_forward.10} parent=5 // pred_check
      %p172 = pneg %p171
    $region22: #{center_back_forward.10} parent=5 // pred_check_branch
      %174 = sbr.rel (%p172) target = $region24
    $region23: #{center_back_forward.10} parent=5 // pred_region
      // Predicated region
      $region25: #{center_back_forward.10} parent=23 // pred_check
        %p175 = pneg %p50
      $region26: #{center_back_forward.10} parent=23 // pred_check_branch
        %177 = sbr.rel (%p175) target = $region28
      $region27: #{center_back_forward.10} parent=23 // pred_region
        %s178 = smul.u32 32, %s16
        %p179 = scmp.lt.s32.totalorder %s178, 63
        %s180 = scalar_select %p179, %s178, 63
        %p181 = scmp.lt.s32.totalorder %s18, 0
        %s182 = scalar_select %p181, %s18, 0
        %s183 = sadd.s32 %s182, %s180
        %s184 = smul.addr %s183, 4
        %s185 = scalar_lea.vmem %s0, %s184
        %s186 = smul.u32 32, %s16
      $region28: #{center_back_forward.10} parent=23 // pred_fallthru
        _
    $region24: #{center_back_forward.10} parent=5 // pred_fallthru
      _
    %p187 = scmp.le.s32.totalorder 1, %s9
    %p188 = scmp.lt.s32.totalorder %s9, 3
    %p189 = pnand %p187, %p188
    %p190 = pneg %p189
    // Predicated region
    $region29: #{center_back_forward.10} parent=5 // pred_check
      _
    $region30: #{center_back_forward.10} parent=5 // pred_check_branch
      %192 = sbr.rel (%p189) target = $region32
    $region31: #{center_back_forward.10} parent=5 // pred_region
      %s193 = ssub.s32 %s9, 1
      %s194 = smul.u32 32, %s19
      %p195 = scmp.lt.s32.totalorder %s194, 63
      %s196 = scalar_select %p195, %s194, 63
      %p197 = scmp.lt.s32.totalorder %s21, 0
      %s198 = scalar_select %p197, %s21, 0
      %s199 = sadd.s32 %s198, %s196
      %s200 = smul.addr %s199, 4
      %s201 = scalar_lea.vmem %s0, %s200
      %p202 = pneg %p56
      %p203 = pneg %p53
      %s204 = smul.u32 4, %s21
      %p205 = scmp.lt.s32.totalorder %s204, 3
      %s206 = scalar_select %p205, %s204, 3
      %p207 = scmp.lt.s32.totalorder %s20, 0
      %s208 = scalar_select %p207, %s20, 0
      %s209 = sadd.s32 %s208, %s206
      %s210 = smul.addr %s209, 4
      %s211 = scalar_lea.vmem %s1, %s210
      %p212 = pneg %p84
      %p213 = pneg %p81
      %p214 = scmp.lt.s32.totalorder %s20, 0
      %s215 = scalar_select %p214, %s20, 0
      %s216 = scalar_lea.vmem %s2, %s215
      %p217 = pneg %p110
      %p218 = pneg %p107
      %p219 = pneg %p138
      %p220 = pneg %p135
      %s221 = smul.u32 32, %s19
      %p222 = scmp.lt.s32.totalorder %s221, 63
      %s223 = scalar_select %p222, %s221, 63
      %p224 = scmp.lt.s32.totalorder %s20, 0
      %s225 = scalar_select %p224, %s20, 0
      %s226 = sadd.s32 %s225, %s223
      %s227 = smul.addr %s226, 4
      %s228 = scalar_lea.vmem %s3, %s227
      %s229 = smul.u32 32, %s19
      %p230 = scmp.lt.s32.totalorder %s229, 63
      %s231 = scalar_select %p230, %s229, 63
      %p232 = scmp.lt.s32.totalorder %s21, 0
      %s233 = scalar_select %p232, %s21, 0
      %s234 = sadd.s32 %s233, %s231
      %s235 = smul.addr %s234, 4
      %s236 = scalar_lea.vmem %s0, %s235
      %s237 = smul.u32 32, %s19
      %s238 = smul.u32 4, %s21
      %p239 = scmp.lt.s32.totalorder %s238, 3
      %s240 = scalar_select %p239, %s238, 3
      %p241 = scmp.lt.s32.totalorder %s20, 0
      %s242 = scalar_select %p241, %s20, 0
      %s243 = sadd.s32 %s242, %s240
      %s244 = smul.addr %s243, 4
      %s245 = scalar_lea.vmem %s1, %s244
      %s246 = smul.u32 4, %s21
      %p247 = scmp.lt.s32.totalorder %s20, 0
      %s248 = scalar_select %p247, %s20, 0
      %s249 = scalar_lea.vmem %s2, %s248
      %s250 = smul.u32 32, %s19
      %p251 = scmp.lt.s32.totalorder %s250, 63
      %s252 = scalar_select %p251, %s250, 63
      %p253 = scmp.lt.s32.totalorder %s20, 0
      %s254 = scalar_select %p253, %s20, 0
      %s255 = sadd.s32 %s254, %s252
      %s256 = smul.addr %s255, 4
      %s257 = scalar_lea.vmem %s3, %s256
      %s258 = smul.u32 32, %s19
      %p260 = scmp.eq.s32.totalorder %s21, 0
      // Predicated region
      $region33: #{center_back_forward.10} parent=31 // pred_check
        %p261 = pneg %p260
      $region34: #{center_back_forward.10} parent=31 // pred_check_branch
        %263 = sbr.rel (%p261) target = $region36
      $region35: #{center_back_forward.10} parent=31 // pred_region
        %v264 = vld [vmem:[%s249] sm:$0x1]
        %v266 = vlaneseq
        %v267 = vshrl.u32 %v266, 7
        %v268 = vsub.s32 0, %v267
        %v269 = vrot.slane %v264, %v268
        %vm271 = vcmask 130048
        %272 = vst.msk [vmem:[#allocation2] sm:$0xff] %vm271, %v269
        %273 = vst.msk [vmem:[#allocation2 + $0x8] sm:$0xff] %vm271, %v269
        %274 = vst.msk [vmem:[#allocation2 + $0x10] sm:$0xff] %vm271, %v269
        %275 = vst.msk [vmem:[#allocation2 + $0x18] sm:$0xff] %vm271, %v269
        %276 = vst.msk [vmem:[#allocation2 + $0x20] sm:$0xff] %vm271, %v269
        %277 = vst.msk [vmem:[#allocation2 + $0x28] sm:$0xff] %vm271, %v269
        %278 = vst.msk [vmem:[#allocation2 + $0x30] sm:$0xff] %vm271, %v269
        %279 = vst.msk [vmem:[#allocation2 + $0x38] sm:$0xff] %vm271, %v269
        %280 = vst.msk [vmem:[#allocation2 + $0x40] sm:$0xff] %vm271, %v269
        %281 = vst.msk [vmem:[#allocation2 + $0x48] sm:$0xff] %vm271, %v269
        %282 = vst.msk [vmem:[#allocation2 + $0x50] sm:$0xff] %vm271, %v269
        %283 = vst.msk [vmem:[#allocation2 + $0x58] sm:$0xff] %vm271, %v269
        %284 = vst.msk [vmem:[#allocation2 + $0x60] sm:$0xff] %vm271, %v269
        %285 = vst.msk [vmem:[#allocation2 + $0x68] sm:$0xff] %vm271, %v269
        %286 = vst.msk [vmem:[#allocation2 + $0x70] sm:$0xff] %vm271, %v269
        %287 = vst.msk [vmem:[#allocation2 + $0x78] sm:$0xff] %vm271, %v269
        %288 = vst.msk [vmem:[#allocation2 + $0x80] sm:$0xff] %vm271, %v269
        %289 = vst.msk [vmem:[#allocation2 + $0x88] sm:$0xff] %vm271, %v269
        %290 = vst.msk [vmem:[#allocation2 + $0x90] sm:$0xff] %vm271, %v269
        %291 = vst.msk [vmem:[#allocation2 + $0x98] sm:$0xff] %vm271, %v269
        %292 = vst.msk [vmem:[#allocation2 + $0xa0] sm:$0xff] %vm271, %v269
        %293 = vst.msk [vmem:[#allocation2 + $0xa8] sm:$0xff] %vm271, %v269
        %294 = vst.msk [vmem:[#allocation2 + $0xb0] sm:$0xff] %vm271, %v269
        %295 = vst.msk [vmem:[#allocation2 + $0xb8] sm:$0xff] %vm271, %v269
        %296 = vst.msk [vmem:[#allocation2 + $0xc0] sm:$0xff] %vm271, %v269
        %297 = vst.msk [vmem:[#allocation2 + $0xc8] sm:$0xff] %vm271, %v269
        %298 = vst.msk [vmem:[#allocation2 + $0xd0] sm:$0xff] %vm271, %v269
        %299 = vst.msk [vmem:[#allocation2 + $0xd8] sm:$0xff] %vm271, %v269
        %300 = vst.msk [vmem:[#allocation2 + $0xe0] sm:$0xff] %vm271, %v269
        %301 = vst.msk [vmem:[#allocation2 + $0xe8] sm:$0xff] %vm271, %v269
        %302 = vst.msk [vmem:[#allocation2 + $0xf0] sm:$0xff] %vm271, %v269
        %303 = vst.msk [vmem:[#allocation2 + $0xf8] sm:$0xff] %vm271, %v269
      $region36: #{center_back_forward.10} parent=31 // pred_fallthru
        _
      %v304 = vld [vmem:[#allocation2] sm:$0xff]
      %v305 = vld [vmem:[#allocation2 + $0x8] sm:$0xff]
      %v306 = vld [vmem:[#allocation2 + $0x10] sm:$0xff]
      %v307 = vld [vmem:[#allocation2 + $0x18] sm:$0xff]
      %v308 = vld [vmem:[#allocation2 + $0x20] sm:$0xff]
      %v309 = vld [vmem:[#allocation2 + $0x28] sm:$0xff]
      %v310 = vld [vmem:[#allocation2 + $0x30] sm:$0xff]
      %v311 = vld [vmem:[#allocation2 + $0x38] sm:$0xff]
      %v312 = vld [vmem:[#allocation2 + $0x40] sm:$0xff]
      %v313 = vld [vmem:[#allocation2 + $0x48] sm:$0xff]
      %v314 = vld [vmem:[#allocation2 + $0x50] sm:$0xff]
      %v315 = vld [vmem:[#allocation2 + $0x58] sm:$0xff]
      %v316 = vld [vmem:[#allocation2 + $0x60] sm:$0xff]
      %v317 = vld [vmem:[#allocation2 + $0x68] sm:$0xff]
      %v318 = vld [vmem:[#allocation2 + $0x70] sm:$0xff]
      %v319 = vld [vmem:[#allocation2 + $0x78] sm:$0xff]
      %v320 = vld [vmem:[#allocation2 + $0x80] sm:$0xff]
      %v321 = vld [vmem:[#allocation2 + $0x88] sm:$0xff]
      %v322 = vld [vmem:[#allocation2 + $0x90] sm:$0xff]
      %v323 = vld [vmem:[#allocation2 + $0x98] sm:$0xff]
      %v324 = vld [vmem:[#allocation2 + $0xa0] sm:$0xff]
      %v325 = vld [vmem:[#allocation2 + $0xa8] sm:$0xff]
      %v326 = vld [vmem:[#allocation2 + $0xb0] sm:$0xff]
      %v327 = vld [vmem:[#allocation2 + $0xb8] sm:$0xff]
      %v328 = vld [vmem:[#allocation2 + $0xc0] sm:$0xff]
      %v329 = vld [vmem:[#allocation2 + $0xc8] sm:$0xff]
      %v330 = vld [vmem:[#allocation2 + $0xd0] sm:$0xff]
      %v331 = vld [vmem:[#allocation2 + $0xd8] sm:$0xff]
      %v332 = vld [vmem:[#allocation2 + $0xe0] sm:$0xff]
      %v333 = vld [vmem:[#allocation2 + $0xe8] sm:$0xff]
      %v334 = vld [vmem:[#allocation2 + $0xf0] sm:$0xff]
      %v335 = vld [vmem:[#allocation2 + $0xf8] sm:$0xff]
      %v336 = vld [vmem:[%s236] sm:$0xf]
      %v337 = vld [vmem:[%s236 + $0x4] sm:$0xf]
      %v338 = vld [vmem:[%s236 + $0x8] sm:$0xf]
      %v339 = vld [vmem:[%s236 + $0xc] sm:$0xf]
      %v340 = vld [vmem:[%s236 + $0x10] sm:$0xf]
      %v341 = vld [vmem:[%s236 + $0x14] sm:$0xf]
      %v342 = vld [vmem:[%s236 + $0x18] sm:$0xf]
      %v343 = vld [vmem:[%s236 + $0x1c] sm:$0xf]
      %v344 = vld [vmem:[%s236 + $0x20] sm:$0xf]
      %v345 = vld [vmem:[%s236 + $0x24] sm:$0xf]
      %v346 = vld [vmem:[%s236 + $0x28] sm:$0xf]
      %v347 = vld [vmem:[%s236 + $0x2c] sm:$0xf]
      %v348 = vld [vmem:[%s236 + $0x30] sm:$0xf]
      %v349 = vld [vmem:[%s236 + $0x34] sm:$0xf]
      %v350 = vld [vmem:[%s236 + $0x38] sm:$0xf]
      %v351 = vld [vmem:[%s236 + $0x3c] sm:$0xf]
      %v352 = vld [vmem:[%s236 + $0x40] sm:$0xf]
      %v353 = vld [vmem:[%s236 + $0x44] sm:$0xf]
      %v354 = vld [vmem:[%s236 + $0x48] sm:$0xf]
      %v355 = vld [vmem:[%s236 + $0x4c] sm:$0xf]
      %v356 = vld [vmem:[%s236 + $0x50] sm:$0xf]
      %v357 = vld [vmem:[%s236 + $0x54] sm:$0xf]
      %v358 = vld [vmem:[%s236 + $0x58] sm:$0xf]
      %v359 = vld [vmem:[%s236 + $0x5c] sm:$0xf]
      %v360 = vld [vmem:[%s236 + $0x60] sm:$0xf]
      %v361 = vld [vmem:[%s236 + $0x64] sm:$0xf]
      %v362 = vld [vmem:[%s236 + $0x68] sm:$0xf]
      %v363 = vld [vmem:[%s236 + $0x6c] sm:$0xf]
      %v364 = vld [vmem:[%s236 + $0x70] sm:$0xf]
      %v365 = vld [vmem:[%s236 + $0x74] sm:$0xf]
      %v366 = vld [vmem:[%s236 + $0x78] sm:$0xf]
      %v367 = vld [vmem:[%s236 + $0x7c] sm:$0xf]
      %v368 = vld [vmem:[%s245] sm:$0xf]
      %v369 = vld [vmem:[%s245 + $0x4] sm:$0xf]
      %v370 = vld [vmem:[%s245 + $0x8] sm:$0xf]
      %v371 = vld [vmem:[%s245 + $0xc] sm:$0xf]
      %v404 = vunpack.c.l.b16 %v336
      %v405 = vunpack.c.l.b16 %v337
      %v406 = vunpack.c.l.b16 %v338
      %v407 = vunpack.c.l.b16 %v339
      %v408 = vunpack.c.l.b16 %v340
      %v409 = vunpack.c.l.b16 %v341
      %v410 = vunpack.c.l.b16 %v342
      %v411 = vunpack.c.l.b16 %v343
      %v412 = vunpack.c.l.b16 %v344
      %v413 = vunpack.c.l.b16 %v345
      %v414 = vunpack.c.l.b16 %v346
      %v415 = vunpack.c.l.b16 %v347
      %v416 = vunpack.c.l.b16 %v348
      %v417 = vunpack.c.l.b16 %v349
      %v418 = vunpack.c.l.b16 %v350
      %v419 = vunpack.c.l.b16 %v351
      %v420 = vunpack.c.l.b16 %v352
      %v421 = vunpack.c.l.b16 %v353
      %v422 = vunpack.c.l.b16 %v354
      %v423 = vunpack.c.l.b16 %v355
      %v424 = vunpack.c.l.b16 %v356
      %v425 = vunpack.c.l.b16 %v357
      %v426 = vunpack.c.l.b16 %v358
      %v427 = vunpack.c.l.b16 %v359
      %v428 = vunpack.c.l.b16 %v360
      %v429 = vunpack.c.l.b16 %v361
      %v430 = vunpack.c.l.b16 %v362
      %v431 = vunpack.c.l.b16 %v363
      %v432 = vunpack.c.l.b16 %v364
      %v433 = vunpack.c.l.b16 %v365
      %v434 = vunpack.c.l.b16 %v366
      %v435 = vunpack.c.l.b16 %v367
      %v436 = vpack.c.b16 %v405, %v404
      %v437 = vpack.c.b16 %v407, %v406
      %v438 = vpack.c.b16 %v409, %v408
      %v439 = vpack.c.b16 %v411, %v410
      %v440 = vpack.c.b16 %v413, %v412
      %v441 = vpack.c.b16 %v415, %v414
      %v442 = vpack.c.b16 %v417, %v416
      %v443 = vpack.c.b16 %v419, %v418
      %v444 = vpack.c.b16 %v421, %v420
      %v445 = vpack.c.b16 %v423, %v422
      %v446 = vpack.c.b16 %v425, %v424
      %v447 = vpack.c.b16 %v427, %v426
      %v448 = vpack.c.b16 %v429, %v428
      %v449 = vpack.c.b16 %v431, %v430
      %v450 = vpack.c.b16 %v433, %v432
      %v451 = vpack.c.b16 %v435, %v434
      %v456 = vunpack.c.l.b16 %v368
      %v457 = vunpack.c.l.b16 %v369
      %v458 = vunpack.c.l.b16 %v370
      %v459 = vunpack.c.l.b16 %v371
      %v460 = vpack.c.b16 %v457, %v456
      %v461 = vpack.c.b16 %v459, %v458
      %vm464 = vcmask 261120
      %v466 = vsel %vm464, %v436, 0
      %v469 = vsel %vm464, %v437, 0
      %v472 = vsel %vm464, %v438, 0
      %v475 = vsel %vm464, %v439, 0
      %v478 = vsel %vm464, %v440, 0
      %v481 = vsel %vm464, %v441, 0
      %v484 = vsel %vm464, %v442, 0
      %v487 = vsel %vm464, %v443, 0
      %v490 = vsel %vm464, %v444, 0
      %v493 = vsel %vm464, %v445, 0
      %v496 = vsel %vm464, %v446, 0
      %v499 = vsel %vm464, %v447, 0
      %v502 = vsel %vm464, %v448, 0
      %v505 = vsel %vm464, %v449, 0
      %v508 = vsel %vm464, %v450, 0
      %v511 = vsel %vm464, %v451, 0
      %513 = vmatprep.subr.bf16.mxu0 0
      %514 = vmatpush1.bf16.msra.mxu0 0
      %515 = vmatprep.subr.bf16.mxu0 0
      %516 = vmatpush1.bf16.msra.mxu0 0
      %517 = vmatprep.subr.bf16.mxu0 0
      %518 = vmatpush1.bf16.msra.mxu0 0
      %519 = vmatprep.subr.bf16.mxu0 0
      %520 = vmatpush1.bf16.msra.mxu0 0
      %521 = vmatprep.subr.bf16.mxu0 0
      %522 = vmatpush1.bf16.msra.mxu0 0
      %523 = vmatprep.subr.bf16.mxu0 0
      %524 = vmatpush1.bf16.msra.mxu0 0
      %525 = vmatprep.subr.bf16.mxu0 0
      %526 = vmatpush1.bf16.msra.mxu0 %v461
      %527 = vmatprep.subr.bf16.mxu0 0
      %528 = vmatpush1.bf16.msra.mxu0 %v460
      %529 = vmatprep.subr.bf16.mxu0 0
      %530 = vmatpush2.bf16.msra.mxu0 0
      %531 = vmatprep.subr.bf16.mxu0 0
      %532 = vmatpush2.bf16.msra.mxu0 0
      %533 = vmatprep.subr.bf16.mxu0 0
      %534 = vmatpush2.bf16.msra.mxu0 0
      %535 = vmatprep.subr.bf16.mxu0 0
      %536 = vmatpush2.bf16.msra.mxu0 0
      %537 = vmatprep.subr.bf16.mxu0 0
      %538 = vmatpush2.bf16.msra.mxu0 0
      %539 = vmatprep.subr.bf16.mxu0 0
      %540 = vmatpush2.bf16.msra.mxu0 0
      %541 = vmatprep.subr.bf16.mxu0 0
      %542 = vmatpush2.bf16.msra.mxu0 0
      %543 = vmatprep.subr.bf16.mxu0 0
      %544 = vmatpush2.bf16.msra.mxu0 0
      %545 = vmatprep.mubr.bf16.mxu0 0
      %546 = vmatmul.mubr.bf16.gmra.mxu0 %v466
      %v547 = vpop.f32.mrf.mxu0
      %v548 = vadd.f32 0.0, %v547
      %v549 = vpop.f32.mrf.mxu0
      %v550 = vpop.f32.mrf.mxu0
      %v551 = vadd.f32 0.0, %v550
      %v552 = vpop.f32.mrf.mxu0
      %553 = vmatprep.mubr.bf16.mxu0 0
      %554 = vmatmul.mubr.bf16.gmra.mxu0 %v469
      %v555 = vpop.f32.mrf.mxu0
      %v556 = vadd.f32 0.0, %v555
      %v557 = vpop.f32.mrf.mxu0
      %v558 = vpop.f32.mrf.mxu0
      %v559 = vadd.f32 0.0, %v558
      %v560 = vpop.f32.mrf.mxu0
      %561 = vmatprep.mubr.bf16.mxu0 0
      %562 = vmatmul.mubr.bf16.gmra.mxu0 %v472
      %v563 = vpop.f32.mrf.mxu0
      %v564 = vadd.f32 0.0, %v563
      %v565 = vpop.f32.mrf.mxu0
      %v566 = vpop.f32.mrf.mxu0
      %v567 = vadd.f32 0.0, %v566
      %v568 = vpop.f32.mrf.mxu0
      %569 = vmatprep.mubr.bf16.mxu0 0
      %570 = vmatmul.mubr.bf16.gmra.mxu0 %v475
      %v571 = vpop.f32.mrf.mxu0
      %v572 = vadd.f32 0.0, %v571
      %v573 = vpop.f32.mrf.mxu0
      %v574 = vpop.f32.mrf.mxu0
      %v575 = vadd.f32 0.0, %v574
      %v576 = vpop.f32.mrf.mxu0
      %577 = vmatprep.mubr.bf16.mxu0 0
      %578 = vmatmul.mubr.bf16.gmra.mxu0 %v478
      %v579 = vpop.f32.mrf.mxu0
      %v580 = vadd.f32 0.0, %v579
      %v581 = vpop.f32.mrf.mxu0
      %v582 = vpop.f32.mrf.mxu0
      %v583 = vadd.f32 0.0, %v582
      %v584 = vpop.f32.mrf.mxu0
      %585 = vmatprep.mubr.bf16.mxu0 0
      %586 = vmatmul.mubr.bf16.gmra.mxu0 %v481
      %v587 = vpop.f32.mrf.mxu0
      %v588 = vadd.f32 0.0, %v587
      %v589 = vpop.f32.mrf.mxu0
      %v590 = vpop.f32.mrf.mxu0
      %v591 = vadd.f32 0.0, %v590
      %v592 = vpop.f32.mrf.mxu0
      %593 = vmatprep.mubr.bf16.mxu0 0
      %594 = vmatmul.mubr.bf16.gmra.mxu0 %v484
      %v595 = vpop.f32.mrf.mxu0
      %v596 = vadd.f32 0.0, %v595
      %v597 = vpop.f32.mrf.mxu0
      %v598 = vpop.f32.mrf.mxu0
      %v599 = vadd.f32 0.0, %v598
      %v600 = vpop.f32.mrf.mxu0
      %601 = vmatprep.mubr.bf16.mxu0 0
      %602 = vmatmul.mubr.bf16.gmra.mxu0 %v487
      %v603 = vpop.f32.mrf.mxu0
      %v604 = vadd.f32 0.0, %v603
      %v605 = vpop.f32.mrf.mxu0
      %v606 = vpop.f32.mrf.mxu0
      %v607 = vadd.f32 0.0, %v606
      %v608 = vpop.f32.mrf.mxu0
      %609 = vmatprep.mubr.bf16.mxu0 0
      %610 = vmatmul.mubr.bf16.gmra.mxu0 %v490
      %v611 = vpop.f32.mrf.mxu0
      %v612 = vadd.f32 0.0, %v611
      %v613 = vpop.f32.mrf.mxu0
      %v614 = vpop.f32.mrf.mxu0
      %v615 = vadd.f32 0.0, %v614
      %v616 = vpop.f32.mrf.mxu0
      %617 = vmatprep.mubr.bf16.mxu0 0
      %618 = vmatmul.mubr.bf16.gmra.mxu0 %v493
      %v619 = vpop.f32.mrf.mxu0
      %v620 = vadd.f32 0.0, %v619
      %v621 = vpop.f32.mrf.mxu0
      %v622 = vpop.f32.mrf.mxu0
      %v623 = vadd.f32 0.0, %v622
      %v624 = vpop.f32.mrf.mxu0
      %625 = vmatprep.mubr.bf16.mxu0 0
      %626 = vmatmul.mubr.bf16.gmra.mxu0 %v496
      %v627 = vpop.f32.mrf.mxu0
      %v628 = vadd.f32 0.0, %v627
      %v629 = vpop.f32.mrf.mxu0
      %v630 = vpop.f32.mrf.mxu0
      %v631 = vadd.f32 0.0, %v630
      %v632 = vpop.f32.mrf.mxu0
      %633 = vmatprep.mubr.bf16.mxu0 0
      %634 = vmatmul.mubr.bf16.gmra.mxu0 %v499
      %v635 = vpop.f32.mrf.mxu0
      %v636 = vadd.f32 0.0, %v635
      %v637 = vpop.f32.mrf.mxu0
      %v638 = vpop.f32.mrf.mxu0
      %v639 = vadd.f32 0.0, %v638
      %v640 = vpop.f32.mrf.mxu0
      %641 = vmatprep.mubr.bf16.mxu0 0
      %642 = vmatmul.mubr.bf16.gmra.mxu0 %v502
      %v643 = vpop.f32.mrf.mxu0
      %v644 = vadd.f32 0.0, %v643
      %v645 = vpop.f32.mrf.mxu0
      %v646 = vpop.f32.mrf.mxu0
      %v647 = vadd.f32 0.0, %v646
      %v648 = vpop.f32.mrf.mxu0
      %649 = vmatprep.mubr.bf16.mxu0 0
      %650 = vmatmul.mubr.bf16.gmra.mxu0 %v505
      %v651 = vpop.f32.mrf.mxu0
      %v652 = vadd.f32 0.0, %v651
      %v653 = vpop.f32.mrf.mxu0
      %v654 = vpop.f32.mrf.mxu0
      %v655 = vadd.f32 0.0, %v654
      %v656 = vpop.f32.mrf.mxu0
      %657 = vmatprep.mubr.bf16.mxu0 0
      %658 = vmatmul.mubr.bf16.gmra.mxu0 %v508
      %v659 = vpop.f32.mrf.mxu0
      %v660 = vadd.f32 0.0, %v659
      %v661 = vpop.f32.mrf.mxu0
      %v662 = vpop.f32.mrf.mxu0
      %v663 = vadd.f32 0.0, %v662
      %v664 = vpop.f32.mrf.mxu0
      %665 = vmatprep.mubr.bf16.mxu0 0
      %666 = vmatmul.mubr.bf16.gmra.mxu0 %v511
      %v667 = vpop.f32.mrf.mxu0
      %v668 = vadd.f32 0.0, %v667
      %v669 = vpop.f32.mrf.mxu0
      %v670 = vpop.f32.mrf.mxu0
      %v671 = vadd.f32 0.0, %v670
      %v672 = vpop.f32.mrf.mxu0
      %673 = vdwg.mxu0
      %v674 = vadd.f32 %v304, %v548
      %v675 = vadd.f32 %v305, %v551
      %v676 = vadd.f32 %v306, %v556
      %v677 = vadd.f32 %v307, %v559
      %v678 = vadd.f32 %v308, %v564
      %v679 = vadd.f32 %v309, %v567
      %v680 = vadd.f32 %v310, %v572
      %v681 = vadd.f32 %v311, %v575
      %v682 = vadd.f32 %v312, %v580
      %v683 = vadd.f32 %v313, %v583
      %v684 = vadd.f32 %v314, %v588
      %v685 = vadd.f32 %v315, %v591
      %v686 = vadd.f32 %v316, %v596
      %v687 = vadd.f32 %v317, %v599
      %v688 = vadd.f32 %v318, %v604
      %v689 = vadd.f32 %v319, %v607
      %v690 = vadd.f32 %v320, %v612
      %v691 = vadd.f32 %v321, %v615
      %v692 = vadd.f32 %v322, %v620
      %v693 = vadd.f32 %v323, %v623
      %v694 = vadd.f32 %v324, %v628
      %v695 = vadd.f32 %v325, %v631
      %v696 = vadd.f32 %v326, %v636
      %v697 = vadd.f32 %v327, %v639
      %v698 = vadd.f32 %v328, %v644
      %v699 = vadd.f32 %v329, %v647
      %v700 = vadd.f32 %v330, %v652
      %v701 = vadd.f32 %v331, %v655
      %v702 = vadd.f32 %v332, %v660
      %v703 = vadd.f32 %v333, %v663
      %v704 = vadd.f32 %v334, %v668
      %v705 = vadd.f32 %v335, %v671
      %vm706 = vcmask 130048
      %707 = vst.msk [vmem:[#allocation2] sm:$0xff] %vm706, %v674
      %708 = vst.msk [vmem:[#allocation2 + $0x8] sm:$0xff] %vm706, %v675
      %709 = vst.msk [vmem:[#allocation2 + $0x10] sm:$0xff] %vm706, %v676
      %710 = vst.msk [vmem:[#allocation2 + $0x18] sm:$0xff] %vm706, %v677
      %711 = vst.msk [vmem:[#allocation2 + $0x20] sm:$0xff] %vm706, %v678
      %712 = vst.msk [vmem:[#allocation2 + $0x28] sm:$0xff] %vm706, %v679
      %713 = vst.msk [vmem:[#allocation2 + $0x30] sm:$0xff] %vm706, %v680
      %714 = vst.msk [vmem:[#allocation2 + $0x38] sm:$0xff] %vm706, %v681
      %715 = vst.msk [vmem:[#allocation2 + $0x40] sm:$0xff] %vm706, %v682
      %716 = vst.msk [vmem:[#allocation2 + $0x48] sm:$0xff] %vm706, %v683
      %717 = vst.msk [vmem:[#allocation2 + $0x50] sm:$0xff] %vm706, %v684
      %718 = vst.msk [vmem:[#allocation2 + $0x58] sm:$0xff] %vm706, %v685
      %719 = vst.msk [vmem:[#allocation2 + $0x60] sm:$0xff] %vm706, %v686
      %720 = vst.msk [vmem:[#allocation2 + $0x68] sm:$0xff] %vm706, %v687
      %721 = vst.msk [vmem:[#allocation2 + $0x70] sm:$0xff] %vm706, %v688
      %722 = vst.msk [vmem:[#allocation2 + $0x78] sm:$0xff] %vm706, %v689
      %723 = vst.msk [vmem:[#allocation2 + $0x80] sm:$0xff] %vm706, %v690
      %724 = vst.msk [vmem:[#allocation2 + $0x88] sm:$0xff] %vm706, %v691
      %725 = vst.msk [vmem:[#allocation2 + $0x90] sm:$0xff] %vm706, %v692
      %726 = vst.msk [vmem:[#allocation2 + $0x98] sm:$0xff] %vm706, %v693
      %727 = vst.msk [vmem:[#allocation2 + $0xa0] sm:$0xff] %vm706, %v694
      %728 = vst.msk [vmem:[#allocation2 + $0xa8] sm:$0xff] %vm706, %v695
      %729 = vst.msk [vmem:[#allocation2 + $0xb0] sm:$0xff] %vm706, %v696
      %730 = vst.msk [vmem:[#allocation2 + $0xb8] sm:$0xff] %vm706, %v697
      %731 = vst.msk [vmem:[#allocation2 + $0xc0] sm:$0xff] %vm706, %v698
      %732 = vst.msk [vmem:[#allocation2 + $0xc8] sm:$0xff] %vm706, %v699
      %733 = vst.msk [vmem:[#allocation2 + $0xd0] sm:$0xff] %vm706, %v700
      %734 = vst.msk [vmem:[#allocation2 + $0xd8] sm:$0xff] %vm706, %v701
      %735 = vst.msk [vmem:[#allocation2 + $0xe0] sm:$0xff] %vm706, %v702
      %736 = vst.msk [vmem:[#allocation2 + $0xe8] sm:$0xff] %vm706, %v703
      %737 = vst.msk [vmem:[#allocation2 + $0xf0] sm:$0xff] %vm706, %v704
      %738 = vst.msk [vmem:[#allocation2 + $0xf8] sm:$0xff] %vm706, %v705
      // Predicated region
      $region37: #{center_back_forward.10} parent=31 // pred_check
        %p739 = pneg %p260
      $region38: #{center_back_forward.10} parent=31 // pred_check_branch
        %741 = sbr.rel (%p739) target = $region40
      $region39: #{center_back_forward.10} parent=31 // pred_region
        %v742 = vld [vmem:[#allocation2] sm:$0xff]
        %v743 = vld [vmem:[#allocation2 + $0x8] sm:$0xff]
        %v744 = vld [vmem:[#allocation2 + $0x10] sm:$0xff]
        %v745 = vld [vmem:[#allocation2 + $0x18] sm:$0xff]
        %v746 = vld [vmem:[#allocation2 + $0x20] sm:$0xff]
        %v747 = vld [vmem:[#allocation2 + $0x28] sm:$0xff]
        %v748 = vld [vmem:[#allocation2 + $0x30] sm:$0xff]
        %v749 = vld [vmem:[#allocation2 + $0x38] sm:$0xff]
        %v750 = vld [vmem:[#allocation2 + $0x40] sm:$0xff]
        %v751 = vld [vmem:[#allocation2 + $0x48] sm:$0xff]
        %v752 = vld [vmem:[#allocation2 + $0x50] sm:$0xff]
        %v753 = vld [vmem:[#allocation2 + $0x58] sm:$0xff]
        %v754 = vld [vmem:[#allocation2 + $0x60] sm:$0xff]
        %v755 = vld [vmem:[#allocation2 + $0x68] sm:$0xff]
        %v756 = vld [vmem:[#allocation2 + $0x70] sm:$0xff]
        %v757 = vld [vmem:[#allocation2 + $0x78] sm:$0xff]
        %v758 = vld [vmem:[#allocation2 + $0x80] sm:$0xff]
        %v759 = vld [vmem:[#allocation2 + $0x88] sm:$0xff]
        %v760 = vld [vmem:[#allocation2 + $0x90] sm:$0xff]
        %v761 = vld [vmem:[#allocation2 + $0x98] sm:$0xff]
        %v762 = vld [vmem:[#allocation2 + $0xa0] sm:$0xff]
        %v763 = vld [vmem:[#allocation2 + $0xa8] sm:$0xff]
        %v764 = vld [vmem:[#allocation2 + $0xb0] sm:$0xff]
        %v765 = vld [vmem:[#allocation2 + $0xb8] sm:$0xff]
        %v766 = vld [vmem:[#allocation2 + $0xc0] sm:$0xff]
        %v767 = vld [vmem:[#allocation2 + $0xc8] sm:$0xff]
        %v768 = vld [vmem:[#allocation2 + $0xd0] sm:$0xff]
        %v769 = vld [vmem:[#allocation2 + $0xd8] sm:$0xff]
        %v770 = vld [vmem:[#allocation2 + $0xe0] sm:$0xff]
        %v771 = vld [vmem:[#allocation2 + $0xe8] sm:$0xff]
        %v772 = vld [vmem:[#allocation2 + $0xf0] sm:$0xff]
        %v773 = vld [vmem:[#allocation2 + $0xf8] sm:$0xff]
        %v774 = vmax.f32 %v742, 0.0
        %v775 = vmax.f32 %v743, 0.0
        %v776 = vmax.f32 %v744, 0.0
        %v777 = vmax.f32 %v745, 0.0
        %v778 = vmax.f32 %v746, 0.0
        %v779 = vmax.f32 %v747, 0.0
        %v780 = vmax.f32 %v748, 0.0
        %v781 = vmax.f32 %v749, 0.0
        %v782 = vmax.f32 %v750, 0.0
        %v783 = vmax.f32 %v751, 0.0
        %v784 = vmax.f32 %v752, 0.0
        %v785 = vmax.f32 %v753, 0.0
        %v786 = vmax.f32 %v754, 0.0
        %v787 = vmax.f32 %v755, 0.0
        %v788 = vmax.f32 %v756, 0.0
        %v789 = vmax.f32 %v757, 0.0
        %v790 = vmax.f32 %v758, 0.0
        %v791 = vmax.f32 %v759, 0.0
        %v792 = vmax.f32 %v760, 0.0
        %v793 = vmax.f32 %v761, 0.0
        %v794 = vmax.f32 %v762, 0.0
        %v795 = vmax.f32 %v763, 0.0
        %v796 = vmax.f32 %v764, 0.0
        %v797 = vmax.f32 %v765, 0.0
        %v798 = vmax.f32 %v766, 0.0
        %v799 = vmax.f32 %v767, 0.0
        %v800 = vmax.f32 %v768, 0.0
        %v801 = vmax.f32 %v769, 0.0
        %v802 = vmax.f32 %v770, 0.0
        %v803 = vmax.f32 %v771, 0.0
        %v804 = vmax.f32 %v772, 0.0
        %v805 = vmax.f32 %v773, 0.0
        %v806 = vpack.c.bf16 %v775, %v774
        %v807 = vpack.c.bf16 %v777, %v776
        %v808 = vpack.c.bf16 %v779, %v778
        %v809 = vpack.c.bf16 %v781, %v780
        %v810 = vpack.c.bf16 %v783, %v782
        %v811 = vpack.c.bf16 %v785, %v784
        %v812 = vpack.c.bf16 %v787, %v786
        %v813 = vpack.c.bf16 %v789, %v788
        %v814 = vpack.c.bf16 %v791, %v790
        %v815 = vpack.c.bf16 %v793, %v792
        %v816 = vpack.c.bf16 %v795, %v794
        %v817 = vpack.c.bf16 %v797, %v796
        %v818 = vpack.c.bf16 %v799, %v798
        %v819 = vpack.c.bf16 %v801, %v800
        %v820 = vpack.c.bf16 %v803, %v802
        %v821 = vpack.c.bf16 %v805, %v804
        %v838 = vunpack.c.l.b16 %v806
        %v839 = vunpack.c.h.b16 %v806
        %v840 = vunpack.c.l.b16 %v807
        %v841 = vunpack.c.h.b16 %v807
        %v842 = vunpack.c.l.b16 %v808
        %v843 = vunpack.c.h.b16 %v808
        %v844 = vunpack.c.l.b16 %v809
        %v845 = vunpack.c.h.b16 %v809
        %v846 = vunpack.c.l.b16 %v810
        %v847 = vunpack.c.h.b16 %v810
        %v848 = vunpack.c.l.b16 %v811
        %v849 = vunpack.c.h.b16 %v811
        %v850 = vunpack.c.l.b16 %v812
        %v851 = vunpack.c.h.b16 %v812
        %v852 = vunpack.c.l.b16 %v813
        %v853 = vunpack.c.h.b16 %v813
        %v854 = vunpack.c.l.b16 %v814
        %v855 = vunpack.c.h.b16 %v814
        %v856 = vunpack.c.l.b16 %v815
        %v857 = vunpack.c.h.b16 %v815
        %v858 = vunpack.c.l.b16 %v816
        %v859 = vunpack.c.h.b16 %v816
        %v860 = vunpack.c.l.b16 %v817
        %v861 = vunpack.c.h.b16 %v817
        %v862 = vunpack.c.l.b16 %v818
        %v863 = vunpack.c.h.b16 %v818
        %v864 = vunpack.c.l.b16 %v819
        %v865 = vunpack.c.h.b16 %v819
        %v866 = vunpack.c.l.b16 %v820
        %v867 = vunpack.c.h.b16 %v820
        %v868 = vunpack.c.l.b16 %v821
        %v869 = vunpack.c.h.b16 %v821
        %v870 = vpack.c.b16 %v838, %v838
        %v871 = vpack.c.b16 %v839, %v839
        %v872 = vpack.c.b16 %v840, %v840
        %v873 = vpack.c.b16 %v841, %v841
        %v874 = vpack.c.b16 %v842, %v842
        %v875 = vpack.c.b16 %v843, %v843
        %v876 = vpack.c.b16 %v844, %v844
        %v877 = vpack.c.b16 %v845, %v845
        %v878 = vpack.c.b16 %v846, %v846
        %v879 = vpack.c.b16 %v847, %v847
        %v880 = vpack.c.b16 %v848, %v848
        %v881 = vpack.c.b16 %v849, %v849
        %v882 = vpack.c.b16 %v850, %v850
        %v883 = vpack.c.b16 %v851, %v851
        %v884 = vpack.c.b16 %v852, %v852
        %v885 = vpack.c.b16 %v853, %v853
        %v886 = vpack.c.b16 %v854, %v854
        %v887 = vpack.c.b16 %v855, %v855
        %v888 = vpack.c.b16 %v856, %v856
        %v889 = vpack.c.b16 %v857, %v857
        %v890 = vpack.c.b16 %v858, %v858
        %v891 = vpack.c.b16 %v859, %v859
        %v892 = vpack.c.b16 %v860, %v860
        %v893 = vpack.c.b16 %v861, %v861
        %v894 = vpack.c.b16 %v862, %v862
        %v895 = vpack.c.b16 %v863, %v863
        %v896 = vpack.c.b16 %v864, %v864
        %v897 = vpack.c.b16 %v865, %v865
        %v898 = vpack.c.b16 %v866, %v866
        %v899 = vpack.c.b16 %v867, %v867
        %v900 = vpack.c.b16 %v868, %v868
        %v901 = vpack.c.b16 %v869, %v869
        %vm934 = vcmask 125952
        %935 = vst.msk [vmem:[%s257] sm:$0xf] %vm934, %v870
        %936 = vst.msk [vmem:[%s257 + $0x4] sm:$0xf] %vm934, %v871
        %937 = vst.msk [vmem:[%s257 + $0x8] sm:$0xf] %vm934, %v872
        %938 = vst.msk [vmem:[%s257 + $0xc] sm:$0xf] %vm934, %v873
        %939 = vst.msk [vmem:[%s257 + $0x10] sm:$0xf] %vm934, %v874
        %940 = vst.msk [vmem:[%s257 + $0x14] sm:$0xf] %vm934, %v875
        %941 = vst.msk [vmem:[%s257 + $0x18] sm:$0xf] %vm934, %v876
        %942 = vst.msk [vmem:[%s257 + $0x1c] sm:$0xf] %vm934, %v877
        %943 = vst.msk [vmem:[%s257 + $0x20] sm:$0xf] %vm934, %v878
        %944 = vst.msk [vmem:[%s257 + $0x24] sm:$0xf] %vm934, %v879
        %945 = vst.msk [vmem:[%s257 + $0x28] sm:$0xf] %vm934, %v880
        %946 = vst.msk [vmem:[%s257 + $0x2c] sm:$0xf] %vm934, %v881
        %947 = vst.msk [vmem:[%s257 + $0x30] sm:$0xf] %vm934, %v882
        %948 = vst.msk [vmem:[%s257 + $0x34] sm:$0xf] %vm934, %v883
        %949 = vst.msk [vmem:[%s257 + $0x38] sm:$0xf] %vm934, %v884
        %950 = vst.msk [vmem:[%s257 + $0x3c] sm:$0xf] %vm934, %v885
        %951 = vst.msk [vmem:[%s257 + $0x40] sm:$0xf] %vm934, %v886
        %952 = vst.msk [vmem:[%s257 + $0x44] sm:$0xf] %vm934, %v887
        %953 = vst.msk [vmem:[%s257 + $0x48] sm:$0xf] %vm934, %v888
        %954 = vst.msk [vmem:[%s257 + $0x4c] sm:$0xf] %vm934, %v889
        %955 = vst.msk [vmem:[%s257 + $0x50] sm:$0xf] %vm934, %v890
        %956 = vst.msk [vmem:[%s257 + $0x54] sm:$0xf] %vm934, %v891
        %957 = vst.msk [vmem:[%s257 + $0x58] sm:$0xf] %vm934, %v892
        %958 = vst.msk [vmem:[%s257 + $0x5c] sm:$0xf] %vm934, %v893
        %959 = vst.msk [vmem:[%s257 + $0x60] sm:$0xf] %vm934, %v894
        %960 = vst.msk [vmem:[%s257 + $0x64] sm:$0xf] %vm934, %v895
        %961 = vst.msk [vmem:[%s257 + $0x68] sm:$0xf] %vm934, %v896
        %962 = vst.msk [vmem:[%s257 + $0x6c] sm:$0xf] %vm934, %v897
        %963 = vst.msk [vmem:[%s257 + $0x70] sm:$0xf] %vm934, %v898
        %964 = vst.msk [vmem:[%s257 + $0x74] sm:$0xf] %vm934, %v899
        %965 = vst.msk [vmem:[%s257 + $0x78] sm:$0xf] %vm934, %v900
        %966 = vst.msk [vmem:[%s257 + $0x7c] sm:$0xf] %vm934, %v901
      $region40: #{center_back_forward.10} parent=31 // pred_fallthru
        _
      %s967 = smul.u32 32, %s19
      %p968 = scmp.lt.s32.totalorder %s967, 63
      %s969 = scalar_select %p968, %s967, 63
      %p970 = scmp.lt.s32.totalorder %s20, 0
      %s971 = scalar_select %p970, %s20, 0
      %s972 = sadd.s32 %s971, %s969
      %s973 = smul.addr %s972, 4
      %s974 = scalar_lea.vmem %s3, %s973
      // Predicated region
      $region41: #{center_back_forward.10} parent=31 // pred_check
        %p975 = pneg %p135
      $region42: #{center_back_forward.10} parent=31 // pred_check_branch
        %977 = sbr.rel (%p975) target = $region44
      $region43: #{center_back_forward.10} parent=31 // pred_region
        %s978 = smul.u32 32, %s19
      $region44: #{center_back_forward.10} parent=31 // pred_fallthru
        _
    $region32: #{center_back_forward.10} parent=5 // pred_fallthru
      _
    %p979 = scmp.le.s32.totalorder 2, %s9
    // Predicated region
    $region45: #{center_back_forward.10} parent=5 // pred_check
      %p980 = pneg %p979
    $region46: #{center_back_forward.10} parent=5 // pred_check_branch
      %982 = sbr.rel (%p980) target = $region48
    $region47: #{center_back_forward.10} parent=5 // pred_region
      %s983 = ssub.s32 %s9, 2
      // Predicated region
      $region49: #{center_back_forward.10} parent=47 // pred_check
        %p984 = pneg %p141
      $region50: #{center_back_forward.10} parent=47 // pred_check_branch
        %986 = sbr.rel (%p984) target = $region52
      $region51: #{center_back_forward.10} parent=47 // pred_region
        %s987 = smul.u32 32, %s22
        %p988 = scmp.lt.s32.totalorder %s987, 63
        %s989 = scalar_select %p988, %s987, 63
        %p990 = scmp.lt.s32.totalorder %s23, 0
        %s991 = scalar_select %p990, %s23, 0
        %s992 = sadd.s32 %s991, %s989
        %s993 = smul.addr %s992, 4
        %s994 = scalar_lea.vmem %s3, %s993
      $region52: #{center_back_forward.10} parent=47 // pred_fallthru
        _
    $region48: #{center_back_forward.10} parent=5 // pred_fallthru
      _
  $region6: #{center_back_forward.10} parent=0 // loop_footer
    %s13 = sadd.s32 1, %s9
  $region7: #{center_back_forward.10} parent=0 // loop_footer_branch
    %8 = sbr.rel target = $region3
  $region8: #{center_back_forward.10} parent=0 // loop_exit
    _

// kernel: center_back_forward.13
$region0: #{center_back_forward.13}
  #allocation0 [shape = 'u32[]', space=smem, size = 0x4, offset = 0x4, fixed_abs, tag = 'smem constant byte address 0x4 - core index']
  #allocation1 [shape = 'u32[144,128]{1,0:T(1,128)}', space=vmem, size = 0x12000, scoped, tag = 'internal scratch']
  #allocation2 [shape = 'f32[64,64]{1,0:T(8,128)}', space=vmem, size = 0x8000, scoped, tag = 'scratch operand']
  %s0 = inlined_call_operand.vmem [shape: bf16[128,16], index: 0, kind: input, shape index: {}]
  %s1 = inlined_call_operand.vmem [shape: bf16[16,64], index: 1, kind: input, shape index: {}]
  %s2 = inlined_call_operand.vmem [shape: f32[1,64], index: 2, kind: input, shape index: {}]
  %s3 = inlined_call_operand.vmem [shape: bf16[128,64], index: 3, kind: input, shape index: {}]
  %s4 = inlined_call_operand.vmem [shape: bf16[128,64], index: 4, kind: output, shape index: {}]
  %s5 = sld [smem:[#allocation0]]
  $region57: #{center_back_forward.13} parent=0
    _
  %s7 = ssub.s32 1, %s5
  %s8 = scalar_select 0, %s7, %s5
  loop: start=0, step=1, limit=4
  $region2: #{center_back_forward.13} parent=0 // loop_pre_header
    _
  $region3: #{center_back_forward.13} parent=0 // loop_header
    %s10 = sphi 0, %s14
    %p11 = scmp.ge.s32.totalorder %s10, 4
    %s17 = sphi 0, %s36
    %s18 = sphi 0, %s32
    %s19 = sphi 0, %s28
    %s20 = sphi 0, %s17
    %s21 = sphi 0, %s18
    %s22 = sphi 0, %s19
    %s23 = sphi 0, %s20
    %s24 = sphi 0, %s21
    %s25 = sphi 0, %s22
    %s41 = sphi 0, %s43
    %s44 = sphi 0, %s41
    %s45 = sphi 0, %s44
    %s61 = sphi 0, %s45
    %s69 = sphi 0, %s71
    %s72 = sphi 0, %s69
    %s73 = sphi 0, %s72
    %s89 = sphi 0, %s73
    %s95 = sphi 0, %s97
    %s98 = sphi 0, %s95
    %s99 = sphi 0, %s98
    %s115 = sphi 0, %s99
    %s123 = sphi 0, %s125
    %s126 = sphi 0, %s123
    %s127 = sphi 0, %s126
    %s143 = sphi 0, %s127
    %s151 = sphi 0, %s153
    %s154 = sphi 0, %s151
    %s155 = sphi 0, %s154
    %s171 = sphi 0, %s155
  $region4: #{center_back_forward.13} parent=0 // loop_header_branch
    %13 = sbr.rel (%p11) target = $region8
  $region5: #{center_back_forward.13} parent=0 // loop_body
    %s15 = ssub.s32 %s10, 1
    %s16 = ssub.s32 %s10, 2
    %s26 = sadd.s32 1, %s19
    %p27 = scmp.ge.s32.totalorder %s26, 1
    %s28 = scalar_select %p27, 0, %s26
    %s29 = sadd.s32 1, %s18
    %s30 = scalar_select %p27, %s29, %s18
    %p31 = scmp.ge.s32.totalorder %s30, 1
    %s32 = scalar_select %p31, 0, %s30
    %s33 = sadd.s32 1, %s17
    %s34 = scalar_select %p31, %s33, %s17
    %p35 = scmp.ge.s32.totalorder %s34, 2
    %s36 = scalar_select %p35, 0, %s34
    %s37 = ssub.s32 %s17, %s36
    %s38 = ssub.s32 %s19, %s28
    %s39 = sor.u32 %s37, %s38
    %p40 = scmp.eq.s32.totalorder %s39, 0
    %s42 = sadd.s32 %s41, 1
    %s43 = scalar_select %p40, %s41, %s42
    %p46 = pneg %p40
    %p47 = scmp.eq.s32.totalorder %s10, 1
    %p48 = por %p46, %p47
    %p49 = scmp.ne.s32.totalorder %s41, %s44
    %p50 = scmp.eq.s32.totalorder %s10, 0
    %p51 = por %p49, %p50
    %p52 = scmp.ne.s32.totalorder %s41, %s44
    %p53 = scmp.eq.s32.totalorder %s15, 1
    %p54 = por %p52, %p53
    %p55 = scmp.ne.s32.totalorder %s44, %s45
    %p56 = scmp.eq.s32.totalorder %s15, 0
    %p57 = por %p55, %p56
    %p58 = scmp.ne.s32.totalorder %s44, %s45
    %p59 = scmp.eq.s32.totalorder %s16, 1
    %p60 = por %p58, %p59
    %p62 = scmp.ne.s32.totalorder %s45, %s61
    %p63 = scmp.eq.s32.totalorder %s16, 0
    %p64 = por %p62, %p63
    %s65 = ssub.s32 %s19, %s28
    %s66 = ssub.s32 %s18, %s32
    %s67 = sor.u32 %s65, %s66
    %p68 = scmp.eq.s32.totalorder %s67, 0
    %s70 = sadd.s32 %s69, 1
    %s71 = scalar_select %p68, %s69, %s70
    %p74 = pneg %p68
    %p75 = scmp.eq.s32.totalorder %s10, 1
    %p76 = por %p74, %p75
    %p77 = scmp.ne.s32.totalorder %s69, %s72
    %p78 = scmp.eq.s32.totalorder %s10, 0
    %p79 = por %p77, %p78
    %p80 = scmp.ne.s32.totalorder %s69, %s72
    %p81 = scmp.eq.s32.totalorder %s15, 1
    %p82 = por %p80, %p81
    %p83 = scmp.ne.s32.totalorder %s72, %s73
    %p84 = scmp.eq.s32.totalorder %s15, 0
    %p85 = por %p83, %p84
    %p86 = scmp.ne.s32.totalorder %s72, %s73
    %p87 = scmp.eq.s32.totalorder %s16, 1
    %p88 = por %p86, %p87
    %p90 = scmp.ne.s32.totalorder %s73, %s89
    %p91 = scmp.eq.s32.totalorder %s16, 0
    %p92 = por %p90, %p91
    %s93 = ssub.s32 %s18, %s32
    %p94 = scmp.eq.s32.totalorder %s93, 0
    %s96 = sadd.s32 %s95, 1
    %s97 = scalar_select %p94, %s95, %s96
    %p100 = pneg %p94
    %p101 = scmp.eq.s32.totalorder %s10, 1
    %p102 = por %p100, %p101
    %p103 = scmp.ne.s32.totalorder %s95, %s98
    %p104 = scmp.eq.s32.totalorder %s10, 0
    %p105 = por %p103, %p104
    %p106 = scmp.ne.s32.totalorder %s95, %s98
    %p107 = scmp.eq.s32.totalorder %s15, 1
    %p108 = por %p106, %p107
    %p109 = scmp.ne.s32.totalorder %s98, %s99
    %p110 = scmp.eq.s32.totalorder %s15, 0
    %p111 = por %p109, %p110
    %p112 = scmp.ne.s32.totalorder %s98, %s99
    %p113 = scmp.eq.s32.totalorder %s16, 1
    %p114 = por %p112, %p113
    %p116 = scmp.ne.s32.totalorder %s99, %s115
    %p117 = scmp.eq.s32.totalorder %s16, 0
    %p118 = por %p116, %p117
    %s119 = ssub.s32 %s17, %s36
    %s120 = ssub.s32 %s18, %s32
    %s121 = sor.u32 %s119, %s120
    %p122 = scmp.eq.s32.totalorder %s121, 0
    %s124 = sadd.s32 %s123, 1
    %s125 = scalar_select %p122, %s123, %s124
    %p128 = pneg %p122
    %p129 = scmp.eq.s32.totalorder %s10, 1
    %p130 = por %p128, %p129
    %p131 = scmp.ne.s32.totalorder %s123, %s126
    %p132 = scmp.eq.s32.totalorder %s10, 0
    %p133 = por %p131, %p132
    %p134 = scmp.ne.s32.totalorder %s123, %s126
    %p135 = scmp.eq.s32.totalorder %s15, 1
    %p136 = por %p134, %p135
    %p137 = scmp.ne.s32.totalorder %s126, %s127
    %p138 = scmp.eq.s32.totalorder %s15, 0
    %p139 = por %p137, %p138
    %p140 = scmp.ne.s32.totalorder %s126, %s127
    %p141 = scmp.eq.s32.totalorder %s16, 1
    %p142 = por %p140, %p141
    %p144 = scmp.ne.s32.totalorder %s127, %s143
    %p145 = scmp.eq.s32.totalorder %s16, 0
    %p146 = por %p144, %p145
    %s147 = ssub.s32 %s17, %s36
    %s148 = ssub.s32 %s18, %s32
    %s149 = sor.u32 %s147, %s148
    %p150 = scmp.eq.s32.totalorder %s149, 0
    %s152 = sadd.s32 %s151, 1
    %s153 = scalar_select %p150, %s151, %s152
    %p156 = pneg %p150
    %p157 = scmp.eq.s32.totalorder %s10, 1
    %p158 = por %p156, %p157
    %p159 = scmp.ne.s32.totalorder %s151, %s154
    %p160 = scmp.eq.s32.totalorder %s10, 0
    %p161 = por %p159, %p160
    %p162 = scmp.ne.s32.totalorder %s151, %s154
    %p163 = scmp.eq.s32.totalorder %s15, 1
    %p164 = por %p162, %p163
    %p165 = scmp.ne.s32.totalorder %s154, %s155
    %p166 = scmp.eq.s32.totalorder %s15, 0
    %p167 = por %p165, %p166
    %p168 = scmp.ne.s32.totalorder %s154, %s155
    %p169 = scmp.eq.s32.totalorder %s16, 1
    %p170 = por %p168, %p169
    %p172 = scmp.ne.s32.totalorder %s155, %s171
    %p173 = scmp.eq.s32.totalorder %s16, 0
    %p174 = por %p172, %p173
    %p175 = scmp.le.s32.totalorder 1, %s10
    %p176 = scmp.lt.s32.totalorder %s10, 3
    %p177 = pnand %p175, %p176
    %p178 = pneg %p177
    // Predicated region
    $region9: #{center_back_forward.13} parent=5 // pred_check
      _
    $region10: #{center_back_forward.13} parent=5 // pred_check_branch
      %180 = sbr.rel (%p177) target = $region12
    $region11: #{center_back_forward.13} parent=5 // pred_region
      %s181 = ssub.s32 %s10, 1
      // Predicated region
      $region13: #{center_back_forward.13} parent=11 // pred_check
        %p182 = pneg %p85
      $region14: #{center_back_forward.13} parent=11 // pred_check_branch
        %184 = sbr.rel (%p182) target = $region16
      $region15: #{center_back_forward.13} parent=11 // pred_region
        %s185 = smul.u32 2, %s22
        %p186 = scmp.lt.s32.totalorder %s185, 1
        %s187 = scalar_select %p186, %s185, 1
        %p188 = scmp.lt.s32.totalorder %s21, 0
        %s189 = scalar_select %p188, %s21, 0
        %s190 = sadd.s32 %s189, %s187
        %s191 = smul.addr %s190, 4
        %s192 = scalar_lea.vmem %s1, %s191
        %s193 = smul.u32 2, %s22
      $region16: #{center_back_forward.13} parent=11 // pred_fallthru
        _
      // Predicated region
      $region17: #{center_back_forward.13} parent=11 // pred_check
        %p194 = pneg %p111
      $region18: #{center_back_forward.13} parent=11 // pred_check_branch
        %196 = sbr.rel (%p194) target = $region20
      $region19: #{center_back_forward.13} parent=11 // pred_region
        %p197 = scmp.lt.s32.totalorder %s21, 0
        %s198 = scalar_select %p197, %s21, 0
        %s199 = scalar_lea.vmem %s2, %s198
      $region20: #{center_back_forward.13} parent=11 // pred_fallthru
        _
    $region12: #{center_back_forward.13} parent=5 // pred_fallthru
      _
    %p200 = scmp.lt.s32.totalorder %s10, 2
    // Predicated region
    $region21: #{center_back_forward.13} parent=5 // pred_check
      %p201 = pneg %p200
    $region22: #{center_back_forward.13} parent=5 // pred_check_branch
      %203 = sbr.rel (%p201) target = $region24
    $region23: #{center_back_forward.13} parent=5 // pred_region
      // Predicated region
      $region25: #{center_back_forward.13} parent=23 // pred_check
        %p204 = pneg %p51
      $region26: #{center_back_forward.13} parent=23 // pred_check_branch
        %206 = sbr.rel (%p204) target = $region28
      $region27: #{center_back_forward.13} parent=23 // pred_region
        %s207 = smul.u32 8, %s17
        %p208 = scmp.lt.s32.totalorder %s207, 15
        %s209 = scalar_select %p208, %s207, 15
        %p210 = scmp.lt.s32.totalorder %s19, 0
        %s211 = scalar_select %p210, %s19, 0
        %s212 = sadd.s32 %s211, %s209
        %s213 = smul.addr %s212, 4
        %s214 = scalar_lea.vmem %s0, %s213
        %s215 = smul.u32 8, %s17
      $region28: #{center_back_forward.13} parent=23 // pred_fallthru
        _
      // Predicated region
      $region29: #{center_back_forward.13} parent=23 // pred_check
        %p216 = pneg %p133
      $region30: #{center_back_forward.13} parent=23 // pred_check_branch
        %218 = sbr.rel (%p216) target = $region32
      $region31: #{center_back_forward.13} parent=23 // pred_region
        %s219 = smul.u32 8, %s17
        %p220 = scmp.lt.s32.totalorder %s219, 15
        %s221 = scalar_select %p220, %s219, 15
        %p222 = scmp.lt.s32.totalorder %s18, 0
        %s223 = scalar_select %p222, %s18, 0
        %s224 = sadd.s32 %s223, %s221
        %s225 = smul.addr %s224, 4
        %s226 = scalar_lea.vmem %s3, %s225
        %s227 = smul.u32 8, %s17
      $region32: #{center_back_forward.13} parent=23 // pred_fallthru
        _
    $region24: #{center_back_forward.13} parent=5 // pred_fallthru
      _
    %p228 = scmp.le.s32.totalorder 1, %s10
    %p229 = scmp.lt.s32.totalorder %s10, 3
    %p230 = pnand %p228, %p229
    %p231 = pneg %p230
    // Predicated region
    $region33: #{center_back_forward.13} parent=5 // pred_check
      _
    $region34: #{center_back_forward.13} parent=5 // pred_check_branch
      %233 = sbr.rel (%p230) target = $region36
    $region35: #{center_back_forward.13} parent=5 // pred_region
      %s234 = ssub.s32 %s10, 1
      %s235 = smul.u32 8, %s20
      %p236 = scmp.lt.s32.totalorder %s235, 15
      %s237 = scalar_select %p236, %s235, 15
      %p238 = scmp.lt.s32.totalorder %s22, 0
      %s239 = scalar_select %p238, %s22, 0
      %s240 = sadd.s32 %s239, %s237
      %s241 = smul.addr %s240, 4
      %s242 = scalar_lea.vmem %s0, %s241
      %p243 = pneg %p57
      %p244 = pneg %p54
      %s245 = smul.u32 2, %s22
      %p246 = scmp.lt.s32.totalorder %s245, 1
      %s247 = scalar_select %p246, %s245, 1
      %p248 = scmp.lt.s32.totalorder %s21, 0
      %s249 = scalar_select %p248, %s21, 0
      %s250 = sadd.s32 %s249, %s247
      %s251 = smul.addr %s250, 4
      %s252 = scalar_lea.vmem %s1, %s251
      %p253 = pneg %p85
      %p254 = pneg %p82
      %p255 = scmp.lt.s32.totalorder %s21, 0
      %s256 = scalar_select %p255, %s21, 0
      %s257 = scalar_lea.vmem %s2, %s256
      %p258 = pneg %p111
      %p259 = pneg %p108
      %s260 = smul.u32 8, %s20
      %p261 = scmp.lt.s32.totalorder %s260, 15
      %s262 = scalar_select %p261, %s260, 15
      %p263 = scmp.lt.s32.totalorder %s21, 0
      %s264 = scalar_select %p263, %s21, 0
      %s265 = sadd.s32 %s264, %s262
      %s266 = smul.addr %s265, 4
      %s267 = scalar_lea.vmem %s3, %s266
      %p268 = pneg %p139
      %p269 = pneg %p136
      %p270 = pneg %p167
      %p271 = pneg %p164
      %s272 = smul.u32 8, %s20
      %p273 = scmp.lt.s32.totalorder %s272, 15
      %s274 = scalar_select %p273, %s272, 15
      %p275 = scmp.lt.s32.totalorder %s21, 0
      %s276 = scalar_select %p275, %s21, 0
      %s277 = sadd.s32 %s276, %s274
      %s278 = smul.addr %s277, 4
      %s279 = scalar_lea.vmem %s4, %s278
      %s280 = smul.u32 8, %s20
      %p281 = scmp.lt.s32.totalorder %s280, 15
      %s282 = scalar_select %p281, %s280, 15
      %p283 = scmp.lt.s32.totalorder %s22, 0
      %s284 = scalar_select %p283, %s22, 0
      %s285 = sadd.s32 %s284, %s282
      %s286 = smul.addr %s285, 4
      %s287 = scalar_lea.vmem %s0, %s286
      %s288 = smul.u32 8, %s20
      %s289 = smul.u32 2, %s22
      %p290 = scmp.lt.s32.totalorder %s289, 1
      %s291 = scalar_select %p290, %s289, 1
      %p292 = scmp.lt.s32.totalorder %s21, 0
      %s293 = scalar_select %p292, %s21, 0
      %s294 = sadd.s32 %s293, %s291
      %s295 = smul.addr %s294, 4
      %s296 = scalar_lea.vmem %s1, %s295
      %s297 = smul.u32 2, %s22
      %p298 = scmp.lt.s32.totalorder %s21, 0
      %s299 = scalar_select %p298, %s21, 0
      %s300 = scalar_lea.vmem %s2, %s299
      %s301 = smul.u32 8, %s20
      %p302 = scmp.lt.s32.totalorder %s301, 15
      %s303 = scalar_select %p302, %s301, 15
      %p304 = scmp.lt.s32.totalorder %s21, 0
      %s305 = scalar_select %p304, %s21, 0
      %s306 = sadd.s32 %s305, %s303
      %s307 = smul.addr %s306, 4
      %s308 = scalar_lea.vmem %s3, %s307
      %s309 = smul.u32 8, %s20
      %s310 = smul.u32 8, %s20
      %p311 = scmp.lt.s32.totalorder %s310, 15
      %s312 = scalar_select %p311, %s310, 15
      %p313 = scmp.lt.s32.totalorder %s21, 0
      %s314 = scalar_select %p313, %s21, 0
      %s315 = sadd.s32 %s314, %s312
      %s316 = smul.addr %s315, 4
      %s317 = scalar_lea.vmem %s4, %s316
      %s318 = smul.u32 8, %s20
      %p320 = scmp.eq.s32.totalorder %s22, 0
      // Predicated region
      $region37: #{center_back_forward.13} parent=35 // pred_check
        %p321 = pneg %p320
      $region38: #{center_back_forward.13} parent=35 // pred_check_branch
        %323 = sbr.rel (%p321) target = $region40
      $region39: #{center_back_forward.13} parent=35 // pred_region
        %v324 = vld [vmem:[%s300] sm:$0x1]
        %v326 = vlaneseq
        %v327 = vshrl.u32 %v326, 7
        %v328 = vsub.s32 0, %v327
        %v329 = vrot.slane %v324, %v328
        %vm331 = vcmask 523264
        %332 = vst.msk [vmem:[#allocation2] sm:$0xff] %vm331, %v329
        %333 = vst.msk [vmem:[#allocation2 + $0x8] sm:$0xff] %vm331, %v329
        %334 = vst.msk [vmem:[#allocation2 + $0x10] sm:$0xff] %vm331, %v329
        %335 = vst.msk [vmem:[#allocation2 + $0x18] sm:$0xff] %vm331, %v329
        %336 = vst.msk [vmem:[#allocation2 + $0x20] sm:$0xff] %vm331, %v329
        %337 = vst.msk [vmem:[#allocation2 + $0x28] sm:$0xff] %vm331, %v329
        %338 = vst.msk [vmem:[#allocation2 + $0x30] sm:$0xff] %vm331, %v329
        %339 = vst.msk [vmem:[#allocation2 + $0x38] sm:$0xff] %vm331, %v329
      $region40: #{center_back_forward.13} parent=35 // pred_fallthru
        _
      %v340 = vld [vmem:[#allocation2] sm:$0xff]
      %v341 = vld [vmem:[#allocation2 + $0x8] sm:$0xff]
      %v342 = vld [vmem:[#allocation2 + $0x10] sm:$0xff]
      %v343 = vld [vmem:[#allocation2 + $0x18] sm:$0xff]
      %v344 = vld [vmem:[#allocation2 + $0x20] sm:$0xff]
      %v345 = vld [vmem:[#allocation2 + $0x28] sm:$0xff]
      %v346 = vld [vmem:[#allocation2 + $0x30] sm:$0xff]
      %v347 = vld [vmem:[#allocation2 + $0x38] sm:$0xff]
      %v348 = vld [vmem:[%s287] sm:$0xf]
      %v349 = vld [vmem:[%s287 + $0x4] sm:$0xf]
      %v350 = vld [vmem:[%s287 + $0x8] sm:$0xf]
      %v351 = vld [vmem:[%s287 + $0xc] sm:$0xf]
      %v352 = vld [vmem:[%s287 + $0x10] sm:$0xf]
      %v353 = vld [vmem:[%s287 + $0x14] sm:$0xf]
      %v354 = vld [vmem:[%s287 + $0x18] sm:$0xf]
      %v355 = vld [vmem:[%s287 + $0x1c] sm:$0xf]
      %v356 = vld [vmem:[%s296] sm:$0xf]
      %v357 = vld [vmem:[%s296 + $0x4] sm:$0xf]
      %v366 = vunpack.c.l.b16 %v348
      %v367 = vunpack.c.l.b16 %v349
      %v368 = vunpack.c.l.b16 %v350
      %v369 = vunpack.c.l.b16 %v351
      %v370 = vunpack.c.l.b16 %v352
      %v371 = vunpack.c.l.b16 %v353
      %v372 = vunpack.c.l.b16 %v354
      %v373 = vunpack.c.l.b16 %v355
      %v374 = vpack.c.b16 %v367, %v366
      %v375 = vpack.c.b16 %v369, %v368
      %v376 = vpack.c.b16 %v371, %v370
      %v377 = vpack.c.b16 %v373, %v372
      %v380 = vunpack.c.l.b16 %v356
      %v381 = vunpack.c.l.b16 %v357
      %v382 = vpack.c.b16 %v381, %v380
      %vm384 = vcmask 130048
      %v386 = vsel %vm384, %v374, 0
      %v389 = vsel %vm384, %v375, 0
      %v392 = vsel %vm384, %v376, 0
      %v395 = vsel %vm384, %v377, 0
      %397 = vmatprep.subr.bf16.mxu0 0
      %398 = vmatpush1.bf16.msra.mxu0 0
      %399 = vmatprep.subr.bf16.mxu0 0
      %400 = vmatpush1.bf16.msra.mxu0 0
      %401 = vmatprep.subr.bf16.mxu0 0
      %402 = vmatpush1.bf16.msra.mxu0 0
      %403 = vmatprep.subr.bf16.mxu0 0
      %404 = vmatpush1.bf16.msra.mxu0 0
      %405 = vmatprep.subr.bf16.mxu0 0
      %406 = vmatpush1.bf16.msra.mxu0 0
      %407 = vmatprep.subr.bf16.mxu0 0
      %408 = vmatpush1.bf16.msra.mxu0 0
      %409 = vmatprep.subr.bf16.mxu0 0
      %410 = vmatpush1.bf16.msra.mxu0 0
      %411 = vmatprep.subr.bf16.mxu0 0
      %412 = vmatpush1.bf16.msra.mxu0 %v382
      %413 = vmatprep.subr.bf16.mxu0 0
      %414 = vmatpush2.bf16.msra.mxu0 0
      %415 = vmatprep.subr.bf16.mxu0 0
      %416 = vmatpush2.bf16.msra.mxu0 0
      %417 = vmatprep.subr.bf16.mxu0 0
      %418 = vmatpush2.bf16.msra.mxu0 0
      %419 = vmatprep.subr.bf16.mxu0 0
      %420 = vmatpush2.bf16.msra.mxu0 0
      %421 = vmatprep.subr.bf16.mxu0 0
      %422 = vmatpush2.bf16.msra.mxu0 0
      %423 = vmatprep.subr.bf16.mxu0 0
      %424 = vmatpush2.bf16.msra.mxu0 0
      %425 = vmatprep.subr.bf16.mxu0 0
      %426 = vmatpush2.bf16.msra.mxu0 0
      %427 = vmatprep.subr.bf16.mxu0 0
      %428 = vmatpush2.bf16.msra.mxu0 0
      %429 = vmatprep.mubr.bf16.mxu0 0
      %430 = vmatmul.mubr.bf16.gmra.mxu0 %v386
      %v431 = vpop.f32.mrf.mxu0
      %v432 = vadd.f32 0.0, %v431
      %v433 = vpop.f32.mrf.mxu0
      %v434 = vpop.f32.mrf.mxu0
      %v435 = vadd.f32 0.0, %v434
      %v436 = vpop.f32.mrf.mxu0
      %437 = vmatprep.mubr.bf16.mxu0 0
      %438 = vmatmul.mubr.bf16.gmra.mxu0 %v389
      %v439 = vpop.f32.mrf.mxu0
      %v440 = vadd.f32 0.0, %v439
      %v441 = vpop.f32.mrf.mxu0
      %v442 = vpop.f32.mrf.mxu0
      %v443 = vadd.f32 0.0, %v442
      %v444 = vpop.f32.mrf.mxu0
      %445 = vmatprep.mubr.bf16.mxu0 0
      %446 = vmatmul.mubr.bf16.gmra.mxu0 %v392
      %v447 = vpop.f32.mrf.mxu0
      %v448 = vadd.f32 0.0, %v447
      %v449 = vpop.f32.mrf.mxu0
      %v450 = vpop.f32.mrf.mxu0
      %v451 = vadd.f32 0.0, %v450
      %v452 = vpop.f32.mrf.mxu0
      %453 = vmatprep.mubr.bf16.mxu0 0
      %454 = vmatmul.mubr.bf16.gmra.mxu0 %v395
      %v455 = vpop.f32.mrf.mxu0
      %v456 = vadd.f32 0.0, %v455
      %v457 = vpop.f32.mrf.mxu0
      %v458 = vpop.f32.mrf.mxu0
      %v459 = vadd.f32 0.0, %v458
      %v460 = vpop.f32.mrf.mxu0
      %461 = vdwg.mxu0
      %v462 = vadd.f32 %v340, %v432
      %v463 = vadd.f32 %v341, %v435
      %v464 = vadd.f32 %v342, %v440
      %v465 = vadd.f32 %v343, %v443
      %v466 = vadd.f32 %v344, %v448
      %v467 = vadd.f32 %v345, %v451
      %v468 = vadd.f32 %v346, %v456
      %v469 = vadd.f32 %v347, %v459
      %vm470 = vcmask 523264
      %471 = vst.msk [vmem:[#allocation2] sm:$0xff] %vm470, %v462
      %472 = vst.msk [vmem:[#allocation2 + $0x8] sm:$0xff] %vm470, %v463
      %473 = vst.msk [vmem:[#allocation2 + $0x10] sm:$0xff] %vm470, %v464
      %474 = vst.msk [vmem:[#allocation2 + $0x18] sm:$0xff] %vm470, %v465
      %475 = vst.msk [vmem:[#allocation2 + $0x20] sm:$0xff] %vm470, %v466
      %476 = vst.msk [vmem:[#allocation2 + $0x28] sm:$0xff] %vm470, %v467
      %477 = vst.msk [vmem:[#allocation2 + $0x30] sm:$0xff] %vm470, %v468
      %478 = vst.msk [vmem:[#allocation2 + $0x38] sm:$0xff] %vm470, %v469
      // Predicated region
      $region41: #{center_back_forward.13} parent=35 // pred_check
        %p479 = pneg %p320
      $region42: #{center_back_forward.13} parent=35 // pred_check_branch
        %481 = sbr.rel (%p479) target = $region44
      $region43: #{center_back_forward.13} parent=35 // pred_region
        %v482 = vld [vmem:[#allocation2] sm:$0xff]
        %v483 = vld [vmem:[#allocation2 + $0x8] sm:$0xff]
        %v484 = vld [vmem:[#allocation2 + $0x10] sm:$0xff]
        %v485 = vld [vmem:[#allocation2 + $0x18] sm:$0xff]
        %v486 = vld [vmem:[#allocation2 + $0x20] sm:$0xff]
        %v487 = vld [vmem:[#allocation2 + $0x28] sm:$0xff]
        %v488 = vld [vmem:[#allocation2 + $0x30] sm:$0xff]
        %v489 = vld [vmem:[#allocation2 + $0x38] sm:$0xff]
        %v490 = vld [vmem:[%s308] sm:$0xf]
        %v491 = vld [vmem:[%s308 + $0x4] sm:$0xf]
        %v492 = vld [vmem:[%s308 + $0x8] sm:$0xf]
        %v493 = vld [vmem:[%s308 + $0xc] sm:$0xf]
        %v494 = vld [vmem:[%s308 + $0x10] sm:$0xf]
        %v495 = vld [vmem:[%s308 + $0x14] sm:$0xf]
        %v496 = vld [vmem:[%s308 + $0x18] sm:$0xf]
        %v497 = vld [vmem:[%s308 + $0x1c] sm:$0xf]
        %v498 = vunpack.c.l.bf16 %v490
        %v499 = vunpack.c.l.bf16 %v491
        %v500 = vunpack.c.l.bf16 %v492
        %v501 = vunpack.c.l.bf16 %v493
        %v502 = vunpack.c.l.bf16 %v494
        %v503 = vunpack.c.l.bf16 %v495
        %v504 = vunpack.c.l.bf16 %v496
        %v505 = vunpack.c.l.bf16 %v497
        %v506 = vadd.f32 %v482, %v498
        %v507 = vadd.f32 %v483, %v499
        %v508 = vadd.f32 %v484, %v500
        %v509 = vadd.f32 %v485, %v501
        %v510 = vadd.f32 %v486, %v502
        %v511 = vadd.f32 %v487, %v503
        %v512 = vadd.f32 %v488, %v504
        %v513 = vadd.f32 %v489, %v505
        %v514 = vmax.f32 %v506, 0.0
        %v515 = vmax.f32 %v507, 0.0
        %v516 = vmax.f32 %v508, 0.0
        %v517 = vmax.f32 %v509, 0.0
        %v518 = vmax.f32 %v510, 0.0
        %v519 = vmax.f32 %v511, 0.0
        %v520 = vmax.f32 %v512, 0.0
        %v521 = vmax.f32 %v513, 0.0
        %v522 = vpack.c.bf16 %v515, %v514
        %v523 = vpack.c.bf16 %v517, %v516
        %v524 = vpack.c.bf16 %v519, %v518
        %v525 = vpack.c.bf16 %v521, %v520
        %v530 = vunpack.c.l.b16 %v522
        %v531 = vunpack.c.h.b16 %v522
        %v532 = vunpack.c.l.b16 %v523
        %v533 = vunpack.c.h.b16 %v523
        %v534 = vunpack.c.l.b16 %v524
        %v535 = vunpack.c.h.b16 %v524
        %v536 = vunpack.c.l.b16 %v525
        %v537 = vunpack.c.h.b16 %v525
        %v538 = vpack.c.b16 %v530, %v530
        %v539 = vpack.c.b16 %v531, %v531
        %v540 = vpack.c.b16 %v532, %v532
        %v541 = vpack.c.b16 %v533, %v533
        %v542 = vpack.c.b16 %v534, %v534
        %v543 = vpack.c.b16 %v535, %v535
        %v544 = vpack.c.b16 %v536, %v536
        %v545 = vpack.c.b16 %v537, %v537
        %vm554 = vcmask 519168
        %555 = vst.msk [vmem:[%s317] sm:$0xf] %vm554, %v538
        %556 = vst.msk [vmem:[%s317 + $0x4] sm:$0xf] %vm554, %v539
        %557 = vst.msk [vmem:[%s317 + $0x8] sm:$0xf] %vm554, %v540
        %558 = vst.msk [vmem:[%s317 + $0xc] sm:$0xf] %vm554, %v541
        %559 = vst.msk [vmem:[%s317 + $0x10] sm:$0xf] %vm554, %v542
        %560 = vst.msk [vmem:[%s317 + $0x14] sm:$0xf] %vm554, %v543
        %561 = vst.msk [vmem:[%s317 + $0x18] sm:$0xf] %vm554, %v544
        %562 = vst.msk [vmem:[%s317 + $0x1c] sm:$0xf] %vm554, %v545
      $region44: #{center_back_forward.13} parent=35 // pred_fallthru
        _
      %s563 = smul.u32 8, %s20
      %p564 = scmp.lt.s32.totalorder %s563, 15
      %s565 = scalar_select %p564, %s563, 15
      %p566 = scmp.lt.s32.totalorder %s21, 0
      %s567 = scalar_select %p566, %s21, 0
      %s568 = sadd.s32 %s567, %s565
      %s569 = smul.addr %s568, 4
      %s570 = scalar_lea.vmem %s4, %s569
      // Predicated region
      $region45: #{center_back_forward.13} parent=35 // pred_check
        %p571 = pneg %p164
      $region46: #{center_back_forward.13} parent=35 // pred_check_branch
        %573 = sbr.rel (%p571) target = $region48
      $region47: #{center_back_forward.13} parent=35 // pred_region
        %s574 = smul.u32 8, %s20
      $region48: #{center_back_forward.13} parent=35 // pred_fallthru
        _
    $region36: #{center_back_forward.13} parent=5 // pred_fallthru
      _
    %p575 = scmp.le.s32.totalorder 2, %s10
    // Predicated region
    $region49: #{center_back_forward.13} parent=5 // pred_check
      %p576 = pneg %p575
    $region50: #{center_back_forward.13} parent=5 // pred_check_branch
      %578 = sbr.rel (%p576) target = $region52
    $region51: #{center_back_forward.13} parent=5 // pred_region
      %s579 = ssub.s32 %s10, 2
      // Predicated region
      $region53: #{center_back_forward.13} parent=51 // pred_check
        %p580 = pneg %p170
      $region54: #{center_back_forward.13} parent=51 // pred_check_branch
        %582 = sbr.rel (%p580) target = $region56
      $region55: #{center_back_forward.13} parent=51 // pred_region
        %s583 = smul.u32 8, %s23
        %p584 = scmp.lt.s32.totalorder %s583, 15
        %s585 = scalar_select %p584, %s583, 15
        %p586 = scmp.lt.s32.totalorder %s24, 0
        %s587 = scalar_select %p586, %s24, 0
        %s588 = sadd.s32 %s587, %s585
        %s589 = smul.addr %s588, 4
        %s590 = scalar_lea.vmem %s4, %s589
      $region56: #{center_back_forward.13} parent=51 // pred_fallthru
        _
    $region52: #{center_back_forward.13} parent=5 // pred_fallthru
      _
  $region6: #{center_back_forward.13} parent=0 // loop_footer
    %s14 = sadd.s32 1, %s10
  $region7: #{center_back_forward.13} parent=0 // loop_footer_branch
    %9 = sbr.rel target = $region3
  $region8: #{center_back_forward.13} parent=0 // loop_exit
    _

// kernel: center_back_forward.11
$region0: #{center_back_forward.11}
  #allocation0 [shape = 'u32[]', space=smem, size = 0x4, offset = 0x4, fixed_abs, tag = 'smem constant byte address 0x4 - core index']
  #allocation1 [shape = 'u32[144,128]{1,0:T(1,128)}', space=vmem, size = 0x12000, scoped, tag = 'internal scratch']
  #allocation2 [shape = 'f32[64,16]{1,0:T(8,128)}', space=vmem, size = 0x8000, scoped, tag = 'scratch operand']
  %s0 = inlined_call_operand.vmem [shape: bf16[128,144], index: 0, kind: input, shape index: {}]
  %s1 = inlined_call_operand.vmem [shape: bf16[144,16], index: 1, kind: input, shape index: {}]
  %s2 = inlined_call_operand.vmem [shape: f32[1,16], index: 2, kind: input, shape index: {}]
  %s3 = inlined_call_operand.vmem [shape: bf16[128,16], index: 3, kind: output, shape index: {}]
  %s4 = sld [smem:[#allocation0]]
  $region53: #{center_back_forward.11} parent=0
    _
  %s6 = ssub.s32 1, %s4
  %s7 = scalar_select 0, %s6, %s4
  loop: start=0, step=1, limit=4
  $region2: #{center_back_forward.11} parent=0 // loop_pre_header
    _
  $region3: #{center_back_forward.11} parent=0 // loop_header
    %s9 = sphi 0, %s13
    %p10 = scmp.ge.s32.totalorder %s9, 4
    %s16 = sphi 0, %s35
    %s17 = sphi 0, %s31
    %s18 = sphi 0, %s27
    %s19 = sphi 0, %s16
    %s20 = sphi 0, %s17
    %s21 = sphi 0, %s18
    %s22 = sphi 0, %s19
    %s23 = sphi 0, %s20
    %s24 = sphi 0, %s21
    %s40 = sphi 0, %s42
    %s43 = sphi 0, %s40
    %s44 = sphi 0, %s43
    %s60 = sphi 0, %s44
    %s68 = sphi 0, %s70
    %s71 = sphi 0, %s68
    %s72 = sphi 0, %s71
    %s88 = sphi 0, %s72
    %s94 = sphi 0, %s96
    %s97 = sphi 0, %s94
    %s98 = sphi 0, %s97
    %s114 = sphi 0, %s98
    %s122 = sphi 0, %s124
    %s125 = sphi 0, %s122
    %s126 = sphi 0, %s125
    %s142 = sphi 0, %s126
  $region4: #{center_back_forward.11} parent=0 // loop_header_branch
    %12 = sbr.rel (%p10) target = $region8
  $region5: #{center_back_forward.11} parent=0 // loop_body
    %s14 = ssub.s32 %s9, 1
    %s15 = ssub.s32 %s9, 2
    %s25 = sadd.s32 1, %s18
    %p26 = scmp.ge.s32.totalorder %s25, 1
    %s27 = scalar_select %p26, 0, %s25
    %s28 = sadd.s32 1, %s17
    %s29 = scalar_select %p26, %s28, %s17
    %p30 = scmp.ge.s32.totalorder %s29, 1
    %s31 = scalar_select %p30, 0, %s29
    %s32 = sadd.s32 1, %s16
    %s33 = scalar_select %p30, %s32, %s16
    %p34 = scmp.ge.s32.totalorder %s33, 2
    %s35 = scalar_select %p34, 0, %s33
    %s36 = ssub.s32 %s16, %s35
    %s37 = ssub.s32 %s18, %s27
    %s38 = sor.u32 %s36, %s37
    %p39 = scmp.eq.s32.totalorder %s38, 0
    %s41 = sadd.s32 %s40, 1
    %s42 = scalar_select %p39, %s40, %s41
    %p45 = pneg %p39
    %p46 = scmp.eq.s32.totalorder %s9, 1
    %p47 = por %p45, %p46
    %p48 = scmp.ne.s32.totalorder %s40, %s43
    %p49 = scmp.eq.s32.totalorder %s9, 0
    %p50 = por %p48, %p49
    %p51 = scmp.ne.s32.totalorder %s40, %s43
    %p52 = scmp.eq.s32.totalorder %s14, 1
    %p53 = por %p51, %p52
    %p54 = scmp.ne.s32.totalorder %s43, %s44
    %p55 = scmp.eq.s32.totalorder %s14, 0
    %p56 = por %p54, %p55
    %p57 = scmp.ne.s32.totalorder %s43, %s44
    %p58 = scmp.eq.s32.totalorder %s15, 1
    %p59 = por %p57, %p58
    %p61 = scmp.ne.s32.totalorder %s44, %s60
    %p62 = scmp.eq.s32.totalorder %s15, 0
    %p63 = por %p61, %p62
    %s64 = ssub.s32 %s18, %s27
    %s65 = ssub.s32 %s17, %s31
    %s66 = sor.u32 %s64, %s65
    %p67 = scmp.eq.s32.totalorder %s66, 0
    %s69 = sadd.s32 %s68, 1
    %s70 = scalar_select %p67, %s68, %s69
    %p73 = pneg %p67
    %p74 = scmp.eq.s32.totalorder %s9, 1
    %p75 = por %p73, %p74
    %p76 = scmp.ne.s32.totalorder %s68, %s71
    %p77 = scmp.eq.s32.totalorder %s9, 0
    %p78 = por %p76, %p77
    %p79 = scmp.ne.s32.totalorder %s68, %s71
    %p80 = scmp.eq.s32.totalorder %s14, 1
    %p81 = por %p79, %p80
    %p82 = scmp.ne.s32.totalorder %s71, %s72
    %p83 = scmp.eq.s32.totalorder %s14, 0
    %p84 = por %p82, %p83
    %p85 = scmp.ne.s32.totalorder %s71, %s72
    %p86 = scmp.eq.s32.totalorder %s15, 1
    %p87 = por %p85, %p86
    %p89 = scmp.ne.s32.totalorder %s72, %s88
    %p90 = scmp.eq.s32.totalorder %s15, 0
    %p91 = por %p89, %p90
    %s92 = ssub.s32 %s17, %s31
    %p93 = scmp.eq.s32.totalorder %s92, 0
    %s95 = sadd.s32 %s94, 1
    %s96 = scalar_select %p93, %s94, %s95
    %p99 = pneg %p93
    %p100 = scmp.eq.s32.totalorder %s9, 1
    %p101 = por %p99, %p100
    %p102 = scmp.ne.s32.totalorder %s94, %s97
    %p103 = scmp.eq.s32.totalorder %s9, 0
    %p104 = por %p102, %p103
    %p105 = scmp.ne.s32.totalorder %s94, %s97
    %p106 = scmp.eq.s32.totalorder %s14, 1
    %p107 = por %p105, %p106
    %p108 = scmp.ne.s32.totalorder %s97, %s98
    %p109 = scmp.eq.s32.totalorder %s14, 0
    %p110 = por %p108, %p109
    %p111 = scmp.ne.s32.totalorder %s97, %s98
    %p112 = scmp.eq.s32.totalorder %s15, 1
    %p113 = por %p111, %p112
    %p115 = scmp.ne.s32.totalorder %s98, %s114
    %p116 = scmp.eq.s32.totalorder %s15, 0
    %p117 = por %p115, %p116
    %s118 = ssub.s32 %s16, %s35
    %s119 = ssub.s32 %s17, %s31
    %s120 = sor.u32 %s118, %s119
    %p121 = scmp.eq.s32.totalorder %s120, 0
    %s123 = sadd.s32 %s122, 1
    %s124 = scalar_select %p121, %s122, %s123
    %p127 = pneg %p121
    %p128 = scmp.eq.s32.totalorder %s9, 1
    %p129 = por %p127, %p128
    %p130 = scmp.ne.s32.totalorder %s122, %s125
    %p131 = scmp.eq.s32.totalorder %s9, 0
    %p132 = por %p130, %p131
    %p133 = scmp.ne.s32.totalorder %s122, %s125
    %p134 = scmp.eq.s32.totalorder %s14, 1
    %p135 = por %p133, %p134
    %p136 = scmp.ne.s32.totalorder %s125, %s126
    %p137 = scmp.eq.s32.totalorder %s14, 0
    %p138 = por %p136, %p137
    %p139 = scmp.ne.s32.totalorder %s125, %s126
    %p140 = scmp.eq.s32.totalorder %s15, 1
    %p141 = por %p139, %p140
    %p143 = scmp.ne.s32.totalorder %s126, %s142
    %p144 = scmp.eq.s32.totalorder %s15, 0
    %p145 = por %p143, %p144
    %p146 = scmp.le.s32.totalorder 1, %s9
    %p147 = scmp.lt.s32.totalorder %s9, 3
    %p148 = pnand %p146, %p147
    %p149 = pneg %p148
    // Predicated region
    $region9: #{center_back_forward.11} parent=5 // pred_check
      _
    $region10: #{center_back_forward.11} parent=5 // pred_check_branch
      %151 = sbr.rel (%p148) target = $region12
    $region11: #{center_back_forward.11} parent=5 // pred_region
      %s152 = ssub.s32 %s9, 1
      // Predicated region
      $region13: #{center_back_forward.11} parent=11 // pred_check
        %p153 = pneg %p84
      $region14: #{center_back_forward.11} parent=11 // pred_check_branch
        %155 = sbr.rel (%p153) target = $region16
      $region15: #{center_back_forward.11} parent=11 // pred_region
        %s156 = smul.u32 18, %s21
        %p157 = scmp.lt.s32.totalorder %s156, 17
        %s158 = scalar_select %p157, %s156, 17
        %p159 = scmp.lt.s32.totalorder %s20, 0
        %s160 = scalar_select %p159, %s20, 0
        %s161 = sadd.s32 %s160, %s158
        %s162 = smul.addr %s161, 4
        %s163 = scalar_lea.vmem %s1, %s162
        %s164 = smul.u32 18, %s21
      $region16: #{center_back_forward.11} parent=11 // pred_fallthru
        _
      // Predicated region
      $region17: #{center_back_forward.11} parent=11 // pred_check
        %p165 = pneg %p110
      $region18: #{center_back_forward.11} parent=11 // pred_check_branch
        %167 = sbr.rel (%p165) target = $region20
      $region19: #{center_back_forward.11} parent=11 // pred_region
        %p168 = scmp.lt.s32.totalorder %s20, 0
        %s169 = scalar_select %p168, %s20, 0
        %s170 = scalar_lea.vmem %s2, %s169
      $region20: #{center_back_forward.11} parent=11 // pred_fallthru
        _
    $region12: #{center_back_forward.11} parent=5 // pred_fallthru
      _
    %p171 = scmp.lt.s32.totalorder %s9, 2
    // Predicated region
    $region21: #{center_back_forward.11} parent=5 // pred_check
      %p172 = pneg %p171
    $region22: #{center_back_forward.11} parent=5 // pred_check_branch
      %174 = sbr.rel (%p172) target = $region24
    $region23: #{center_back_forward.11} parent=5 // pred_region
      // Predicated region
      $region25: #{center_back_forward.11} parent=23 // pred_check
        %p175 = pneg %p50
      $region26: #{center_back_forward.11} parent=23 // pred_check_branch
        %177 = sbr.rel (%p175) target = $region28
      $region27: #{center_back_forward.11} parent=23 // pred_region
        %s178 = smul.u32 8, %s16
        %s179 = smul.u32 2, %s18
        %p180 = scmp.lt.s32.totalorder %s178, 15
        %s181 = scalar_select %p180, %s178, 15
        %p182 = scmp.lt.s32.totalorder %s179, 1
        %s183 = scalar_select %p182, %s179, 1
        %s184 = smul.addr %s181, 2
        %s185 = sadd.s32 %s183, %s184
        %s186 = smul.addr %s185, 4
        %s187 = scalar_lea.vmem %s0, %s186
        %s188 = smul.u32 8, %s16
        %s189 = smul.u32 2, %s18
      $region28: #{center_back_forward.11} parent=23 // pred_fallthru
        _
    $region24: #{center_back_forward.11} parent=5 // pred_fallthru
      _
    %p190 = scmp.le.s32.totalorder 1, %s9
    %p191 = scmp.lt.s32.totalorder %s9, 3
    %p192 = pnand %p190, %p191
    %p193 = pneg %p192
    // Predicated region
    $region29: #{center_back_forward.11} parent=5 // pred_check
      _
    $region30: #{center_back_forward.11} parent=5 // pred_check_branch
      %195 = sbr.rel (%p192) target = $region32
    $region31: #{center_back_forward.11} parent=5 // pred_region
      %s196 = ssub.s32 %s9, 1
      %s197 = smul.u32 8, %s19
      %s198 = smul.u32 2, %s21
      %p199 = scmp.lt.s32.totalorder %s197, 15
      %s200 = scalar_select %p199, %s197, 15
      %p201 = scmp.lt.s32.totalorder %s198, 1
      %s202 = scalar_select %p201, %s198, 1
      %s203 = smul.addr %s200, 2
      %s204 = sadd.s32 %s202, %s203
      %s205 = smul.addr %s204, 4
      %s206 = scalar_lea.vmem %s0, %s205
      %p207 = pneg %p56
      %p208 = pneg %p53
      %s209 = smul.u32 18, %s21
      %p210 = scmp.lt.s32.totalorder %s209, 17
      %s211 = scalar_select %p210, %s209, 17
      %p212 = scmp.lt.s32.totalorder %s20, 0
      %s213 = scalar_select %p212, %s20, 0
      %s214 = sadd.s32 %s213, %s211
      %s215 = smul.addr %s214, 4
      %s216 = scalar_lea.vmem %s1, %s215
      %p217 = pneg %p84
      %p218 = pneg %p81
      %p219 = scmp.lt.s32.totalorder %s20, 0
      %s220 = scalar_select %p219, %s20, 0
      %s221 = scalar_lea.vmem %s2, %s220
      %p222 = pneg %p110
      %p223 = pneg %p107
      %p224 = pneg %p138
      %p225 = pneg %p135
      %s226 = smul.u32 8, %s19
      %p227 = scmp.lt.s32.totalorder %s226, 15
      %s228 = scalar_select %p227, %s226, 15
      %p229 = scmp.lt.s32.totalorder %s20, 0
      %s230 = scalar_select %p229, %s20, 0
      %s231 = sadd.s32 %s230, %s228
      %s232 = smul.addr %s231, 4
      %s233 = scalar_lea.vmem %s3, %s232
      %s234 = smul.u32 8, %s19
      %s235 = smul.u32 2, %s21
      %p236 = scmp.lt.s32.totalorder %s234, 15
      %s237 = scalar_select %p236, %s234, 15
      %p238 = scmp.lt.s32.totalorder %s235, 1
      %s239 = scalar_select %p238, %s235, 1
      %s240 = smul.addr %s237, 2
      %s241 = sadd.s32 %s239, %s240
      %s242 = smul.addr %s241, 4
      %s243 = scalar_lea.vmem %s0, %s242
      %s244 = smul.u32 8, %s19
      %s245 = smul.u32 2, %s21
      %s246 = smul.u32 18, %s21
      %p247 = scmp.lt.s32.totalorder %s246, 17
      %s248 = scalar_select %p247, %s246, 17
      %p249 = scmp.lt.s32.totalorder %s20, 0
      %s250 = scalar_select %p249, %s20, 0
      %s251 = sadd.s32 %s250, %s248
      %s252 = smul.addr %s251, 4
      %s253 = scalar_lea.vmem %s1, %s252
      %s254 = smul.u32 18, %s21
      %p255 = scmp.lt.s32.totalorder %s20, 0
      %s256 = scalar_select %p255, %s20, 0
      %s257 = scalar_lea.vmem %s2, %s256
      %s258 = smul.u32 8, %s19
      %p259 = scmp.lt.s32.totalorder %s258, 15
      %s260 = scalar_select %p259, %s258, 15
      %p261 = scmp.lt.s32.totalorder %s20, 0
      %s262 = scalar_select %p261, %s20, 0
      %s263 = sadd.s32 %s262, %s260
      %s264 = smul.addr %s263, 4
      %s265 = scalar_lea.vmem %s3, %s264
      %s266 = smul.u32 8, %s19
      %p268 = scmp.eq.s32.totalorder %s21, 0
      // Predicated region
      $region33: #{center_back_forward.11} parent=31 // pred_check
        %p269 = pneg %p268
      $region34: #{center_back_forward.11} parent=31 // pred_check_branch
        %271 = sbr.rel (%p269) target = $region36
      $region35: #{center_back_forward.11} parent=31 // pred_region
        %v272 = vld [vmem:[%s257] sm:$0x1]
        %v274 = vlaneseq
        %v275 = vshrl.u32 %v274, 7
        %v276 = vsub.s32 0, %v275
        %v277 = vrot.slane %v272, %v276
        %vm279 = vcmask 130048
        %280 = vst.msk [vmem:[#allocation2] sm:$0xff] %vm279, %v277
        %281 = vst.msk [vmem:[#allocation2 + $0x8] sm:$0xff] %vm279, %v277
        %282 = vst.msk [vmem:[#allocation2 + $0x10] sm:$0xff] %vm279, %v277
        %283 = vst.msk [vmem:[#allocation2 + $0x18] sm:$0xff] %vm279, %v277
        %284 = vst.msk [vmem:[#allocation2 + $0x20] sm:$0xff] %vm279, %v277
        %285 = vst.msk [vmem:[#allocation2 + $0x28] sm:$0xff] %vm279, %v277
        %286 = vst.msk [vmem:[#allocation2 + $0x30] sm:$0xff] %vm279, %v277
        %287 = vst.msk [vmem:[#allocation2 + $0x38] sm:$0xff] %vm279, %v277
      $region36: #{center_back_forward.11} parent=31 // pred_fallthru
        _
      %v288 = vld [vmem:[#allocation2] sm:$0xff]
      %v289 = vld [vmem:[#allocation2 + $0x8] sm:$0xff]
      %v290 = vld [vmem:[#allocation2 + $0x10] sm:$0xff]
      %v291 = vld [vmem:[#allocation2 + $0x18] sm:$0xff]
      %v292 = vld [vmem:[#allocation2 + $0x20] sm:$0xff]
      %v293 = vld [vmem:[#allocation2 + $0x28] sm:$0xff]
      %v294 = vld [vmem:[#allocation2 + $0x30] sm:$0xff]
      %v295 = vld [vmem:[#allocation2 + $0x38] sm:$0xff]
      %v296 = vld [vmem:[%s243] sm:$0xff]
      %v297 = vld [vmem:[%s243 + $0x8] sm:$0xff]
      %v298 = vld [vmem:[%s243 + $0x10] sm:$0xff]
      %v299 = vld [vmem:[%s243 + $0x18] sm:$0xff]
      %v300 = vld [vmem:[%s243 + $0x20] sm:$0xff]
      %v301 = vld [vmem:[%s243 + $0x28] sm:$0xff]
      %v302 = vld [vmem:[%s243 + $0x30] sm:$0xff]
      %v303 = vld [vmem:[%s243 + $0x38] sm:$0xff]
      %v304 = vld [vmem:[%s253] sm:$0xf]
      %v305 = vld [vmem:[%s253 + $0x4] sm:$0xf]
      %v306 = vld [vmem:[%s253 + $0x8] sm:$0xf]
      %v307 = vld [vmem:[%s253 + $0xc] sm:$0xf]
      %v308 = vld [vmem:[%s253 + $0x10] sm:$0xf]
      %v309 = vld [vmem:[%s253 + $0x14] sm:$0xf]
      %v310 = vld [vmem:[%s253 + $0x18] sm:$0xf]
      %v311 = vld [vmem:[%s253 + $0x1c] sm:$0xf]
      %v312 = vld [vmem:[%s253 + $0x20] sm:$0xf]
      %v313 = vld [vmem:[%s253 + $0x24] sm:$0xf]
      %v314 = vld [vmem:[%s253 + $0x28] sm:$0xf]
      %v315 = vld [vmem:[%s253 + $0x2c] sm:$0xf]
      %v316 = vld [vmem:[%s253 + $0x30] sm:$0xf]
      %v317 = vld [vmem:[%s253 + $0x34] sm:$0xf]
      %v318 = vld [vmem:[%s253 + $0x38] sm:$0xf]
      %v319 = vld [vmem:[%s253 + $0x3c] sm:$0xf]
      %v320 = vld [vmem:[%s253 + $0x40] sm:$0xf]
      %v321 = vld [vmem:[%s253 + $0x44] sm:$0xf]
      %v330 = vunpack.c.l.b16 %v296
      %v331 = vunpack.c.h.b16 %v296
      %v332 = vunpack.c.l.b16 %v297
      %v333 = vunpack.c.h.b16 %v297
      %v334 = vunpack.c.l.b16 %v298
      %v335 = vunpack.c.h.b16 %v298
      %v336 = vunpack.c.l.b16 %v299
      %v337 = vunpack.c.h.b16 %v299
      %v338 = vunpack.c.l.b16 %v300
      %v339 = vunpack.c.h.b16 %v300
      %v340 = vunpack.c.l.b16 %v301
      %v341 = vunpack.c.h.b16 %v301
      %v342 = vunpack.c.l.b16 %v302
      %v343 = vunpack.c.h.b16 %v302
      %v344 = vunpack.c.l.b16 %v303
      %v345 = vunpack.c.h.b16 %v303
      %v346 = vpack.c.b16 %v332, %v330
      %v347 = vpack.c.b16 %v333, %v331
      %v348 = vpack.c.b16 %v336, %v334
      %v349 = vpack.c.b16 %v337, %v335
      %v350 = vpack.c.b16 %v340, %v338
      %v351 = vpack.c.b16 %v341, %v339
      %v352 = vpack.c.b16 %v344, %v342
      %v353 = vpack.c.b16 %v345, %v343
      %v376 = vunpack.c.l.b16 %v304
      %v377 = vunpack.c.l.b16 %v305
      %v378 = vunpack.c.l.b16 %v306
      %v379 = vunpack.c.l.b16 %v307
      %v380 = vunpack.c.l.b16 %v308
      %v381 = vunpack.c.l.b16 %v309
      %v382 = vunpack.c.l.b16 %v310
      %v383 = vunpack.c.l.b16 %v311
      %v384 = vunpack.c.l.b16 %v312
      %v385 = vunpack.c.l.b16 %v313
      %v386 = vunpack.c.l.b16 %v314
      %v387 = vunpack.c.l.b16 %v315
      %v388 = vunpack.c.l.b16 %v316
      %v389 = vunpack.c.l.b16 %v317
      %v390 = vunpack.c.l.b16 %v318
      %v391 = vunpack.c.l.b16 %v319
      %v392 = vunpack.c.l.b16 %v320
      %v393 = vunpack.c.l.b16 %v321
      %v394 = vpack.c.b16 %v377, %v376
      %v395 = vpack.c.b16 %v379, %v378
      %v396 = vpack.c.b16 %v381, %v380
      %v397 = vpack.c.b16 %v383, %v382
      %v398 = vpack.c.b16 %v385, %v384
      %v399 = vpack.c.b16 %v387, %v386
      %v400 = vpack.c.b16 %v389, %v388
      %v401 = vpack.c.b16 %v391, %v390
      %v402 = vpack.c.b16 %v393, %v392
      %vm412 = vcmask 130048
      %v414 = vsel %vm412, %v347, 0
      %v417 = vsel %vm412, %v349, 0
      %v420 = vsel %vm412, %v351, 0
      %v423 = vsel %vm412, %v353, 0
      %425 = vmatprep.subr.bf16.mxu0 0
      %426 = vmatpush1.bf16.msra.mxu0 %v401
      %427 = vmatprep.subr.bf16.mxu0 0
      %428 = vmatpush1.bf16.msra.mxu0 %v400
      %429 = vmatprep.subr.bf16.mxu0 0
      %430 = vmatpush1.bf16.msra.mxu0 %v399
      %431 = vmatprep.subr.bf16.mxu0 0
      %432 = vmatpush1.bf16.msra.mxu0 %v398
      %433 = vmatprep.subr.bf16.mxu0 0
      %434 = vmatpush1.bf16.msra.mxu0 %v397
      %435 = vmatprep.subr.bf16.mxu0 0
      %436 = vmatpush1.bf16.msra.mxu0 %v396
      %437 = vmatprep.subr.bf16.mxu0 0
      %438 = vmatpush1.bf16.msra.mxu0 %v395
      %439 = vmatprep.subr.bf16.mxu0 0
      %440 = vmatpush1.bf16.msra.mxu0 %v394
      %441 = vmatprep.subr.bf16.mxu0 0
      %442 = vmatpush2.bf16.msra.mxu0 0
      %443 = vmatprep.subr.bf16.mxu0 0
      %444 = vmatpush2.bf16.msra.mxu0 0
      %445 = vmatprep.subr.bf16.mxu0 0
      %446 = vmatpush2.bf16.msra.mxu0 0
      %447 = vmatprep.subr.bf16.mxu0 0
      %448 = vmatpush2.bf16.msra.mxu0 0
      %449 = vmatprep.subr.bf16.mxu0 0
      %450 = vmatpush2.bf16.msra.mxu0 0
      %451 = vmatprep.subr.bf16.mxu0 0
      %452 = vmatpush2.bf16.msra.mxu0 0
      %453 = vmatprep.subr.bf16.mxu0 0
      %454 = vmatpush2.bf16.msra.mxu0 0
      %455 = vmatprep.subr.bf16.mxu0 0
      %456 = vmatpush2.bf16.msra.mxu0 %v402
      %457 = vmatprep.mubr.bf16.mxu0 %v414
      %458 = vmatmul.mubr.bf16.gmra.mxu0 %v346
      %v459 = vpop.f32.mrf.mxu0
      %v460 = vadd.f32 0.0, %v459
      %v461 = vpop.f32.mrf.mxu0
      %v462 = vpop.f32.mrf.mxu0
      %v463 = vadd.f32 0.0, %v462
      %v464 = vpop.f32.mrf.mxu0
      %465 = vmatprep.mubr.bf16.mxu0 %v417
      %466 = vmatmul.mubr.bf16.gmra.mxu0 %v348
      %v467 = vpop.f32.mrf.mxu0
      %v468 = vadd.f32 0.0, %v467
      %v469 = vpop.f32.mrf.mxu0
      %v470 = vpop.f32.mrf.mxu0
      %v471 = vadd.f32 0.0, %v470
      %v472 = vpop.f32.mrf.mxu0
      %473 = vmatprep.mubr.bf16.mxu0 %v420
      %474 = vmatmul.mubr.bf16.gmra.mxu0 %v350
      %v475 = vpop.f32.mrf.mxu0
      %v476 = vadd.f32 0.0, %v475
      %v477 = vpop.f32.mrf.mxu0
      %v478 = vpop.f32.mrf.mxu0
      %v479 = vadd.f32 0.0, %v478
      %v480 = vpop.f32.mrf.mxu0
      %481 = vmatprep.mubr.bf16.mxu0 %v423
      %482 = vmatmul.mubr.bf16.gmra.mxu0 %v352
      %v483 = vpop.f32.mrf.mxu0
      %v484 = vadd.f32 0.0, %v483
      %v485 = vpop.f32.mrf.mxu0
      %v486 = vpop.f32.mrf.mxu0
      %v487 = vadd.f32 0.0, %v486
      %v488 = vpop.f32.mrf.mxu0
      %489 = vdwg.mxu0
      %v490 = vadd.f32 %v288, %v460
      %v491 = vadd.f32 %v289, %v463
      %v492 = vadd.f32 %v290, %v468
      %v493 = vadd.f32 %v291, %v471
      %v494 = vadd.f32 %v292, %v476
      %v495 = vadd.f32 %v293, %v479
      %v496 = vadd.f32 %v294, %v484
      %v497 = vadd.f32 %v295, %v487
      %498 = vst.msk [vmem:[#allocation2] sm:$0xff] %vm412, %v490
      %499 = vst.msk [vmem:[#allocation2 + $0x8] sm:$0xff] %vm412, %v491
      %500 = vst.msk [vmem:[#allocation2 + $0x10] sm:$0xff] %vm412, %v492
      %501 = vst.msk [vmem:[#allocation2 + $0x18] sm:$0xff] %vm412, %v493
      %502 = vst.msk [vmem:[#allocation2 + $0x20] sm:$0xff] %vm412, %v494
      %503 = vst.msk [vmem:[#allocation2 + $0x28] sm:$0xff] %vm412, %v495
      %504 = vst.msk [vmem:[#allocation2 + $0x30] sm:$0xff] %vm412, %v496
      %505 = vst.msk [vmem:[#allocation2 + $0x38] sm:$0xff] %vm412, %v497
      // Predicated region
      $region37: #{center_back_forward.11} parent=31 // pred_check
        %p506 = pneg %p268
      $region38: #{center_back_forward.11} parent=31 // pred_check_branch
        %508 = sbr.rel (%p506) target = $region40
      $region39: #{center_back_forward.11} parent=31 // pred_region
        %v509 = vld [vmem:[#allocation2] sm:$0xff]
        %v510 = vld [vmem:[#allocation2 + $0x8] sm:$0xff]
        %v511 = vld [vmem:[#allocation2 + $0x10] sm:$0xff]
        %v512 = vld [vmem:[#allocation2 + $0x18] sm:$0xff]
        %v513 = vld [vmem:[#allocation2 + $0x20] sm:$0xff]
        %v514 = vld [vmem:[#allocation2 + $0x28] sm:$0xff]
        %v515 = vld [vmem:[#allocation2 + $0x30] sm:$0xff]
        %v516 = vld [vmem:[#allocation2 + $0x38] sm:$0xff]
        %v517 = vmax.f32 %v509, 0.0
        %v518 = vmax.f32 %v510, 0.0
        %v519 = vmax.f32 %v511, 0.0
        %v520 = vmax.f32 %v512, 0.0
        %v521 = vmax.f32 %v513, 0.0
        %v522 = vmax.f32 %v514, 0.0
        %v523 = vmax.f32 %v515, 0.0
        %v524 = vmax.f32 %v516, 0.0
        %v525 = vpack.c.bf16 %v518, %v517
        %v526 = vpack.c.bf16 %v520, %v519
        %v527 = vpack.c.bf16 %v522, %v521
        %v528 = vpack.c.bf16 %v524, %v523
        %v533 = vunpack.c.l.b16 %v525
        %v534 = vunpack.c.h.b16 %v525
        %v535 = vunpack.c.l.b16 %v526
        %v536 = vunpack.c.h.b16 %v526
        %v537 = vunpack.c.l.b16 %v527
        %v538 = vunpack.c.h.b16 %v527
        %v539 = vunpack.c.l.b16 %v528
        %v540 = vunpack.c.h.b16 %v528
        %v541 = vpack.c.b16 %v533, %v533
        %v542 = vpack.c.b16 %v534, %v534
        %v543 = vpack.c.b16 %v535, %v535
        %v544 = vpack.c.b16 %v536, %v536
        %v545 = vpack.c.b16 %v537, %v537
        %v546 = vpack.c.b16 %v538, %v538
        %v547 = vpack.c.b16 %v539, %v539
        %v548 = vpack.c.b16 %v540, %v540
        %vm557 = vcmask 125952
        %558 = vst.msk [vmem:[%s265] sm:$0xf] %vm557, %v541
        %559 = vst.msk [vmem:[%s265 + $0x4] sm:$0xf] %vm557, %v542
        %560 = vst.msk [vmem:[%s265 + $0x8] sm:$0xf] %vm557, %v543
        %561 = vst.msk [vmem:[%s265 + $0xc] sm:$0xf] %vm557, %v544
        %562 = vst.msk [vmem:[%s265 + $0x10] sm:$0xf] %vm557, %v545
        %563 = vst.msk [vmem:[%s265 + $0x14] sm:$0xf] %vm557, %v546
        %564 = vst.msk [vmem:[%s265 + $0x18] sm:$0xf] %vm557, %v547
        %565 = vst.msk [vmem:[%s265 + $0x1c] sm:$0xf] %vm557, %v548
      $region40: #{center_back_forward.11} parent=31 // pred_fallthru
        _
      %s566 = smul.u32 8, %s19
      %p567 = scmp.lt.s32.totalorder %s566, 15
      %s568 = scalar_select %p567, %s566, 15
      %p569 = scmp.lt.s32.totalorder %s20, 0
      %s570 = scalar_select %p569, %s20, 0
      %s571 = sadd.s32 %s570, %s568
      %s572 = smul.addr %s571, 4
      %s573 = scalar_lea.vmem %s3, %s572
      // Predicated region
      $region41: #{center_back_forward.11} parent=31 // pred_check
        %p574 = pneg %p135
      $region42: #{center_back_forward.11} parent=31 // pred_check_branch
        %576 = sbr.rel (%p574) target = $region44
      $region43: #{center_back_forward.11} parent=31 // pred_region
        %s577 = smul.u32 8, %s19
      $region44: #{center_back_forward.11} parent=31 // pred_fallthru
        _
    $region32: #{center_back_forward.11} parent=5 // pred_fallthru
      _
    %p578 = scmp.le.s32.totalorder 2, %s9
    // Predicated region
    $region45: #{center_back_forward.11} parent=5 // pred_check
      %p579 = pneg %p578
    $region46: #{center_back_forward.11} parent=5 // pred_check_branch
      %581 = sbr.rel (%p579) target = $region48
    $region47: #{center_back_forward.11} parent=5 // pred_region
      %s582 = ssub.s32 %s9, 2
      // Predicated region
      $region49: #{center_back_forward.11} parent=47 // pred_check
        %p583 = pneg %p141
      $region50: #{center_back_forward.11} parent=47 // pred_check_branch
        %585 = sbr.rel (%p583) target = $region52
      $region51: #{center_back_forward.11} parent=47 // pred_region
        %s586 = smul.u32 8, %s22
        %p587 = scmp.lt.s32.totalorder %s586, 15
        %s588 = scalar_select %p587, %s586, 15
        %p589 = scmp.lt.s32.totalorder %s23, 0
        %s590 = scalar_select %p589, %s23, 0
        %s591 = sadd.s32 %s590, %s588
        %s592 = smul.addr %s591, 4
        %s593 = scalar_lea.vmem %s3, %s592
      $region52: #{center_back_forward.11} parent=47 // pred_fallthru
        _
    $region48: #{center_back_forward.11} parent=5 // pred_fallthru
      _
  $region6: #{center_back_forward.11} parent=0 // loop_footer
    %s13 = sadd.s32 1, %s9
  $region7: #{center_back_forward.11} parent=0 // loop_footer_branch
    %8 = sbr.rel target = $region3
  $region8: #{center_back_forward.11} parent=0 // loop_exit
    _

// kernel: center_back_forward.14
$region0: #{center_back_forward.14}
  #allocation0 [shape = 'u32[]', space=smem, size = 0x4, offset = 0x4, fixed_abs, tag = 'smem constant byte address 0x4 - core index']
  #allocation1 [shape = 'u32[144,128]{1,0:T(1,128)}', space=vmem, size = 0x12000, scoped, tag = 'internal scratch']
  #allocation2 [shape = 'f32[64,16]{1,0:T(8,128)}', space=vmem, size = 0x8000, scoped, tag = 'scratch operand']
  %s0 = inlined_call_operand.vmem [shape: bf16[128,64], index: 0, kind: input, shape index: {}]
  %s1 = inlined_call_operand.vmem [shape: bf16[64,16], index: 1, kind: input, shape index: {}]
  %s2 = inlined_call_operand.vmem [shape: f32[1,16], index: 2, kind: input, shape index: {}]
  %s3 = inlined_call_operand.vmem [shape: bf16[128,16], index: 3, kind: output, shape index: {}]
  %s4 = sld [smem:[#allocation0]]
  $region53: #{center_back_forward.14} parent=0
    _
  %s6 = ssub.s32 1, %s4
  %s7 = scalar_select 0, %s6, %s4
  loop: start=0, step=1, limit=4
  $region2: #{center_back_forward.14} parent=0 // loop_pre_header
    _
  $region3: #{center_back_forward.14} parent=0 // loop_header
    %s9 = sphi 0, %s13
    %p10 = scmp.ge.s32.totalorder %s9, 4
    %s16 = sphi 0, %s35
    %s17 = sphi 0, %s31
    %s18 = sphi 0, %s27
    %s19 = sphi 0, %s16
    %s20 = sphi 0, %s17
    %s21 = sphi 0, %s18
    %s22 = sphi 0, %s19
    %s23 = sphi 0, %s20
    %s24 = sphi 0, %s21
    %s40 = sphi 0, %s42
    %s43 = sphi 0, %s40
    %s44 = sphi 0, %s43
    %s60 = sphi 0, %s44
    %s68 = sphi 0, %s70
    %s71 = sphi 0, %s68
    %s72 = sphi 0, %s71
    %s88 = sphi 0, %s72
    %s94 = sphi 0, %s96
    %s97 = sphi 0, %s94
    %s98 = sphi 0, %s97
    %s114 = sphi 0, %s98
    %s122 = sphi 0, %s124
    %s125 = sphi 0, %s122
    %s126 = sphi 0, %s125
    %s142 = sphi 0, %s126
  $region4: #{center_back_forward.14} parent=0 // loop_header_branch
    %12 = sbr.rel (%p10) target = $region8
  $region5: #{center_back_forward.14} parent=0 // loop_body
    %s14 = ssub.s32 %s9, 1
    %s15 = ssub.s32 %s9, 2
    %s25 = sadd.s32 1, %s18
    %p26 = scmp.ge.s32.totalorder %s25, 1
    %s27 = scalar_select %p26, 0, %s25
    %s28 = sadd.s32 1, %s17
    %s29 = scalar_select %p26, %s28, %s17
    %p30 = scmp.ge.s32.totalorder %s29, 1
    %s31 = scalar_select %p30, 0, %s29
    %s32 = sadd.s32 1, %s16
    %s33 = scalar_select %p30, %s32, %s16
    %p34 = scmp.ge.s32.totalorder %s33, 2
    %s35 = scalar_select %p34, 0, %s33
    %s36 = ssub.s32 %s16, %s35
    %s37 = ssub.s32 %s18, %s27
    %s38 = sor.u32 %s36, %s37
    %p39 = scmp.eq.s32.totalorder %s38, 0
    %s41 = sadd.s32 %s40, 1
    %s42 = scalar_select %p39, %s40, %s41
    %p45 = pneg %p39
    %p46 = scmp.eq.s32.totalorder %s9, 1
    %p47 = por %p45, %p46
    %p48 = scmp.ne.s32.totalorder %s40, %s43
    %p49 = scmp.eq.s32.totalorder %s9, 0
    %p50 = por %p48, %p49
    %p51 = scmp.ne.s32.totalorder %s40, %s43
    %p52 = scmp.eq.s32.totalorder %s14, 1
    %p53 = por %p51, %p52
    %p54 = scmp.ne.s32.totalorder %s43, %s44
    %p55 = scmp.eq.s32.totalorder %s14, 0
    %p56 = por %p54, %p55
    %p57 = scmp.ne.s32.totalorder %s43, %s44
    %p58 = scmp.eq.s32.totalorder %s15, 1
    %p59 = por %p57, %p58
    %p61 = scmp.ne.s32.totalorder %s44, %s60
    %p62 = scmp.eq.s32.totalorder %s15, 0
    %p63 = por %p61, %p62
    %s64 = ssub.s32 %s18, %s27
    %s65 = ssub.s32 %s17, %s31
    %s66 = sor.u32 %s64, %s65
    %p67 = scmp.eq.s32.totalorder %s66, 0
    %s69 = sadd.s32 %s68, 1
    %s70 = scalar_select %p67, %s68, %s69
    %p73 = pneg %p67
    %p74 = scmp.eq.s32.totalorder %s9, 1
    %p75 = por %p73, %p74
    %p76 = scmp.ne.s32.totalorder %s68, %s71
    %p77 = scmp.eq.s32.totalorder %s9, 0
    %p78 = por %p76, %p77
    %p79 = scmp.ne.s32.totalorder %s68, %s71
    %p80 = scmp.eq.s32.totalorder %s14, 1
    %p81 = por %p79, %p80
    %p82 = scmp.ne.s32.totalorder %s71, %s72
    %p83 = scmp.eq.s32.totalorder %s14, 0
    %p84 = por %p82, %p83
    %p85 = scmp.ne.s32.totalorder %s71, %s72
    %p86 = scmp.eq.s32.totalorder %s15, 1
    %p87 = por %p85, %p86
    %p89 = scmp.ne.s32.totalorder %s72, %s88
    %p90 = scmp.eq.s32.totalorder %s15, 0
    %p91 = por %p89, %p90
    %s92 = ssub.s32 %s17, %s31
    %p93 = scmp.eq.s32.totalorder %s92, 0
    %s95 = sadd.s32 %s94, 1
    %s96 = scalar_select %p93, %s94, %s95
    %p99 = pneg %p93
    %p100 = scmp.eq.s32.totalorder %s9, 1
    %p101 = por %p99, %p100
    %p102 = scmp.ne.s32.totalorder %s94, %s97
    %p103 = scmp.eq.s32.totalorder %s9, 0
    %p104 = por %p102, %p103
    %p105 = scmp.ne.s32.totalorder %s94, %s97
    %p106 = scmp.eq.s32.totalorder %s14, 1
    %p107 = por %p105, %p106
    %p108 = scmp.ne.s32.totalorder %s97, %s98
    %p109 = scmp.eq.s32.totalorder %s14, 0
    %p110 = por %p108, %p109
    %p111 = scmp.ne.s32.totalorder %s97, %s98
    %p112 = scmp.eq.s32.totalorder %s15, 1
    %p113 = por %p111, %p112
    %p115 = scmp.ne.s32.totalorder %s98, %s114
    %p116 = scmp.eq.s32.totalorder %s15, 0
    %p117 = por %p115, %p116
    %s118 = ssub.s32 %s16, %s35
    %s119 = ssub.s32 %s17, %s31
    %s120 = sor.u32 %s118, %s119
    %p121 = scmp.eq.s32.totalorder %s120, 0
    %s123 = sadd.s32 %s122, 1
    %s124 = scalar_select %p121, %s122, %s123
    %p127 = pneg %p121
    %p128 = scmp.eq.s32.totalorder %s9, 1
    %p129 = por %p127, %p128
    %p130 = scmp.ne.s32.totalorder %s122, %s125
    %p131 = scmp.eq.s32.totalorder %s9, 0
    %p132 = por %p130, %p131
    %p133 = scmp.ne.s32.totalorder %s122, %s125
    %p134 = scmp.eq.s32.totalorder %s14, 1
    %p135 = por %p133, %p134
    %p136 = scmp.ne.s32.totalorder %s125, %s126
    %p137 = scmp.eq.s32.totalorder %s14, 0
    %p138 = por %p136, %p137
    %p139 = scmp.ne.s32.totalorder %s125, %s126
    %p140 = scmp.eq.s32.totalorder %s15, 1
    %p141 = por %p139, %p140
    %p143 = scmp.ne.s32.totalorder %s126, %s142
    %p144 = scmp.eq.s32.totalorder %s15, 0
    %p145 = por %p143, %p144
    %p146 = scmp.le.s32.totalorder 1, %s9
    %p147 = scmp.lt.s32.totalorder %s9, 3
    %p148 = pnand %p146, %p147
    %p149 = pneg %p148
    // Predicated region
    $region9: #{center_back_forward.14} parent=5 // pred_check
      _
    $region10: #{center_back_forward.14} parent=5 // pred_check_branch
      %151 = sbr.rel (%p148) target = $region12
    $region11: #{center_back_forward.14} parent=5 // pred_region
      %s152 = ssub.s32 %s9, 1
      // Predicated region
      $region13: #{center_back_forward.14} parent=11 // pred_check
        %p153 = pneg %p84
      $region14: #{center_back_forward.14} parent=11 // pred_check_branch
        %155 = sbr.rel (%p153) target = $region16
      $region15: #{center_back_forward.14} parent=11 // pred_region
        %s156 = smul.u32 8, %s21
        %p157 = scmp.lt.s32.totalorder %s156, 7
        %s158 = scalar_select %p157, %s156, 7
        %p159 = scmp.lt.s32.totalorder %s20, 0
        %s160 = scalar_select %p159, %s20, 0
        %s161 = sadd.s32 %s160, %s158
        %s162 = smul.addr %s161, 4
        %s163 = scalar_lea.vmem %s1, %s162
        %s164 = smul.u32 8, %s21
      $region16: #{center_back_forward.14} parent=11 // pred_fallthru
        _
      // Predicated region
      $region17: #{center_back_forward.14} parent=11 // pred_check
        %p165 = pneg %p110
      $region18: #{center_back_forward.14} parent=11 // pred_check_branch
        %167 = sbr.rel (%p165) target = $region20
      $region19: #{center_back_forward.14} parent=11 // pred_region
        %p168 = scmp.lt.s32.totalorder %s20, 0
        %s169 = scalar_select %p168, %s20, 0
        %s170 = scalar_lea.vmem %s2, %s169
      $region20: #{center_back_forward.14} parent=11 // pred_fallthru
        _
    $region12: #{center_back_forward.14} parent=5 // pred_fallthru
      _
    %p171 = scmp.lt.s32.totalorder %s9, 2
    // Predicated region
    $region21: #{center_back_forward.14} parent=5 // pred_check
      %p172 = pneg %p171
    $region22: #{center_back_forward.14} parent=5 // pred_check_branch
      %174 = sbr.rel (%p172) target = $region24
    $region23: #{center_back_forward.14} parent=5 // pred_region
      // Predicated region
      $region25: #{center_back_forward.14} parent=23 // pred_check
        %p175 = pneg %p50
      $region26: #{center_back_forward.14} parent=23 // pred_check_branch
        %177 = sbr.rel (%p175) target = $region28
      $region27: #{center_back_forward.14} parent=23 // pred_region
        %s178 = smul.u32 8, %s16
        %p179 = scmp.lt.s32.totalorder %s178, 15
        %s180 = scalar_select %p179, %s178, 15
        %p181 = scmp.lt.s32.totalorder %s18, 0
        %s182 = scalar_select %p181, %s18, 0
        %s183 = sadd.s32 %s182, %s180
        %s184 = smul.addr %s183, 4
        %s185 = scalar_lea.vmem %s0, %s184
        %s186 = smul.u32 8, %s16
      $region28: #{center_back_forward.14} parent=23 // pred_fallthru
        _
    $region24: #{center_back_forward.14} parent=5 // pred_fallthru
      _
    %p187 = scmp.le.s32.totalorder 1, %s9
    %p188 = scmp.lt.s32.totalorder %s9, 3
    %p189 = pnand %p187, %p188
    %p190 = pneg %p189
    // Predicated region
    $region29: #{center_back_forward.14} parent=5 // pred_check
      _
    $region30: #{center_back_forward.14} parent=5 // pred_check_branch
      %192 = sbr.rel (%p189) target = $region32
    $region31: #{center_back_forward.14} parent=5 // pred_region
      %s193 = ssub.s32 %s9, 1
      %s194 = smul.u32 8, %s19
      %p195 = scmp.lt.s32.totalorder %s194, 15
      %s196 = scalar_select %p195, %s194, 15
      %p197 = scmp.lt.s32.totalorder %s21, 0
      %s198 = scalar_select %p197, %s21, 0
      %s199 = sadd.s32 %s198, %s196
      %s200 = smul.addr %s199, 4
      %s201 = scalar_lea.vmem %s0, %s200
      %p202 = pneg %p56
      %p203 = pneg %p53
      %s204 = smul.u32 8, %s21
      %p205 = scmp.lt.s32.totalorder %s204, 7
      %s206 = scalar_select %p205, %s204, 7
      %p207 = scmp.lt.s32.totalorder %s20, 0
      %s208 = scalar_select %p207, %s20, 0
      %s209 = sadd.s32 %s208, %s206
      %s210 = smul.addr %s209, 4
      %s211 = scalar_lea.vmem %s1, %s210
      %p212 = pneg %p84
      %p213 = pneg %p81
      %p214 = scmp.lt.s32.totalorder %s20, 0
      %s215 = scalar_select %p214, %s20, 0
      %s216 = scalar_lea.vmem %s2, %s215
      %p217 = pneg %p110
      %p218 = pneg %p107
      %p219 = pneg %p138
      %p220 = pneg %p135
      %s221 = smul.u32 8, %s19
      %p222 = scmp.lt.s32.totalorder %s221, 15
      %s223 = scalar_select %p222, %s221, 15
      %p224 = scmp.lt.s32.totalorder %s20, 0
      %s225 = scalar_select %p224, %s20, 0
      %s226 = sadd.s32 %s225, %s223
      %s227 = smul.addr %s226, 4
      %s228 = scalar_lea.vmem %s3, %s227
      %s229 = smul.u32 8, %s19
      %p230 = scmp.lt.s32.totalorder %s229, 15
      %s231 = scalar_select %p230, %s229, 15
      %p232 = scmp.lt.s32.totalorder %s21, 0
      %s233 = scalar_select %p232, %s21, 0
      %s234 = sadd.s32 %s233, %s231
      %s235 = smul.addr %s234, 4
      %s236 = scalar_lea.vmem %s0, %s235
      %s237 = smul.u32 8, %s19
      %s238 = smul.u32 8, %s21
      %p239 = scmp.lt.s32.totalorder %s238, 7
      %s240 = scalar_select %p239, %s238, 7
      %p241 = scmp.lt.s32.totalorder %s20, 0
      %s242 = scalar_select %p241, %s20, 0
      %s243 = sadd.s32 %s242, %s240
      %s244 = smul.addr %s243, 4
      %s245 = scalar_lea.vmem %s1, %s244
      %s246 = smul.u32 8, %s21
      %p247 = scmp.lt.s32.totalorder %s20, 0
      %s248 = scalar_select %p247, %s20, 0
      %s249 = scalar_lea.vmem %s2, %s248
      %s250 = smul.u32 8, %s19
      %p251 = scmp.lt.s32.totalorder %s250, 15
      %s252 = scalar_select %p251, %s250, 15
      %p253 = scmp.lt.s32.totalorder %s20, 0
      %s254 = scalar_select %p253, %s20, 0
      %s255 = sadd.s32 %s254, %s252
      %s256 = smul.addr %s255, 4
      %s257 = scalar_lea.vmem %s3, %s256
      %s258 = smul.u32 8, %s19
      %p260 = scmp.eq.s32.totalorder %s21, 0
      // Predicated region
      $region33: #{center_back_forward.14} parent=31 // pred_check
        %p261 = pneg %p260
      $region34: #{center_back_forward.14} parent=31 // pred_check_branch
        %263 = sbr.rel (%p261) target = $region36
      $region35: #{center_back_forward.14} parent=31 // pred_region
        %v264 = vld [vmem:[%s249] sm:$0x1]
        %v266 = vlaneseq
        %v267 = vshrl.u32 %v266, 7
        %v268 = vsub.s32 0, %v267
        %v269 = vrot.slane %v264, %v268
        %vm271 = vcmask 130048
        %272 = vst.msk [vmem:[#allocation2] sm:$0xff] %vm271, %v269
        %273 = vst.msk [vmem:[#allocation2 + $0x8] sm:$0xff] %vm271, %v269
        %274 = vst.msk [vmem:[#allocation2 + $0x10] sm:$0xff] %vm271, %v269
        %275 = vst.msk [vmem:[#allocation2 + $0x18] sm:$0xff] %vm271, %v269
        %276 = vst.msk [vmem:[#allocation2 + $0x20] sm:$0xff] %vm271, %v269
        %277 = vst.msk [vmem:[#allocation2 + $0x28] sm:$0xff] %vm271, %v269
        %278 = vst.msk [vmem:[#allocation2 + $0x30] sm:$0xff] %vm271, %v269
        %279 = vst.msk [vmem:[#allocation2 + $0x38] sm:$0xff] %vm271, %v269
      $region36: #{center_back_forward.14} parent=31 // pred_fallthru
        _
      %v280 = vld [vmem:[#allocation2] sm:$0xff]
      %v281 = vld [vmem:[#allocation2 + $0x8] sm:$0xff]
      %v282 = vld [vmem:[#allocation2 + $0x10] sm:$0xff]
      %v283 = vld [vmem:[#allocation2 + $0x18] sm:$0xff]
      %v284 = vld [vmem:[#allocation2 + $0x20] sm:$0xff]
      %v285 = vld [vmem:[#allocation2 + $0x28] sm:$0xff]
      %v286 = vld [vmem:[#allocation2 + $0x30] sm:$0xff]
      %v287 = vld [vmem:[#allocation2 + $0x38] sm:$0xff]
      %v288 = vld [vmem:[%s236] sm:$0xf]
      %v289 = vld [vmem:[%s236 + $0x4] sm:$0xf]
      %v290 = vld [vmem:[%s236 + $0x8] sm:$0xf]
      %v291 = vld [vmem:[%s236 + $0xc] sm:$0xf]
      %v292 = vld [vmem:[%s236 + $0x10] sm:$0xf]
      %v293 = vld [vmem:[%s236 + $0x14] sm:$0xf]
      %v294 = vld [vmem:[%s236 + $0x18] sm:$0xf]
      %v295 = vld [vmem:[%s236 + $0x1c] sm:$0xf]
      %v296 = vld [vmem:[%s245] sm:$0xf]
      %v297 = vld [vmem:[%s245 + $0x4] sm:$0xf]
      %v298 = vld [vmem:[%s245 + $0x8] sm:$0xf]
      %v299 = vld [vmem:[%s245 + $0xc] sm:$0xf]
      %v300 = vld [vmem:[%s245 + $0x10] sm:$0xf]
      %v301 = vld [vmem:[%s245 + $0x14] sm:$0xf]
      %v302 = vld [vmem:[%s245 + $0x18] sm:$0xf]
      %v303 = vld [vmem:[%s245 + $0x1c] sm:$0xf]
      %v312 = vunpack.c.l.b16 %v288
      %v313 = vunpack.c.l.b16 %v289
      %v314 = vunpack.c.l.b16 %v290
      %v315 = vunpack.c.l.b16 %v291
      %v316 = vunpack.c.l.b16 %v292
      %v317 = vunpack.c.l.b16 %v293
      %v318 = vunpack.c.l.b16 %v294
      %v319 = vunpack.c.l.b16 %v295
      %v320 = vpack.c.b16 %v313, %v312
      %v321 = vpack.c.b16 %v315, %v314
      %v322 = vpack.c.b16 %v317, %v316
      %v323 = vpack.c.b16 %v319, %v318
      %v332 = vunpack.c.l.b16 %v296
      %v333 = vunpack.c.l.b16 %v297
      %v334 = vunpack.c.l.b16 %v298
      %v335 = vunpack.c.l.b16 %v299
      %v336 = vunpack.c.l.b16 %v300
      %v337 = vunpack.c.l.b16 %v301
      %v338 = vunpack.c.l.b16 %v302
      %v339 = vunpack.c.l.b16 %v303
      %v340 = vpack.c.b16 %v333, %v332
      %v341 = vpack.c.b16 %v335, %v334
      %v342 = vpack.c.b16 %v337, %v336
      %v343 = vpack.c.b16 %v339, %v338
      %vm348 = vcmask 523264
      %v350 = vsel %vm348, %v320, 0
      %v353 = vsel %vm348, %v321, 0
      %v356 = vsel %vm348, %v322, 0
      %v359 = vsel %vm348, %v323, 0
      %361 = vmatprep.subr.bf16.mxu0 0
      %362 = vmatpush1.bf16.msra.mxu0 0
      %363 = vmatprep.subr.bf16.mxu0 0
      %364 = vmatpush1.bf16.msra.mxu0 0
      %365 = vmatprep.subr.bf16.mxu0 0
      %366 = vmatpush1.bf16.msra.mxu0 0
      %367 = vmatprep.subr.bf16.mxu0 0
      %368 = vmatpush1.bf16.msra.mxu0 0
      %369 = vmatprep.subr.bf16.mxu0 0
      %370 = vmatpush1.bf16.msra.mxu0 %v343
      %371 = vmatprep.subr.bf16.mxu0 0
      %372 = vmatpush1.bf16.msra.mxu0 %v342
      %373 = vmatprep.subr.bf16.mxu0 0
      %374 = vmatpush1.bf16.msra.mxu0 %v341
      %375 = vmatprep.subr.bf16.mxu0 0
      %376 = vmatpush1.bf16.msra.mxu0 %v340
      %377 = vmatprep.subr.bf16.mxu0 0
      %378 = vmatpush2.bf16.msra.mxu0 0
      %379 = vmatprep.subr.bf16.mxu0 0
      %380 = vmatpush2.bf16.msra.mxu0 0
      %381 = vmatprep.subr.bf16.mxu0 0
      %382 = vmatpush2.bf16.msra.mxu0 0
      %383 = vmatprep.subr.bf16.mxu0 0
      %384 = vmatpush2.bf16.msra.mxu0 0
      %385 = vmatprep.subr.bf16.mxu0 0
      %386 = vmatpush2.bf16.msra.mxu0 0
      %387 = vmatprep.subr.bf16.mxu0 0
      %388 = vmatpush2.bf16.msra.mxu0 0
      %389 = vmatprep.subr.bf16.mxu0 0
      %390 = vmatpush2.bf16.msra.mxu0 0
      %391 = vmatprep.subr.bf16.mxu0 0
      %392 = vmatpush2.bf16.msra.mxu0 0
      %393 = vmatprep.mubr.bf16.mxu0 0
      %394 = vmatmul.mubr.bf16.gmra.mxu0 %v350
      %v395 = vpop.f32.mrf.mxu0
      %v396 = vadd.f32 0.0, %v395
      %v397 = vpop.f32.mrf.mxu0
      %v398 = vpop.f32.mrf.mxu0
      %v399 = vadd.f32 0.0, %v398
      %v400 = vpop.f32.mrf.mxu0
      %401 = vmatprep.mubr.bf16.mxu0 0
      %402 = vmatmul.mubr.bf16.gmra.mxu0 %v353
      %v403 = vpop.f32.mrf.mxu0
      %v404 = vadd.f32 0.0, %v403
      %v405 = vpop.f32.mrf.mxu0
      %v406 = vpop.f32.mrf.mxu0
      %v407 = vadd.f32 0.0, %v406
      %v408 = vpop.f32.mrf.mxu0
      %409 = vmatprep.mubr.bf16.mxu0 0
      %410 = vmatmul.mubr.bf16.gmra.mxu0 %v356
      %v411 = vpop.f32.mrf.mxu0
      %v412 = vadd.f32 0.0, %v411
      %v413 = vpop.f32.mrf.mxu0
      %v414 = vpop.f32.mrf.mxu0
      %v415 = vadd.f32 0.0, %v414
      %v416 = vpop.f32.mrf.mxu0
      %417 = vmatprep.mubr.bf16.mxu0 0
      %418 = vmatmul.mubr.bf16.gmra.mxu0 %v359
      %v419 = vpop.f32.mrf.mxu0
      %v420 = vadd.f32 0.0, %v419
      %v421 = vpop.f32.mrf.mxu0
      %v422 = vpop.f32.mrf.mxu0
      %v423 = vadd.f32 0.0, %v422
      %v424 = vpop.f32.mrf.mxu0
      %425 = vdwg.mxu0
      %v426 = vadd.f32 %v280, %v396
      %v427 = vadd.f32 %v281, %v399
      %v428 = vadd.f32 %v282, %v404
      %v429 = vadd.f32 %v283, %v407
      %v430 = vadd.f32 %v284, %v412
      %v431 = vadd.f32 %v285, %v415
      %v432 = vadd.f32 %v286, %v420
      %v433 = vadd.f32 %v287, %v423
      %vm434 = vcmask 130048
      %435 = vst.msk [vmem:[#allocation2] sm:$0xff] %vm434, %v426
      %436 = vst.msk [vmem:[#allocation2 + $0x8] sm:$0xff] %vm434, %v427
      %437 = vst.msk [vmem:[#allocation2 + $0x10] sm:$0xff] %vm434, %v428
      %438 = vst.msk [vmem:[#allocation2 + $0x18] sm:$0xff] %vm434, %v429
      %439 = vst.msk [vmem:[#allocation2 + $0x20] sm:$0xff] %vm434, %v430
      %440 = vst.msk [vmem:[#allocation2 + $0x28] sm:$0xff] %vm434, %v431
      %441 = vst.msk [vmem:[#allocation2 + $0x30] sm:$0xff] %vm434, %v432
      %442 = vst.msk [vmem:[#allocation2 + $0x38] sm:$0xff] %vm434, %v433
      // Predicated region
      $region37: #{center_back_forward.14} parent=31 // pred_check
        %p443 = pneg %p260
      $region38: #{center_back_forward.14} parent=31 // pred_check_branch
        %445 = sbr.rel (%p443) target = $region40
      $region39: #{center_back_forward.14} parent=31 // pred_region
        %v446 = vld [vmem:[#allocation2] sm:$0xff]
        %v447 = vld [vmem:[#allocation2 + $0x8] sm:$0xff]
        %v448 = vld [vmem:[#allocation2 + $0x10] sm:$0xff]
        %v449 = vld [vmem:[#allocation2 + $0x18] sm:$0xff]
        %v450 = vld [vmem:[#allocation2 + $0x20] sm:$0xff]
        %v451 = vld [vmem:[#allocation2 + $0x28] sm:$0xff]
        %v452 = vld [vmem:[#allocation2 + $0x30] sm:$0xff]
        %v453 = vld [vmem:[#allocation2 + $0x38] sm:$0xff]
        %v454 = vmax.f32 %v446, 0.0
        %v455 = vmax.f32 %v447, 0.0
        %v456 = vmax.f32 %v448, 0.0
        %v457 = vmax.f32 %v449, 0.0
        %v458 = vmax.f32 %v450, 0.0
        %v459 = vmax.f32 %v451, 0.0
        %v460 = vmax.f32 %v452, 0.0
        %v461 = vmax.f32 %v453, 0.0
        %v462 = vpack.c.bf16 %v455, %v454
        %v463 = vpack.c.bf16 %v457, %v456
        %v464 = vpack.c.bf16 %v459, %v458
        %v465 = vpack.c.bf16 %v461, %v460
        %v470 = vunpack.c.l.b16 %v462
        %v471 = vunpack.c.h.b16 %v462
        %v472 = vunpack.c.l.b16 %v463
        %v473 = vunpack.c.h.b16 %v463
        %v474 = vunpack.c.l.b16 %v464
        %v475 = vunpack.c.h.b16 %v464
        %v476 = vunpack.c.l.b16 %v465
        %v477 = vunpack.c.h.b16 %v465
        %v478 = vpack.c.b16 %v470, %v470
        %v479 = vpack.c.b16 %v471, %v471
        %v480 = vpack.c.b16 %v472, %v472
        %v481 = vpack.c.b16 %v473, %v473
        %v482 = vpack.c.b16 %v474, %v474
        %v483 = vpack.c.b16 %v475, %v475
        %v484 = vpack.c.b16 %v476, %v476
        %v485 = vpack.c.b16 %v477, %v477
        %vm494 = vcmask 125952
        %495 = vst.msk [vmem:[%s257] sm:$0xf] %vm494, %v478
        %496 = vst.msk [vmem:[%s257 + $0x4] sm:$0xf] %vm494, %v479
        %497 = vst.msk [vmem:[%s257 + $0x8] sm:$0xf] %vm494, %v480
        %498 = vst.msk [vmem:[%s257 + $0xc] sm:$0xf] %vm494, %v481
        %499 = vst.msk [vmem:[%s257 + $0x10] sm:$0xf] %vm494, %v482
        %500 = vst.msk [vmem:[%s257 + $0x14] sm:$0xf] %vm494, %v483
        %501 = vst.msk [vmem:[%s257 + $0x18] sm:$0xf] %vm494, %v484
        %502 = vst.msk [vmem:[%s257 + $0x1c] sm:$0xf] %vm494, %v485
      $region40: #{center_back_forward.14} parent=31 // pred_fallthru
        _
      %s503 = smul.u32 8, %s19
      %p504 = scmp.lt.s32.totalorder %s503, 15
      %s505 = scalar_select %p504, %s503, 15
      %p506 = scmp.lt.s32.totalorder %s20, 0
      %s507 = scalar_select %p506, %s20, 0
      %s508 = sadd.s32 %s507, %s505
      %s509 = smul.addr %s508, 4
      %s510 = scalar_lea.vmem %s3, %s509
      // Predicated region
      $region41: #{center_back_forward.14} parent=31 // pred_check
        %p511 = pneg %p135
      $region42: #{center_back_forward.14} parent=31 // pred_check_branch
        %513 = sbr.rel (%p511) target = $region44
      $region43: #{center_back_forward.14} parent=31 // pred_region
        %s514 = smul.u32 8, %s19
      $region44: #{center_back_forward.14} parent=31 // pred_fallthru
        _
    $region32: #{center_back_forward.14} parent=5 // pred_fallthru
      _
    %p515 = scmp.le.s32.totalorder 2, %s9
    // Predicated region
    $region45: #{center_back_forward.14} parent=5 // pred_check
      %p516 = pneg %p515
    $region46: #{center_back_forward.14} parent=5 // pred_check_branch
      %518 = sbr.rel (%p516) target = $region48
    $region47: #{center_back_forward.14} parent=5 // pred_region
      %s519 = ssub.s32 %s9, 2
      // Predicated region
      $region49: #{center_back_forward.14} parent=47 // pred_check
        %p520 = pneg %p141
      $region50: #{center_back_forward.14} parent=47 // pred_check_branch
        %522 = sbr.rel (%p520) target = $region52
      $region51: #{center_back_forward.14} parent=47 // pred_region
        %s523 = smul.u32 8, %s22
        %p524 = scmp.lt.s32.totalorder %s523, 15
        %s525 = scalar_select %p524, %s523, 15
        %p526 = scmp.lt.s32.totalorder %s23, 0
        %s527 = scalar_select %p526, %s23, 0
        %s528 = sadd.s32 %s527, %s525
        %s529 = smul.addr %s528, 4
        %s530 = scalar_lea.vmem %s3, %s529
      $region52: #{center_back_forward.14} parent=47 // pred_fallthru
        _
    $region48: #{center_back_forward.14} parent=5 // pred_fallthru
      _
  $region6: #{center_back_forward.14} parent=0 // loop_footer
    %s13 = sadd.s32 1, %s9
  $region7: #{center_back_forward.14} parent=0 // loop_footer_branch
    %8 = sbr.rel target = $region3
  $region8: #{center_back_forward.14} parent=0 // loop_exit
    _

// kernel: center_back_forward.15
$region0: #{center_back_forward.15}
  #allocation0 [shape = 'u32[]', space=smem, size = 0x4, offset = 0x4, fixed_abs, tag = 'smem constant byte address 0x4 - core index']
  #allocation1 [shape = 'u32[144,128]{1,0:T(1,128)}', space=vmem, size = 0x12000, scoped, tag = 'internal scratch']
  #allocation2 [shape = 'f32[80,16]{1,0:T(8,128)}', space=vmem, size = 0xa000, scoped, tag = 'scratch operand']
  %s0 = inlined_call_operand.vmem [shape: bf16[2,110,16], index: 0, kind: input, shape index: {}]
  %s1 = inlined_call_operand.vmem [shape: bf16[144,16], index: 1, kind: input, shape index: {}]
  %s2 = inlined_call_operand.vmem [shape: f32[1,16], index: 2, kind: input, shape index: {}]
  %s3 = inlined_call_operand.vmem [shape: bf16[2,80,16], index: 3, kind: output, shape index: {}]
  %s4 = sld [smem:[#allocation0]]
  $region45: #{center_back_forward.15} parent=0
    _
  %s6 = ssub.s32 1, %s4
  %s7 = scalar_select 0, %s6, %s4
  loop: start=0, step=1, limit=4
  $region2: #{center_back_forward.15} parent=0 // loop_pre_header
    _
  $region3: #{center_back_forward.15} parent=0 // loop_header
    %s9 = sphi 0, %s13
    %p10 = scmp.ge.s32.totalorder %s9, 4
    %s19 = sphi 0, %s21
    %s22 = sphi 0, %s19
    %s23 = sphi 0, %s22
    %s39 = sphi 0, %s23
    %s43 = sphi 0, %s43
    %s45 = sphi 0, %s43
    %s46 = sphi 0, %s45
    %s60 = sphi 0, %s46
    %s64 = sphi 0, %s64
    %s66 = sphi 0, %s64
    %s67 = sphi 0, %s66
    %s81 = sphi 0, %s67
    %s87 = sphi 0, %s89
    %s90 = sphi 0, %s87
    %s91 = sphi 0, %s90
    %s107 = sphi 0, %s91
  $region4: #{center_back_forward.15} parent=0 // loop_header_branch
    %12 = sbr.rel (%p10) target = $region8
  $region5: #{center_back_forward.15} parent=0 // loop_body
    %s14 = ssub.s32 %s9, 1
    %s15 = ssub.s32 %s9, 2
    %s16 = sadd.s32 %s9, 1
    %s17 = ssub.s32 %s9, %s16
    %p18 = scmp.eq.s32.totalorder %s17, 0
    %s20 = sadd.s32 %s19, 1
    %s21 = scalar_select %p18, %s19, %s20
    %p24 = pneg %p18
    %p25 = scmp.eq.s32.totalorder %s9, 1
    %p26 = por %p24, %p25
    %p27 = scmp.ne.s32.totalorder %s19, %s22
    %p28 = scmp.eq.s32.totalorder %s9, 0
    %p29 = por %p27, %p28
    %p30 = scmp.ne.s32.totalorder %s19, %s22
    %p31 = scmp.eq.s32.totalorder %s14, 1
    %p32 = por %p30, %p31
    %p33 = scmp.ne.s32.totalorder %s22, %s23
    %p34 = scmp.eq.s32.totalorder %s14, 0
    %p35 = por %p33, %p34
    %p36 = scmp.ne.s32.totalorder %s22, %s23
    %p37 = scmp.eq.s32.totalorder %s15, 1
    %p38 = por %p36, %p37
    %p40 = scmp.ne.s32.totalorder %s23, %s39
    %p41 = scmp.eq.s32.totalorder %s15, 0
    %p42 = por %p40, %p41
    %s44 = sadd.s32 %s43, 1
    %p47 = scmp.eq.s32.totalorder %s9, 1
    %p48 = scmp.ne.s32.totalorder %s43, %s45
    %p49 = scmp.eq.s32.totalorder %s9, 0
    %p50 = por %p48, %p49
    %p51 = scmp.ne.s32.totalorder %s43, %s45
    %p52 = scmp.eq.s32.totalorder %s14, 1
    %p53 = por %p51, %p52
    %p54 = scmp.ne.s32.totalorder %s45, %s46
    %p55 = scmp.eq.s32.totalorder %s14, 0
    %p56 = por %p54, %p55
    %p57 = scmp.ne.s32.totalorder %s45, %s46
    %p58 = scmp.eq.s32.totalorder %s15, 1
    %p59 = por %p57, %p58
    %p61 = scmp.ne.s32.totalorder %s46, %s60
    %p62 = scmp.eq.s32.totalorder %s15, 0
    %p63 = por %p61, %p62
    %s65 = sadd.s32 %s64, 1
    %p68 = scmp.eq.s32.totalorder %s9, 1
    %p69 = scmp.ne.s32.totalorder %s64, %s66
    %p70 = scmp.eq.s32.totalorder %s9, 0
    %p71 = por %p69, %p70
    %p72 = scmp.ne.s32.totalorder %s64, %s66
    %p73 = scmp.eq.s32.totalorder %s14, 1
    %p74 = por %p72, %p73
    %p75 = scmp.ne.s32.totalorder %s66, %s67
    %p76 = scmp.eq.s32.totalorder %s14, 0
    %p77 = por %p75, %p76
    %p78 = scmp.ne.s32.totalorder %s66, %s67
    %p79 = scmp.eq.s32.totalorder %s15, 1
    %p80 = por %p78, %p79
    %p82 = scmp.ne.s32.totalorder %s67, %s81
    %p83 = scmp.eq.s32.totalorder %s15, 0
    %p84 = por %p82, %p83
    %s85 = ssub.s32 %s9, %s16
    %p86 = scmp.eq.s32.totalorder %s85, 0
    %s88 = sadd.s32 %s87, 1
    %s89 = scalar_select %p86, %s87, %s88
    %p92 = pneg %p86
    %p93 = scmp.eq.s32.totalorder %s9, 1
    %p94 = por %p92, %p93
    %p95 = scmp.ne.s32.totalorder %s87, %s90
    %p96 = scmp.eq.s32.totalorder %s9, 0
    %p97 = por %p95, %p96
    %p98 = scmp.ne.s32.totalorder %s87, %s90
    %p99 = scmp.eq.s32.totalorder %s14, 1
    %p100 = por %p98, %p99
    %p101 = scmp.ne.s32.totalorder %s90, %s91
    %p102 = scmp.eq.s32.totalorder %s14, 0
    %p103 = por %p101, %p102
    %p104 = scmp.ne.s32.totalorder %s90, %s91
    %p105 = scmp.eq.s32.totalorder %s15, 1
    %p106 = por %p104, %p105
    %p108 = scmp.ne.s32.totalorder %s91, %s107
    %p109 = scmp.eq.s32.totalorder %s15, 0
    %p110 = por %p108, %p109
    %p111 = scmp.le.s32.totalorder 1, %s9
    %p112 = scmp.lt.s32.totalorder %s9, 3
    %p113 = pnand %p111, %p112
    %p114 = pneg %p113
    // Predicated region
    $region9: #{center_back_forward.15} parent=5 // pred_check
      _
    $region10: #{center_back_forward.15} parent=5 // pred_check_branch
      %116 = sbr.rel (%p113) target = $region12
    $region11: #{center_back_forward.15} parent=5 // pred_region
      %s117 = ssub.s32 %s9, 1
      // Predicated region
      $region13: #{center_back_forward.15} parent=11 // pred_check
        %p118 = pneg %p56
      $region14: #{center_back_forward.15} parent=11 // pred_check_branch
        %120 = sbr.rel (%p118) target = $region16
      $region15: #{center_back_forward.15} parent=11 // pred_region
        _
      $region16: #{center_back_forward.15} parent=11 // pred_fallthru
        _
      // Predicated region
      $region17: #{center_back_forward.15} parent=11 // pred_check
        %p121 = pneg %p77
      $region18: #{center_back_forward.15} parent=11 // pred_check_branch
        %123 = sbr.rel (%p121) target = $region20
      $region19: #{center_back_forward.15} parent=11 // pred_region
        _
      $region20: #{center_back_forward.15} parent=11 // pred_fallthru
        _
    $region12: #{center_back_forward.15} parent=5 // pred_fallthru
      _
    %p124 = scmp.lt.s32.totalorder %s9, 2
    // Predicated region
    $region21: #{center_back_forward.15} parent=5 // pred_check
      %p125 = pneg %p124
    $region22: #{center_back_forward.15} parent=5 // pred_check_branch
      %127 = sbr.rel (%p125) target = $region24
    $region23: #{center_back_forward.15} parent=5 // pred_region
      // Predicated region
      $region25: #{center_back_forward.15} parent=23 // pred_check
        %p128 = pneg %p29
      $region26: #{center_back_forward.15} parent=23 // pred_check_branch
        %130 = sbr.rel (%p128) target = $region28
      $region27: #{center_back_forward.15} parent=23 // pred_region
        %p131 = scmp.lt.s32.totalorder %s9, 1
        %s132 = scalar_select %p131, %s9, 1
        %s133 = smul.addr %s132, 14
        %s134 = smul.addr %s133, 4
        %s135 = scalar_lea.vmem %s0, %s134
      $region28: #{center_back_forward.15} parent=23 // pred_fallthru
        _
    $region24: #{center_back_forward.15} parent=5 // pred_fallthru
      _
    %p136 = scmp.le.s32.totalorder 1, %s9
    %p137 = scmp.lt.s32.totalorder %s9, 3
    %p138 = pnand %p136, %p137
    %p139 = pneg %p138
    // Predicated region
    $region29: #{center_back_forward.15} parent=5 // pred_check
      _
    $region30: #{center_back_forward.15} parent=5 // pred_check_branch
      %141 = sbr.rel (%p138) target = $region32
    $region31: #{center_back_forward.15} parent=5 // pred_region
      %s142 = ssub.s32 %s9, 1
      %p143 = scmp.lt.s32.totalorder %s14, 1
      %s144 = scalar_select %p143, %s14, 1
      %s145 = smul.addr %s144, 14
      %s146 = smul.addr %s145, 4
      %s147 = scalar_lea.vmem %s0, %s146
      %p148 = pneg %p35
      %p149 = pneg %p32
      %p150 = pneg %p56
      %p151 = pneg %p53
      %p152 = pneg %p77
      %p153 = pneg %p74
      %p154 = pneg %p103
      %p155 = pneg %p100
      %p156 = scmp.lt.s32.totalorder %s14, 1
      %s157 = scalar_select %p156, %s14, 1
      %s158 = smul.addr %s157, 10
      %s159 = smul.addr %s158, 4
      %s160 = scalar_lea.vmem %s3, %s159
      %p161 = scmp.lt.s32.totalorder %s14, 1
      %s162 = scalar_select %p161, %s14, 1
      %s163 = smul.addr %s162, 14
      %s164 = smul.addr %s163, 4
      %s165 = scalar_lea.vmem %s0, %s164
      %p166 = scmp.lt.s32.totalorder %s14, 1
      %s167 = scalar_select %p166, %s14, 1
      %s168 = smul.addr %s167, 10
      %s169 = smul.addr %s168, 4
      %s170 = scalar_lea.vmem %s3, %s169
      %v172 = vld [vmem:[%s2] sm:$0x1]
      %v174 = vlaneseq
      %v175 = vshrl.u32 %v174, 7
      %v176 = vsub.s32 0, %v175
      %v177 = vrot.slane %v172, %v176
      %vm179 = vcmask 130048
      %180 = vst.msk [vmem:[#allocation2] sm:$0xff] %vm179, %v177
      %181 = vst.msk [vmem:[#allocation2 + $0x8] sm:$0xff] %vm179, %v177
      %182 = vst.msk [vmem:[#allocation2 + $0x10] sm:$0xff] %vm179, %v177
      %183 = vst.msk [vmem:[#allocation2 + $0x18] sm:$0xff] %vm179, %v177
      %184 = vst.msk [vmem:[#allocation2 + $0x20] sm:$0xff] %vm179, %v177
      %185 = vst.msk [vmem:[#allocation2 + $0x28] sm:$0xff] %vm179, %v177
      %186 = vst.msk [vmem:[#allocation2 + $0x30] sm:$0xff] %vm179, %v177
      %187 = vst.msk [vmem:[#allocation2 + $0x38] sm:$0xff] %vm179, %v177
      %188 = vst.msk [vmem:[#allocation2 + $0x40] sm:$0xff] %vm179, %v177
      %189 = vst.msk [vmem:[#allocation2 + $0x48] sm:$0xff] %vm179, %v177
      %v190 = vld [vmem:[#allocation2] sm:$0xff]
      %v191 = vld [vmem:[#allocation2 + $0x8] sm:$0xff]
      %v192 = vld [vmem:[#allocation2 + $0x10] sm:$0xff]
      %v193 = vld [vmem:[#allocation2 + $0x18] sm:$0xff]
      %v194 = vld [vmem:[#allocation2 + $0x20] sm:$0xff]
      %v195 = vld [vmem:[#allocation2 + $0x28] sm:$0xff]
      %v196 = vld [vmem:[#allocation2 + $0x30] sm:$0xff]
      %v197 = vld [vmem:[#allocation2 + $0x38] sm:$0xff]
      %v198 = vld [vmem:[#allocation2 + $0x40] sm:$0xff]
      %v199 = vld [vmem:[#allocation2 + $0x48] sm:$0xff]
      %v200 = vld [vmem:[%s165] sm:$0xf]
      %v201 = vld [vmem:[%s165 + $0x4] sm:$0xf]
      %v202 = vld [vmem:[%s165 + $0x8] sm:$0xf]
      %v203 = vld [vmem:[%s165 + $0xc] sm:$0xf]
      %v204 = vld [vmem:[%s165 + $0x10] sm:$0xf]
      %v205 = vld [vmem:[%s165 + $0x14] sm:$0xf]
      %v206 = vld [vmem:[%s165 + $0x18] sm:$0xf]
      %v207 = vld [vmem:[%s165 + $0x1c] sm:$0xf]
      %v208 = vld [vmem:[%s165 + $0x20] sm:$0xf]
      %v209 = vld [vmem:[%s165 + $0x24] sm:$0xf]
      %v210 = vld [vmem:[%s1] sm:$0xf]
      %v211 = vld [vmem:[%s1 + $0x4] sm:$0xf]
      %v222 = vunpack.c.l.b16 %v200
      %v223 = vunpack.c.l.b16 %v201
      %v224 = vunpack.c.l.b16 %v202
      %v225 = vunpack.c.l.b16 %v203
      %v226 = vunpack.c.l.b16 %v204
      %v227 = vunpack.c.l.b16 %v205
      %v228 = vunpack.c.l.b16 %v206
      %v229 = vunpack.c.l.b16 %v207
      %v230 = vunpack.c.l.b16 %v208
      %v231 = vunpack.c.l.b16 %v209
      %v232 = vpack.c.b16 %v223, %v222
      %v233 = vpack.c.b16 %v225, %v224
      %v234 = vpack.c.b16 %v227, %v226
      %v235 = vpack.c.b16 %v229, %v228
      %v236 = vpack.c.b16 %v231, %v230
      %v239 = vunpack.c.l.b16 %v210
      %v240 = vunpack.c.l.b16 %v211
      %v241 = vpack.c.b16 %v240, %v239
      %v244 = vsel %vm179, %v232, 0
      %v247 = vsel %vm179, %v233, 0
      %v250 = vsel %vm179, %v234, 0
      %v253 = vsel %vm179, %v235, 0
      %v256 = vsel %vm179, %v236, 0
      %258 = vmatprep.subr.bf16.mxu0 0
      %259 = vmatpush1.bf16.msra.mxu0 0
      %260 = vmatprep.subr.bf16.mxu0 0
      %261 = vmatpush1.bf16.msra.mxu0 0
      %262 = vmatprep.subr.bf16.mxu0 0
      %263 = vmatpush1.bf16.msra.mxu0 0
      %264 = vmatprep.subr.bf16.mxu0 0
      %265 = vmatpush1.bf16.msra.mxu0 0
      %266 = vmatprep.subr.bf16.mxu0 0
      %267 = vmatpush1.bf16.msra.mxu0 0
      %268 = vmatprep.subr.bf16.mxu0 0
      %269 = vmatpush1.bf16.msra.mxu0 0
      %270 = vmatprep.subr.bf16.mxu0 0
      %271 = vmatpush1.bf16.msra.mxu0 0
      %272 = vmatprep.subr.bf16.mxu0 0
      %273 = vmatpush1.bf16.msra.mxu0 %v241
      %274 = vmatprep.subr.bf16.mxu0 0
      %275 = vmatpush2.bf16.msra.mxu0 0
      %276 = vmatprep.subr.bf16.mxu0 0
      %277 = vmatpush2.bf16.msra.mxu0 0
      %278 = vmatprep.subr.bf16.mxu0 0
      %279 = vmatpush2.bf16.msra.mxu0 0
      %280 = vmatprep.subr.bf16.mxu0 0
      %281 = vmatpush2.bf16.msra.mxu0 0
      %282 = vmatprep.subr.bf16.mxu0 0
      %283 = vmatpush2.bf16.msra.mxu0 0
      %284 = vmatprep.subr.bf16.mxu0 0
      %285 = vmatpush2.bf16.msra.mxu0 0
      %286 = vmatprep.subr.bf16.mxu0 0
      %287 = vmatpush2.bf16.msra.mxu0 0
      %288 = vmatprep.subr.bf16.mxu0 0
      %289 = vmatpush2.bf16.msra.mxu0 0
      %290 = vmatprep.mubr.bf16.mxu0 0
      %291 = vmatmul.mubr.bf16.gmra.mxu0 %v244
      %v292 = vpop.f32.mrf.mxu0
      %v293 = vadd.f32 0.0, %v292
      %v294 = vpop.f32.mrf.mxu0
      %v295 = vpop.f32.mrf.mxu0
      %v296 = vadd.f32 0.0, %v295
      %v297 = vpop.f32.mrf.mxu0
      %298 = vmatprep.mubr.bf16.mxu0 0
      %299 = vmatmul.mubr.bf16.gmra.mxu0 %v247
      %v300 = vpop.f32.mrf.mxu0
      %v301 = vadd.f32 0.0, %v300
      %v302 = vpop.f32.mrf.mxu0
      %v303 = vpop.f32.mrf.mxu0
      %v304 = vadd.f32 0.0, %v303
      %v305 = vpop.f32.mrf.mxu0
      %306 = vmatprep.mubr.bf16.mxu0 0
      %307 = vmatmul.mubr.bf16.gmra.mxu0 %v250
      %v308 = vpop.f32.mrf.mxu0
      %v309 = vadd.f32 0.0, %v308
      %v310 = vpop.f32.mrf.mxu0
      %v311 = vpop.f32.mrf.mxu0
      %v312 = vadd.f32 0.0, %v311
      %v313 = vpop.f32.mrf.mxu0
      %314 = vmatprep.mubr.bf16.mxu0 0
      %315 = vmatmul.mubr.bf16.gmra.mxu0 %v253
      %v316 = vpop.f32.mrf.mxu0
      %v317 = vadd.f32 0.0, %v316
      %v318 = vpop.f32.mrf.mxu0
      %v319 = vpop.f32.mrf.mxu0
      %v320 = vadd.f32 0.0, %v319
      %v321 = vpop.f32.mrf.mxu0
      %322 = vmatprep.mubr.bf16.mxu0 0
      %323 = vmatmul.mubr.bf16.gmra.mxu0 %v256
      %v324 = vpop.f32.mrf.mxu0
      %v325 = vadd.f32 0.0, %v324
      %v326 = vpop.f32.mrf.mxu0
      %v327 = vpop.f32.mrf.mxu0
      %v328 = vadd.f32 0.0, %v327
      %v329 = vpop.f32.mrf.mxu0
      %330 = vdwg.mxu0
      %v331 = vadd.f32 %v190, %v293
      %v332 = vadd.f32 %v191, %v296
      %v333 = vadd.f32 %v192, %v301
      %v334 = vadd.f32 %v193, %v304
      %v335 = vadd.f32 %v194, %v309
      %v336 = vadd.f32 %v195, %v312
      %v337 = vadd.f32 %v196, %v317
      %v338 = vadd.f32 %v197, %v320
      %v339 = vadd.f32 %v198, %v325
      %v340 = vadd.f32 %v199, %v328
      %341 = vst.msk [vmem:[#allocation2] sm:$0xff] %vm179, %v331
      %342 = vst.msk [vmem:[#allocation2 + $0x8] sm:$0xff] %vm179, %v332
      %343 = vst.msk [vmem:[#allocation2 + $0x10] sm:$0xff] %vm179, %v333
      %344 = vst.msk [vmem:[#allocation2 + $0x18] sm:$0xff] %vm179, %v334
      %345 = vst.msk [vmem:[#allocation2 + $0x20] sm:$0xff] %vm179, %v335
      %346 = vst.msk [vmem:[#allocation2 + $0x28] sm:$0xff] %vm179, %v336
      %347 = vst.msk [vmem:[#allocation2 + $0x30] sm:$0xff] %vm179, %v337
      %348 = vst.msk [vmem:[#allocation2 + $0x38] sm:$0xff] %vm179, %v338
      %349 = vst.msk [vmem:[#allocation2 + $0x40] sm:$0xff] %vm179, %v339
      %350 = vst.msk [vmem:[#allocation2 + $0x48] sm:$0xff] %vm179, %v340
      %v351 = vld [vmem:[#allocation2] sm:$0xff]
      %v352 = vld [vmem:[#allocation2 + $0x8] sm:$0xff]
      %v353 = vld [vmem:[#allocation2 + $0x10] sm:$0xff]
      %v354 = vld [vmem:[#allocation2 + $0x18] sm:$0xff]
      %v355 = vld [vmem:[#allocation2 + $0x20] sm:$0xff]
      %v356 = vld [vmem:[#allocation2 + $0x28] sm:$0xff]
      %v357 = vld [vmem:[#allocation2 + $0x30] sm:$0xff]
      %v358 = vld [vmem:[#allocation2 + $0x38] sm:$0xff]
      %v359 = vld [vmem:[#allocation2 + $0x40] sm:$0xff]
      %v360 = vld [vmem:[#allocation2 + $0x48] sm:$0xff]
      %v361 = vld [vmem:[%s165] sm:$0xf]
      %v362 = vld [vmem:[%s165 + $0x4] sm:$0xf]
      %v363 = vld [vmem:[%s165 + $0x8] sm:$0xf]
      %v364 = vld [vmem:[%s165 + $0xc] sm:$0xf]
      %v365 = vld [vmem:[%s165 + $0x10] sm:$0xf]
      %v366 = vld [vmem:[%s165 + $0x14] sm:$0xf]
      %v367 = vld [vmem:[%s165 + $0x18] sm:$0xf]
      %v368 = vld [vmem:[%s165 + $0x1c] sm:$0xf]
      %v369 = vld [vmem:[%s165 + $0x20] sm:$0xf]
      %v370 = vld [vmem:[%s165 + $0x24] sm:$0xf]
      %v371 = vld [vmem:[%s165 + $0x28] sm:$0x1]
      %v372 = vld [vmem:[%s1 + $0x8] sm:$0xf]
      %v373 = vld [vmem:[%s1 + $0xc] sm:$0xf]
      %v385 = vunpack.c.l.b16 %v361
      %v386 = vunpack.c.l.b16 %v362
      %v387 = vunpack.c.l.b16 %v363
      %v388 = vunpack.c.l.b16 %v364
      %v389 = vunpack.c.l.b16 %v365
      %v390 = vunpack.c.l.b16 %v366
      %v391 = vunpack.c.l.b16 %v367
      %v392 = vunpack.c.l.b16 %v368
      %v393 = vunpack.c.l.b16 %v369
      %v394 = vunpack.c.l.b16 %v370
      %v395 = vunpack.c.l.b16 %v371
      %v396 = vpack.c.b16 %v386, %v385
      %v397 = vpack.c.b16 %v388, %v387
      %v398 = vpack.c.b16 %v390, %v389
      %v399 = vpack.c.b16 %v392, %v391
      %v400 = vpack.c.b16 %v394, %v393
      %v401 = vpack.c.b16 %v395, %v395
      %vm402 = vsmask.f32 7424
      %v404 = vshrl.u32 %v396, 16
      %v406 = vshll.u32 %v396, 16
      %v408 = vrot.slane %v406, 1
      %v409 = vor.u32 %v404, %v408
      %v411 = vshll.u32 %v397, 16
      %v413 = vrot.slane %v411, 1
      %v414 = vsel %vm402, %v409, %v413
      %v415 = vshrl.u32 %v397, 16
      %v417 = vor.u32 %v415, %v413
      %v419 = vshll.u32 %v398, 16
      %v421 = vrot.slane %v419, 1
      %v422 = vsel %vm402, %v417, %v421
      %v423 = vshrl.u32 %v398, 16
      %v425 = vor.u32 %v423, %v421
      %v427 = vshll.u32 %v399, 16
      %v429 = vrot.slane %v427, 1
      %v430 = vsel %vm402, %v425, %v429
      %v431 = vshrl.u32 %v399, 16
      %v433 = vor.u32 %v431, %v429
      %v435 = vshll.u32 %v400, 16
      %v437 = vrot.slane %v435, 1
      %v438 = vsel %vm402, %v433, %v437
      %v439 = vshrl.u32 %v400, 16
      %v441 = vor.u32 %v439, %v437
      %v443 = vshll.u32 %v401, 16
      %v445 = vrot.slane %v443, 1
      %v446 = vsel %vm402, %v441, %v445
      %v449 = vunpack.c.l.b16 %v372
      %v450 = vunpack.c.l.b16 %v373
      %v451 = vpack.c.b16 %v450, %v449
      %v454 = vsel %vm179, %v414, 0
      %v457 = vsel %vm179, %v422, 0
      %v460 = vsel %vm179, %v430, 0
      %v463 = vsel %vm179, %v438, 0
      %v466 = vsel %vm179, %v446, 0
      %468 = vmatprep.subr.bf16.mxu0 0
      %469 = vmatpush1.bf16.msra.mxu0 0
      %470 = vmatprep.subr.bf16.mxu0 0
      %471 = vmatpush1.bf16.msra.mxu0 0
      %472 = vmatprep.subr.bf16.mxu0 0
      %473 = vmatpush1.bf16.msra.mxu0 0
      %474 = vmatprep.subr.bf16.mxu0 0
      %475 = vmatpush1.bf16.msra.mxu0 0
      %476 = vmatprep.subr.bf16.mxu0 0
      %477 = vmatpush1.bf16.msra.mxu0 0
      %478 = vmatprep.subr.bf16.mxu0 0
      %479 = vmatpush1.bf16.msra.mxu0 0
      %480 = vmatprep.subr.bf16.mxu0 0
      %481 = vmatpush1.bf16.msra.mxu0 0
      %482 = vmatprep.subr.bf16.mxu0 0
      %483 = vmatpush1.bf16.msra.mxu0 %v451
      %484 = vmatprep.subr.bf16.mxu0 0
      %485 = vmatpush2.bf16.msra.mxu0 0
      %486 = vmatprep.subr.bf16.mxu0 0
      %487 = vmatpush2.bf16.msra.mxu0 0
      %488 = vmatprep.subr.bf16.mxu0 0
      %489 = vmatpush2.bf16.msra.mxu0 0
      %490 = vmatprep.subr.bf16.mxu0 0
      %491 = vmatpush2.bf16.msra.mxu0 0
      %492 = vmatprep.subr.bf16.mxu0 0
      %493 = vmatpush2.bf16.msra.mxu0 0
      %494 = vmatprep.subr.bf16.mxu0 0
      %495 = vmatpush2.bf16.msra.mxu0 0
      %496 = vmatprep.subr.bf16.mxu0 0
      %497 = vmatpush2.bf16.msra.mxu0 0
      %498 = vmatprep.subr.bf16.mxu0 0
      %499 = vmatpush2.bf16.msra.mxu0 0
      %500 = vmatprep.mubr.bf16.mxu0 0
      %501 = vmatmul.mubr.bf16.gmra.mxu0 %v454
      %v502 = vpop.f32.mrf.mxu0
      %v503 = vadd.f32 0.0, %v502
      %v504 = vpop.f32.mrf.mxu0
      %v505 = vpop.f32.mrf.mxu0
      %v506 = vadd.f32 0.0, %v505
      %v507 = vpop.f32.mrf.mxu0
      %508 = vmatprep.mubr.bf16.mxu0 0
      %509 = vmatmul.mubr.bf16.gmra.mxu0 %v457
      %v510 = vpop.f32.mrf.mxu0
      %v511 = vadd.f32 0.0, %v510
      %v512 = vpop.f32.mrf.mxu0
      %v513 = vpop.f32.mrf.mxu0
      %v514 = vadd.f32 0.0, %v513
      %v515 = vpop.f32.mrf.mxu0
      %516 = vmatprep.mubr.bf16.mxu0 0
      %517 = vmatmul.mubr.bf16.gmra.mxu0 %v460
      %v518 = vpop.f32.mrf.mxu0
      %v519 = vadd.f32 0.0, %v518
      %v520 = vpop.f32.mrf.mxu0
      %v521 = vpop.f32.mrf.mxu0
      %v522 = vadd.f32 0.0, %v521
      %v523 = vpop.f32.mrf.mxu0
      %524 = vmatprep.mubr.bf16.mxu0 0
      %525 = vmatmul.mubr.bf16.gmra.mxu0 %v463
      %v526 = vpop.f32.mrf.mxu0
      %v527 = vadd.f32 0.0, %v526
      %v528 = vpop.f32.mrf.mxu0
      %v529 = vpop.f32.mrf.mxu0
      %v530 = vadd.f32 0.0, %v529
      %v531 = vpop.f32.mrf.mxu0
      %532 = vmatprep.mubr.bf16.mxu0 0
      %533 = vmatmul.mubr.bf16.gmra.mxu0 %v466
      %v534 = vpop.f32.mrf.mxu0
      %v535 = vadd.f32 0.0, %v534
      %v536 = vpop.f32.mrf.mxu0
      %v537 = vpop.f32.mrf.mxu0
      %v538 = vadd.f32 0.0, %v537
      %v539 = vpop.f32.mrf.mxu0
      %540 = vdwg.mxu0
      %v541 = vadd.f32 %v351, %v503
      %v542 = vadd.f32 %v352, %v506
      %v543 = vadd.f32 %v353, %v511
      %v544 = vadd.f32 %v354, %v514
      %v545 = vadd.f32 %v355, %v519
      %v546 = vadd.f32 %v356, %v522
      %v547 = vadd.f32 %v357, %v527
      %v548 = vadd.f32 %v358, %v530
      %v549 = vadd.f32 %v359, %v535
      %v550 = vadd.f32 %v360, %v538
      %551 = vst.msk [vmem:[#allocation2] sm:$0xff] %vm179, %v541
      %552 = vst.msk [vmem:[#allocation2 + $0x8] sm:$0xff] %vm179, %v542
      %553 = vst.msk [vmem:[#allocation2 + $0x10] sm:$0xff] %vm179, %v543
      %554 = vst.msk [vmem:[#allocation2 + $0x18] sm:$0xff] %vm179, %v544
      %555 = vst.msk [vmem:[#allocation2 + $0x20] sm:$0xff] %vm179, %v545
      %556 = vst.msk [vmem:[#allocation2 + $0x28] sm:$0xff] %vm179, %v546
      %557 = vst.msk [vmem:[#allocation2 + $0x30] sm:$0xff] %vm179, %v547
      %558 = vst.msk [vmem:[#allocation2 + $0x38] sm:$0xff] %vm179, %v548
      %559 = vst.msk [vmem:[#allocation2 + $0x40] sm:$0xff] %vm179, %v549
      %560 = vst.msk [vmem:[#allocation2 + $0x48] sm:$0xff] %vm179, %v550
      %v561 = vld [vmem:[#allocation2] sm:$0xff]
      %v562 = vld [vmem:[#allocation2 + $0x8] sm:$0xff]
      %v563 = vld [vmem:[#allocation2 + $0x10] sm:$0xff]
      %v564 = vld [vmem:[#allocation2 + $0x18] sm:$0xff]
      %v565 = vld [vmem:[#allocation2 + $0x20] sm:$0xff]
      %v566 = vld [vmem:[#allocation2 + $0x28] sm:$0xff]
      %v567 = vld [vmem:[#allocation2 + $0x30] sm:$0xff]
      %v568 = vld [vmem:[#allocation2 + $0x38] sm:$0xff]
      %v569 = vld [vmem:[#allocation2 + $0x40] sm:$0xff]
      %v570 = vld [vmem:[#allocation2 + $0x48] sm:$0xff]
      %v571 = vld [vmem:[%s165] sm:$0xe]
      %v572 = vld [vmem:[%s165 + $0x4] sm:$0xf]
      %v573 = vld [vmem:[%s165 + $0x8] sm:$0xf]
      %v574 = vld [vmem:[%s165 + $0xc] sm:$0xf]
      %v575 = vld [vmem:[%s165 + $0x10] sm:$0xf]
      %v576 = vld [vmem:[%s165 + $0x14] sm:$0xf]
      %v577 = vld [vmem:[%s165 + $0x18] sm:$0xf]
      %v578 = vld [vmem:[%s165 + $0x1c] sm:$0xf]
      %v579 = vld [vmem:[%s165 + $0x20] sm:$0xf]
      %v580 = vld [vmem:[%s165 + $0x24] sm:$0xf]
      %v581 = vld [vmem:[%s165 + $0x28] sm:$0x1]
      %v582 = vld [vmem:[%s1 + $0x10] sm:$0xf]
      %v583 = vld [vmem:[%s1 + $0x14] sm:$0xf]
      %v595 = vunpack.c.l.b16 %v571
      %v596 = vunpack.c.l.b16 %v572
      %v597 = vunpack.c.l.b16 %v573
      %v598 = vunpack.c.l.b16 %v574
      %v599 = vunpack.c.l.b16 %v575
      %v600 = vunpack.c.l.b16 %v576
      %v601 = vunpack.c.l.b16 %v577
      %v602 = vunpack.c.l.b16 %v578
      %v603 = vunpack.c.l.b16 %v579
      %v604 = vunpack.c.l.b16 %v580
      %v605 = vunpack.c.l.b16 %v581
      %v606 = vpack.c.b16 %v596, %v595
      %v607 = vpack.c.b16 %v598, %v597
      %v608 = vpack.c.b16 %v600, %v599
      %v609 = vpack.c.b16 %v602, %v601
      %v610 = vpack.c.b16 %v604, %v603
      %v611 = vpack.c.b16 %v605, %v605
      %vm612 = vcmask 1046528
      %v613 = vrot.slane %v606, 1
      %v614 = vrot.slane %v607, 1
      %v615 = vsel %vm612, %v613, %v614
      %v616 = vrot.slane %v608, 1
      %v617 = vsel %vm612, %v614, %v616
      %v618 = vrot.slane %v609, 1
      %v619 = vsel %vm612, %v616, %v618
      %v620 = vrot.slane %v610, 1
      %v621 = vsel %vm612, %v618, %v620
      %v622 = vrot.slane %v611, 1
      %v623 = vsel %vm612, %v620, %v622
      %v626 = vunpack.c.l.b16 %v582
      %v627 = vunpack.c.l.b16 %v583
      %v628 = vpack.c.b16 %v627, %v626
      %v631 = vsel %vm179, %v615, 0
      %v634 = vsel %vm179, %v617, 0
      %v637 = vsel %vm179, %v619, 0
      %v640 = vsel %vm179, %v621, 0
      %v643 = vsel %vm179, %v623, 0
      %645 = vmatprep.subr.bf16.mxu0 0
      %646 = vmatpush1.bf16.msra.mxu0 0
      %647 = vmatprep.subr.bf16.mxu0 0
      %648 = vmatpush1.bf16.msra.mxu0 0
      %649 = vmatprep.subr.bf16.mxu0 0
      %650 = vmatpush1.bf16.msra.mxu0 0
      %651 = vmatprep.subr.bf16.mxu0 0
      %652 = vmatpush1.bf16.msra.mxu0 0
      %653 = vmatprep.subr.bf16.mxu0 0
      %654 = vmatpush1.bf16.msra.mxu0 0
      %655 = vmatprep.subr.bf16.mxu0 0
      %656 = vmatpush1.bf16.msra.mxu0 0
      %657 = vmatprep.subr.bf16.mxu0 0
      %658 = vmatpush1.bf16.msra.mxu0 0
      %659 = vmatprep.subr.bf16.mxu0 0
      %660 = vmatpush1.bf16.msra.mxu0 %v628
      %661 = vmatprep.subr.bf16.mxu0 0
      %662 = vmatpush2.bf16.msra.mxu0 0
      %663 = vmatprep.subr.bf16.mxu0 0
      %664 = vmatpush2.bf16.msra.mxu0 0
      %665 = vmatprep.subr.bf16.mxu0 0
      %666 = vmatpush2.bf16.msra.mxu0 0
      %667 = vmatprep.subr.bf16.mxu0 0
      %668 = vmatpush2.bf16.msra.mxu0 0
      %669 = vmatprep.subr.bf16.mxu0 0
      %670 = vmatpush2.bf16.msra.mxu0 0
      %671 = vmatprep.subr.bf16.mxu0 0
      %672 = vmatpush2.bf16.msra.mxu0 0
      %673 = vmatprep.subr.bf16.mxu0 0
      %674 = vmatpush2.bf16.msra.mxu0 0
      %675 = vmatprep.subr.bf16.mxu0 0
      %676 = vmatpush2.bf16.msra.mxu0 0
      %677 = vmatprep.mubr.bf16.mxu0 0
      %678 = vmatmul.mubr.bf16.gmra.mxu0 %v631
      %v679 = vpop.f32.mrf.mxu0
      %v680 = vadd.f32 0.0, %v679
      %v681 = vpop.f32.mrf.mxu0
      %v682 = vpop.f32.mrf.mxu0
      %v683 = vadd.f32 0.0, %v682
      %v684 = vpop.f32.mrf.mxu0
      %685 = vmatprep.mubr.bf16.mxu0 0
      %686 = vmatmul.mubr.bf16.gmra.mxu0 %v634
      %v687 = vpop.f32.mrf.mxu0
      %v688 = vadd.f32 0.0, %v687
      %v689 = vpop.f32.mrf.mxu0
      %v690 = vpop.f32.mrf.mxu0
      %v691 = vadd.f32 0.0, %v690
      %v692 = vpop.f32.mrf.mxu0
      %693 = vmatprep.mubr.bf16.mxu0 0
      %694 = vmatmul.mubr.bf16.gmra.mxu0 %v637
      %v695 = vpop.f32.mrf.mxu0
      %v696 = vadd.f32 0.0, %v695
      %v697 = vpop.f32.mrf.mxu0
      %v698 = vpop.f32.mrf.mxu0
      %v699 = vadd.f32 0.0, %v698
      %v700 = vpop.f32.mrf.mxu0
      %701 = vmatprep.mubr.bf16.mxu0 0
      %702 = vmatmul.mubr.bf16.gmra.mxu0 %v640
      %v703 = vpop.f32.mrf.mxu0
      %v704 = vadd.f32 0.0, %v703
      %v705 = vpop.f32.mrf.mxu0
      %v706 = vpop.f32.mrf.mxu0
      %v707 = vadd.f32 0.0, %v706
      %v708 = vpop.f32.mrf.mxu0
      %709 = vmatprep.mubr.bf16.mxu0 0
      %710 = vmatmul.mubr.bf16.gmra.mxu0 %v643
      %v711 = vpop.f32.mrf.mxu0
      %v712 = vadd.f32 0.0, %v711
      %v713 = vpop.f32.mrf.mxu0
      %v714 = vpop.f32.mrf.mxu0
      %v715 = vadd.f32 0.0, %v714
      %v716 = vpop.f32.mrf.mxu0
      %717 = vdwg.mxu0
      %v718 = vadd.f32 %v561, %v680
      %v719 = vadd.f32 %v562, %v683
      %v720 = vadd.f32 %v563, %v688
      %v721 = vadd.f32 %v564, %v691
      %v722 = vadd.f32 %v565, %v696
      %v723 = vadd.f32 %v566, %v699
      %v724 = vadd.f32 %v567, %v704
      %v725 = vadd.f32 %v568, %v707
      %v726 = vadd.f32 %v569, %v712
      %v727 = vadd.f32 %v570, %v715
      %728 = vst.msk [vmem:[#allocation2] sm:$0xff] %vm179, %v718
      %729 = vst.msk [vmem:[#allocation2 + $0x8] sm:$0xff] %vm179, %v719
      %730 = vst.msk [vmem:[#allocation2 + $0x10] sm:$0xff] %vm179, %v720
      %731 = vst.msk [vmem:[#allocation2 + $0x18] sm:$0xff] %vm179, %v721
      %732 = vst.msk [vmem:[#allocation2 + $0x20] sm:$0xff] %vm179, %v722
      %733 = vst.msk [vmem:[#allocation2 + $0x28] sm:$0xff] %vm179, %v723
      %734 = vst.msk [vmem:[#allocation2 + $0x30] sm:$0xff] %vm179, %v724
      %735 = vst.msk [vmem:[#allocation2 + $0x38] sm:$0xff] %vm179, %v725
      %736 = vst.msk [vmem:[#allocation2 + $0x40] sm:$0xff] %vm179, %v726
      %737 = vst.msk [vmem:[#allocation2 + $0x48] sm:$0xff] %vm179, %v727
      %v738 = vld [vmem:[#allocation2] sm:$0xff]
      %v739 = vld [vmem:[#allocation2 + $0x8] sm:$0xff]
      %v740 = vld [vmem:[#allocation2 + $0x10] sm:$0xff]
      %v741 = vld [vmem:[#allocation2 + $0x18] sm:$0xff]
      %v742 = vld [vmem:[#allocation2 + $0x20] sm:$0xff]
      %v743 = vld [vmem:[#allocation2 + $0x28] sm:$0xff]
      %v744 = vld [vmem:[#allocation2 + $0x30] sm:$0xff]
      %v745 = vld [vmem:[#allocation2 + $0x38] sm:$0xff]
      %v746 = vld [vmem:[#allocation2 + $0x40] sm:$0xff]
      %v747 = vld [vmem:[#allocation2 + $0x48] sm:$0xff]
      %v748 = vld [vmem:[%s165 + $0x4] sm:$0xe]
      %v749 = vld [vmem:[%s165 + $0x8] sm:$0xf]
      %v750 = vld [vmem:[%s165 + $0xc] sm:$0xf]
      %v751 = vld [vmem:[%s165 + $0x10] sm:$0xf]
      %v752 = vld [vmem:[%s165 + $0x14] sm:$0xf]
      %v753 = vld [vmem:[%s165 + $0x18] sm:$0xf]
      %v754 = vld [vmem:[%s165 + $0x1c] sm:$0xf]
      %v755 = vld [vmem:[%s165 + $0x20] sm:$0xf]
      %v756 = vld [vmem:[%s165 + $0x24] sm:$0xf]
      %v757 = vld [vmem:[%s165 + $0x28] sm:$0xf]
      %v758 = vld [vmem:[%s165 + $0x2c] sm:$0x1]
      %v759 = vld [vmem:[%s1 + $0x18] sm:$0xf]
      %v760 = vld [vmem:[%s1 + $0x1c] sm:$0xf]
      %v772 = vunpack.c.l.b16 %v748
      %v773 = vunpack.c.l.b16 %v749
      %v774 = vunpack.c.l.b16 %v750
      %v775 = vunpack.c.l.b16 %v751
      %v776 = vunpack.c.l.b16 %v752
      %v777 = vunpack.c.l.b16 %v753
      %v778 = vunpack.c.l.b16 %v754
      %v779 = vunpack.c.l.b16 %v755
      %v780 = vunpack.c.l.b16 %v756
      %v781 = vunpack.c.l.b16 %v757
      %v782 = vunpack.c.l.b16 %v758
      %v783 = vpack.c.b16 %v773, %v772
      %v784 = vpack.c.b16 %v775, %v774
      %v785 = vpack.c.b16 %v777, %v776
      %v786 = vpack.c.b16 %v779, %v778
      %v787 = vpack.c.b16 %v781, %v780
      %v788 = vpack.c.b16 %v782, %v782
      %v789 = vrot.slane %v783, 1
      %v790 = vrot.slane %v784, 1
      %v791 = vsel %vm612, %v789, %v790
      %v792 = vrot.slane %v785, 1
      %v793 = vsel %vm612, %v790, %v792
      %v794 = vrot.slane %v786, 1
      %v795 = vsel %vm612, %v792, %v794
      %v796 = vrot.slane %v787, 1
      %v797 = vsel %vm612, %v794, %v796
      %v798 = vrot.slane %v788, 1
      %v799 = vsel %vm612, %v796, %v798
      %v802 = vunpack.c.l.b16 %v759
      %v803 = vunpack.c.l.b16 %v760
      %v804 = vpack.c.b16 %v803, %v802
      %v807 = vsel %vm179, %v791, 0
      %v810 = vsel %vm179, %v793, 0
      %v813 = vsel %vm179, %v795, 0
      %v816 = vsel %vm179, %v797, 0
      %v819 = vsel %vm179, %v799, 0
      %821 = vmatprep.subr.bf16.mxu0 0
      %822 = vmatpush1.bf16.msra.mxu0 0
      %823 = vmatprep.subr.bf16.mxu0 0
      %824 = vmatpush1.bf16.msra.mxu0 0
      %825 = vmatprep.subr.bf16.mxu0 0
      %826 = vmatpush1.bf16.msra.mxu0 0
      %827 = vmatprep.subr.bf16.mxu0 0
      %828 = vmatpush1.bf16.msra.mxu0 0
      %829 = vmatprep.subr.bf16.mxu0 0
      %830 = vmatpush1.bf16.msra.mxu0 0
      %831 = vmatprep.subr.bf16.mxu0 0
      %832 = vmatpush1.bf16.msra.mxu0 0
      %833 = vmatprep.subr.bf16.mxu0 0
      %834 = vmatpush1.bf16.msra.mxu0 0
      %835 = vmatprep.subr.bf16.mxu0 0
      %836 = vmatpush1.bf16.msra.mxu0 %v804
      %837 = vmatprep.subr.bf16.mxu0 0
      %838 = vmatpush2.bf16.msra.mxu0 0
      %839 = vmatprep.subr.bf16.mxu0 0
      %840 = vmatpush2.bf16.msra.mxu0 0
      %841 = vmatprep.subr.bf16.mxu0 0
      %842 = vmatpush2.bf16.msra.mxu0 0
      %843 = vmatprep.subr.bf16.mxu0 0
      %844 = vmatpush2.bf16.msra.mxu0 0
      %845 = vmatprep.subr.bf16.mxu0 0
      %846 = vmatpush2.bf16.msra.mxu0 0
      %847 = vmatprep.subr.bf16.mxu0 0
      %848 = vmatpush2.bf16.msra.mxu0 0
      %849 = vmatprep.subr.bf16.mxu0 0
      %850 = vmatpush2.bf16.msra.mxu0 0
      %851 = vmatprep.subr.bf16.mxu0 0
      %852 = vmatpush2.bf16.msra.mxu0 0
      %853 = vmatprep.mubr.bf16.mxu0 0
      %854 = vmatmul.mubr.bf16.gmra.mxu0 %v807
      %v855 = vpop.f32.mrf.mxu0
      %v856 = vadd.f32 0.0, %v855
      %v857 = vpop.f32.mrf.mxu0
      %v858 = vpop.f32.mrf.mxu0
      %v859 = vadd.f32 0.0, %v858
      %v860 = vpop.f32.mrf.mxu0
      %861 = vmatprep.mubr.bf16.mxu0 0
      %862 = vmatmul.mubr.bf16.gmra.mxu0 %v810
      %v863 = vpop.f32.mrf.mxu0
      %v864 = vadd.f32 0.0, %v863
      %v865 = vpop.f32.mrf.mxu0
      %v866 = vpop.f32.mrf.mxu0
      %v867 = vadd.f32 0.0, %v866
      %v868 = vpop.f32.mrf.mxu0
      %869 = vmatprep.mubr.bf16.mxu0 0
      %870 = vmatmul.mubr.bf16.gmra.mxu0 %v813
      %v871 = vpop.f32.mrf.mxu0
      %v872 = vadd.f32 0.0, %v871
      %v873 = vpop.f32.mrf.mxu0
      %v874 = vpop.f32.mrf.mxu0
      %v875 = vadd.f32 0.0, %v874
      %v876 = vpop.f32.mrf.mxu0
      %877 = vmatprep.mubr.bf16.mxu0 0
      %878 = vmatmul.mubr.bf16.gmra.mxu0 %v816
      %v879 = vpop.f32.mrf.mxu0
      %v880 = vadd.f32 0.0, %v879
      %v881 = vpop.f32.mrf.mxu0
      %v882 = vpop.f32.mrf.mxu0
      %v883 = vadd.f32 0.0, %v882
      %v884 = vpop.f32.mrf.mxu0
      %885 = vmatprep.mubr.bf16.mxu0 0
      %886 = vmatmul.mubr.bf16.gmra.mxu0 %v819
      %v887 = vpop.f32.mrf.mxu0
      %v888 = vadd.f32 0.0, %v887
      %v889 = vpop.f32.mrf.mxu0
      %v890 = vpop.f32.mrf.mxu0
      %v891 = vadd.f32 0.0, %v890
      %v892 = vpop.f32.mrf.mxu0
      %893 = vdwg.mxu0
      %v894 = vadd.f32 %v738, %v856
      %v895 = vadd.f32 %v739, %v859
      %v896 = vadd.f32 %v740, %v864
      %v897 = vadd.f32 %v741, %v867
      %v898 = vadd.f32 %v742, %v872
      %v899 = vadd.f32 %v743, %v875
      %v900 = vadd.f32 %v744, %v880
      %v901 = vadd.f32 %v745, %v883
      %v902 = vadd.f32 %v746, %v888
      %v903 = vadd.f32 %v747, %v891
      %904 = vst.msk [vmem:[#allocation2] sm:$0xff] %vm179, %v894
      %905 = vst.msk [vmem:[#allocation2 + $0x8] sm:$0xff] %vm179, %v895
      %906 = vst.msk [vmem:[#allocation2 + $0x10] sm:$0xff] %vm179, %v896
      %907 = vst.msk [vmem:[#allocation2 + $0x18] sm:$0xff] %vm179, %v897
      %908 = vst.msk [vmem:[#allocation2 + $0x20] sm:$0xff] %vm179, %v898
      %909 = vst.msk [vmem:[#allocation2 + $0x28] sm:$0xff] %vm179, %v899
      %910 = vst.msk [vmem:[#allocation2 + $0x30] sm:$0xff] %vm179, %v900
      %911 = vst.msk [vmem:[#allocation2 + $0x38] sm:$0xff] %vm179, %v901
      %912 = vst.msk [vmem:[#allocation2 + $0x40] sm:$0xff] %vm179, %v902
      %913 = vst.msk [vmem:[#allocation2 + $0x48] sm:$0xff] %vm179, %v903
      %v914 = vld [vmem:[#allocation2] sm:$0xff]
      %v915 = vld [vmem:[#allocation2 + $0x8] sm:$0xff]
      %v916 = vld [vmem:[#allocation2 + $0x10] sm:$0xff]
      %v917 = vld [vmem:[#allocation2 + $0x18] sm:$0xff]
      %v918 = vld [vmem:[#allocation2 + $0x20] sm:$0xff]
      %v919 = vld [vmem:[#allocation2 + $0x28] sm:$0xff]
      %v920 = vld [vmem:[#allocation2 + $0x30] sm:$0xff]
      %v921 = vld [vmem:[#allocation2 + $0x38] sm:$0xff]
      %v922 = vld [vmem:[#allocation2 + $0x40] sm:$0xff]
      %v923 = vld [vmem:[#allocation2 + $0x48] sm:$0xff]
      %v924 = vld [vmem:[%s165 + $0x4] sm:$0xe]
      %v925 = vld [vmem:[%s165 + $0x8] sm:$0xf]
      %v926 = vld [vmem:[%s165 + $0xc] sm:$0xf]
      %v927 = vld [vmem:[%s165 + $0x10] sm:$0xf]
      %v928 = vld [vmem:[%s165 + $0x14] sm:$0xf]
      %v929 = vld [vmem:[%s165 + $0x18] sm:$0xf]
      %v930 = vld [vmem:[%s165 + $0x1c] sm:$0xf]
      %v931 = vld [vmem:[%s165 + $0x20] sm:$0xf]
      %v932 = vld [vmem:[%s165 + $0x24] sm:$0xf]
      %v933 = vld [vmem:[%s165 + $0x28] sm:$0xf]
      %v934 = vld [vmem:[%s165 + $0x2c] sm:$0x3]
      %v935 = vld [vmem:[%s1 + $0x20] sm:$0xf]
      %v936 = vld [vmem:[%s1 + $0x24] sm:$0xf]
      %v948 = vunpack.c.l.b16 %v924
      %v949 = vunpack.c.l.b16 %v925
      %v950 = vunpack.c.l.b16 %v926
      %v951 = vunpack.c.l.b16 %v927
      %v952 = vunpack.c.l.b16 %v928
      %v953 = vunpack.c.l.b16 %v929
      %v954 = vunpack.c.l.b16 %v930
      %v955 = vunpack.c.l.b16 %v931
      %v956 = vunpack.c.l.b16 %v932
      %v957 = vunpack.c.l.b16 %v933
      %v958 = vunpack.c.l.b16 %v934
      %v959 = vpack.c.b16 %v949, %v948
      %v960 = vpack.c.b16 %v951, %v950
      %v961 = vpack.c.b16 %v953, %v952
      %v962 = vpack.c.b16 %v955, %v954
      %v963 = vpack.c.b16 %v957, %v956
      %v964 = vpack.c.b16 %v958, %v958
      %vm965 = vsmask.f32 6400
      %v967 = vshrl.u32 %v959, 16
      %v969 = vrot.slane %v967, 1
      %v970 = vshll.u32 %v959, 16
      %v972 = vrot.slane %v970, 2
      %v973 = vor.u32 %v969, %v972
      %v975 = vshrl.u32 %v960, 16
      %v977 = vrot.slane %v975, 1
      %v978 = vshll.u32 %v960, 16
      %v980 = vrot.slane %v978, 2
      %v981 = vor.u32 %v977, %v980
      %v982 = vsel %vm965, %v973, %v981
      %v984 = vshrl.u32 %v961, 16
      %v986 = vrot.slane %v984, 1
      %v987 = vshll.u32 %v961, 16
      %v989 = vrot.slane %v987, 2
      %v990 = vor.u32 %v986, %v989
      %v991 = vsel %vm965, %v981, %v990
      %v993 = vshrl.u32 %v962, 16
      %v995 = vrot.slane %v993, 1
      %v996 = vshll.u32 %v962, 16
      %v998 = vrot.slane %v996, 2
      %v999 = vor.u32 %v995, %v998
      %v1000 = vsel %vm965, %v990, %v999
      %v1002 = vshrl.u32 %v963, 16
      %v1004 = vrot.slane %v1002, 1
      %v1005 = vshll.u32 %v963, 16
      %v1007 = vrot.slane %v1005, 2
      %v1008 = vor.u32 %v1004, %v1007
      %v1009 = vsel %vm965, %v999, %v1008
      %v1011 = vshrl.u32 %v964, 16
      %v1013 = vrot.slane %v1011, 1
      %v1014 = vshll.u32 %v964, 16
      %v1016 = vrot.slane %v1014, 2
      %v1017 = vor.u32 %v1013, %v1016
      %v1018 = vsel %vm965, %v1008, %v1017
      %v1021 = vunpack.c.l.b16 %v935
      %v1022 = vunpack.c.l.b16 %v936
      %v1023 = vpack.c.b16 %v1022, %v1021
      %v1026 = vsel %vm179, %v982, 0
      %v1029 = vsel %vm179, %v991, 0
      %v1032 = vsel %vm179, %v1000, 0
      %v1035 = vsel %vm179, %v1009, 0
      %v1038 = vsel %vm179, %v1018, 0
      %1040 = vmatprep.subr.bf16.mxu0 0
      %1041 = vmatpush1.bf16.msra.mxu0 0
      %1042 = vmatprep.subr.bf16.mxu0 0
      %1043 = vmatpush1.bf16.msra.mxu0 0
      %1044 = vmatprep.subr.bf16.mxu0 0
      %1045 = vmatpush1.bf16.msra.mxu0 0
      %1046 = vmatprep.subr.bf16.mxu0 0
      %1047 = vmatpush1.bf16.msra.mxu0 0
      %1048 = vmatprep.subr.bf16.mxu0 0
      %1049 = vmatpush1.bf16.msra.mxu0 0
      %1050 = vmatprep.subr.bf16.mxu0 0
      %1051 = vmatpush1.bf16.msra.mxu0 0
      %1052 = vmatprep.subr.bf16.mxu0 0
      %1053 = vmatpush1.bf16.msra.mxu0 0
      %1054 = vmatprep.subr.bf16.mxu0 0
      %1055 = vmatpush1.bf16.msra.mxu0 %v1023
      %1056 = vmatprep.subr.bf16.mxu0 0
      %1057 = vmatpush2.bf16.msra.mxu0 0
      %1058 = vmatprep.subr.bf16.mxu0 0
      %1059 = vmatpush2.bf16.msra.mxu0 0
      %1060 = vmatprep.subr.bf16.mxu0 0
      %1061 = vmatpush2.bf16.msra.mxu0 0
      %1062 = vmatprep.subr.bf16.mxu0 0
      %1063 = vmatpush2.bf16.msra.mxu0 0
      %1064 = vmatprep.subr.bf16.mxu0 0
      %1065 = vmatpush2.bf16.msra.mxu0 0
      %1066 = vmatprep.subr.bf16.mxu0 0
      %1067 = vmatpush2.bf16.msra.mxu0 0
      %1068 = vmatprep.subr.bf16.mxu0 0
      %1069 = vmatpush2.bf16.msra.mxu0 0
      %1070 = vmatprep.subr.bf16.mxu0 0
      %1071 = vmatpush2.bf16.msra.mxu0 0
      %1072 = vmatprep.mubr.bf16.mxu0 0
      %1073 = vmatmul.mubr.bf16.gmra.mxu0 %v1026
      %v1074 = vpop.f32.mrf.mxu0
      %v1075 = vadd.f32 0.0, %v1074
      %v1076 = vpop.f32.mrf.mxu0
      %v1077 = vpop.f32.mrf.mxu0
      %v1078 = vadd.f32 0.0, %v1077
      %v1079 = vpop.f32.mrf.mxu0
      %1080 = vmatprep.mubr.bf16.mxu0 0
      %1081 = vmatmul.mubr.bf16.gmra.mxu0 %v1029
      %v1082 = vpop.f32.mrf.mxu0
      %v1083 = vadd.f32 0.0, %v1082
      %v1084 = vpop.f32.mrf.mxu0
      %v1085 = vpop.f32.mrf.mxu0
      %v1086 = vadd.f32 0.0, %v1085
      %v1087 = vpop.f32.mrf.mxu0
      %1088 = vmatprep.mubr.bf16.mxu0 0
      %1089 = vmatmul.mubr.bf16.gmra.mxu0 %v1032
      %v1090 = vpop.f32.mrf.mxu0
      %v1091 = vadd.f32 0.0, %v1090
      %v1092 = vpop.f32.mrf.mxu0
      %v1093 = vpop.f32.mrf.mxu0
      %v1094 = vadd.f32 0.0, %v1093
      %v1095 = vpop.f32.mrf.mxu0
      %1096 = vmatprep.mubr.bf16.mxu0 0
      %1097 = vmatmul.mubr.bf16.gmra.mxu0 %v1035
      %v1098 = vpop.f32.mrf.mxu0
      %v1099 = vadd.f32 0.0, %v1098
      %v1100 = vpop.f32.mrf.mxu0
      %v1101 = vpop.f32.mrf.mxu0
      %v1102 = vadd.f32 0.0, %v1101
      %v1103 = vpop.f32.mrf.mxu0
      %1104 = vmatprep.mubr.bf16.mxu0 0
      %1105 = vmatmul.mubr.bf16.gmra.mxu0 %v1038
      %v1106 = vpop.f32.mrf.mxu0
      %v1107 = vadd.f32 0.0, %v1106
      %v1108 = vpop.f32.mrf.mxu0
      %v1109 = vpop.f32.mrf.mxu0
      %v1110 = vadd.f32 0.0, %v1109
      %v1111 = vpop.f32.mrf.mxu0
      %1112 = vdwg.mxu0
      %v1113 = vadd.f32 %v914, %v1075
      %v1114 = vadd.f32 %v915, %v1078
      %v1115 = vadd.f32 %v916, %v1083
      %v1116 = vadd.f32 %v917, %v1086
      %v1117 = vadd.f32 %v918, %v1091
      %v1118 = vadd.f32 %v919, %v1094
      %v1119 = vadd.f32 %v920, %v1099
      %v1120 = vadd.f32 %v921, %v1102
      %v1121 = vadd.f32 %v922, %v1107
      %v1122 = vadd.f32 %v923, %v1110
      %1123 = vst.msk [vmem:[#allocation2] sm:$0xff] %vm179, %v1113
      %1124 = vst.msk [vmem:[#allocation2 + $0x8] sm:$0xff] %vm179, %v1114
      %1125 = vst.msk [vmem:[#allocation2 + $0x10] sm:$0xff] %vm179, %v1115
      %1126 = vst.msk [vmem:[#allocation2 + $0x18] sm:$0xff] %vm179, %v1116
      %1127 = vst.msk [vmem:[#allocation2 + $0x20] sm:$0xff] %vm179, %v1117
      %1128 = vst.msk [vmem:[#allocation2 + $0x28] sm:$0xff] %vm179, %v1118
      %1129 = vst.msk [vmem:[#allocation2 + $0x30] sm:$0xff] %vm179, %v1119
      %1130 = vst.msk [vmem:[#allocation2 + $0x38] sm:$0xff] %vm179, %v1120
      %1131 = vst.msk [vmem:[#allocation2 + $0x40] sm:$0xff] %vm179, %v1121
      %1132 = vst.msk [vmem:[#allocation2 + $0x48] sm:$0xff] %vm179, %v1122
      %v1133 = vld [vmem:[#allocation2] sm:$0xff]
      %v1134 = vld [vmem:[#allocation2 + $0x8] sm:$0xff]
      %v1135 = vld [vmem:[#allocation2 + $0x10] sm:$0xff]
      %v1136 = vld [vmem:[#allocation2 + $0x18] sm:$0xff]
      %v1137 = vld [vmem:[#allocation2 + $0x20] sm:$0xff]
      %v1138 = vld [vmem:[#allocation2 + $0x28] sm:$0xff]
      %v1139 = vld [vmem:[#allocation2 + $0x30] sm:$0xff]
      %v1140 = vld [vmem:[#allocation2 + $0x38] sm:$0xff]
      %v1141 = vld [vmem:[#allocation2 + $0x40] sm:$0xff]
      %v1142 = vld [vmem:[#allocation2 + $0x48] sm:$0xff]
      %v1143 = vld [vmem:[%s165 + $0x4] sm:$0xc]
      %v1144 = vld [vmem:[%s165 + $0x8] sm:$0xf]
      %v1145 = vld [vmem:[%s165 + $0xc] sm:$0xf]
      %v1146 = vld [vmem:[%s165 + $0x10] sm:$0xf]
      %v1147 = vld [vmem:[%s165 + $0x14] sm:$0xf]
      %v1148 = vld [vmem:[%s165 + $0x18] sm:$0xf]
      %v1149 = vld [vmem:[%s165 + $0x1c] sm:$0xf]
      %v1150 = vld [vmem:[%s165 + $0x20] sm:$0xf]
      %v1151 = vld [vmem:[%s165 + $0x24] sm:$0xf]
      %v1152 = vld [vmem:[%s165 + $0x28] sm:$0xf]
      %v1153 = vld [vmem:[%s165 + $0x2c] sm:$0x3]
      %v1154 = vld [vmem:[%s1 + $0x28] sm:$0xf]
      %v1155 = vld [vmem:[%s1 + $0x2c] sm:$0xf]
      %v1167 = vunpack.c.l.b16 %v1143
      %v1168 = vunpack.c.l.b16 %v1144
      %v1169 = vunpack.c.l.b16 %v1145
      %v1170 = vunpack.c.l.b16 %v1146
      %v1171 = vunpack.c.l.b16 %v1147
      %v1172 = vunpack.c.l.b16 %v1148
      %v1173 = vunpack.c.l.b16 %v1149
      %v1174 = vunpack.c.l.b16 %v1150
      %v1175 = vunpack.c.l.b16 %v1151
      %v1176 = vunpack.c.l.b16 %v1152
      %v1177 = vunpack.c.l.b16 %v1153
      %v1178 = vpack.c.b16 %v1168, %v1167
      %v1179 = vpack.c.b16 %v1170, %v1169
      %v1180 = vpack.c.b16 %v1172, %v1171
      %v1181 = vpack.c.b16 %v1174, %v1173
      %v1182 = vpack.c.b16 %v1176, %v1175
      %v1183 = vpack.c.b16 %v1177, %v1177
      %vm1184 = vcmask 1045504
      %v1185 = vrot.slane %v1178, 2
      %v1186 = vrot.slane %v1179, 2
      %v1187 = vsel %vm1184, %v1185, %v1186
      %v1188 = vrot.slane %v1180, 2
      %v1189 = vsel %vm1184, %v1186, %v1188
      %v1190 = vrot.slane %v1181, 2
      %v1191 = vsel %vm1184, %v1188, %v1190
      %v1192 = vrot.slane %v1182, 2
      %v1193 = vsel %vm1184, %v1190, %v1192
      %v1194 = vrot.slane %v1183, 2
      %v1195 = vsel %vm1184, %v1192, %v1194
      %v1198 = vunpack.c.l.b16 %v1154
      %v1199 = vunpack.c.l.b16 %v1155
      %v1200 = vpack.c.b16 %v1199, %v1198
      %v1203 = vsel %vm179, %v1187, 0
      %v1206 = vsel %vm179, %v1189, 0
      %v1209 = vsel %vm179, %v1191, 0
      %v1212 = vsel %vm179, %v1193, 0
      %v1215 = vsel %vm179, %v1195, 0
      %1217 = vmatprep.subr.bf16.mxu0 0
      %1218 = vmatpush1.bf16.msra.mxu0 0
      %1219 = vmatprep.subr.bf16.mxu0 0
      %1220 = vmatpush1.bf16.msra.mxu0 0
      %1221 = vmatprep.subr.bf16.mxu0 0
      %1222 = vmatpush1.bf16.msra.mxu0 0
      %1223 = vmatprep.subr.bf16.mxu0 0
      %1224 = vmatpush1.bf16.msra.mxu0 0
      %1225 = vmatprep.subr.bf16.mxu0 0
      %1226 = vmatpush1.bf16.msra.mxu0 0
      %1227 = vmatprep.subr.bf16.mxu0 0
      %1228 = vmatpush1.bf16.msra.mxu0 0
      %1229 = vmatprep.subr.bf16.mxu0 0
      %1230 = vmatpush1.bf16.msra.mxu0 0
      %1231 = vmatprep.subr.bf16.mxu0 0
      %1232 = vmatpush1.bf16.msra.mxu0 %v1200
      %1233 = vmatprep.subr.bf16.mxu0 0
      %1234 = vmatpush2.bf16.msra.mxu0 0
      %1235 = vmatprep.subr.bf16.mxu0 0
      %1236 = vmatpush2.bf16.msra.mxu0 0
      %1237 = vmatprep.subr.bf16.mxu0 0
      %1238 = vmatpush2.bf16.msra.mxu0 0
      %1239 = vmatprep.subr.bf16.mxu0 0
      %1240 = vmatpush2.bf16.msra.mxu0 0
      %1241 = vmatprep.subr.bf16.mxu0 0
      %1242 = vmatpush2.bf16.msra.mxu0 0
      %1243 = vmatprep.subr.bf16.mxu0 0
      %1244 = vmatpush2.bf16.msra.mxu0 0
      %1245 = vmatprep.subr.bf16.mxu0 0
      %1246 = vmatpush2.bf16.msra.mxu0 0
      %1247 = vmatprep.subr.bf16.mxu0 0
      %1248 = vmatpush2.bf16.msra.mxu0 0
      %1249 = vmatprep.mubr.bf16.mxu0 0
      %1250 = vmatmul.mubr.bf16.gmra.mxu0 %v1203
      %v1251 = vpop.f32.mrf.mxu0
      %v1252 = vadd.f32 0.0, %v1251
      %v1253 = vpop.f32.mrf.mxu0
      %v1254 = vpop.f32.mrf.mxu0
      %v1255 = vadd.f32 0.0, %v1254
      %v1256 = vpop.f32.mrf.mxu0
      %1257 = vmatprep.mubr.bf16.mxu0 0
      %1258 = vmatmul.mubr.bf16.gmra.mxu0 %v1206
      %v1259 = vpop.f32.mrf.mxu0
      %v1260 = vadd.f32 0.0, %v1259
      %v1261 = vpop.f32.mrf.mxu0
      %v1262 = vpop.f32.mrf.mxu0
      %v1263 = vadd.f32 0.0, %v1262
      %v1264 = vpop.f32.mrf.mxu0
      %1265 = vmatprep.mubr.bf16.mxu0 0
      %1266 = vmatmul.mubr.bf16.gmra.mxu0 %v1209
      %v1267 = vpop.f32.mrf.mxu0
      %v1268 = vadd.f32 0.0, %v1267
      %v1269 = vpop.f32.mrf.mxu0
      %v1270 = vpop.f32.mrf.mxu0
      %v1271 = vadd.f32 0.0, %v1270
      %v1272 = vpop.f32.mrf.mxu0
      %1273 = vmatprep.mubr.bf16.mxu0 0
      %1274 = vmatmul.mubr.bf16.gmra.mxu0 %v1212
      %v1275 = vpop.f32.mrf.mxu0
      %v1276 = vadd.f32 0.0, %v1275
      %v1277 = vpop.f32.mrf.mxu0
      %v1278 = vpop.f32.mrf.mxu0
      %v1279 = vadd.f32 0.0, %v1278
      %v1280 = vpop.f32.mrf.mxu0
      %1281 = vmatprep.mubr.bf16.mxu0 0
      %1282 = vmatmul.mubr.bf16.gmra.mxu0 %v1215
      %v1283 = vpop.f32.mrf.mxu0
      %v1284 = vadd.f32 0.0, %v1283
      %v1285 = vpop.f32.mrf.mxu0
      %v1286 = vpop.f32.mrf.mxu0
      %v1287 = vadd.f32 0.0, %v1286
      %v1288 = vpop.f32.mrf.mxu0
      %1289 = vdwg.mxu0
      %v1290 = vadd.f32 %v1133, %v1252
      %v1291 = vadd.f32 %v1134, %v1255
      %v1292 = vadd.f32 %v1135, %v1260
      %v1293 = vadd.f32 %v1136, %v1263
      %v1294 = vadd.f32 %v1137, %v1268
      %v1295 = vadd.f32 %v1138, %v1271
      %v1296 = vadd.f32 %v1139, %v1276
      %v1297 = vadd.f32 %v1140, %v1279
      %v1298 = vadd.f32 %v1141, %v1284
      %v1299 = vadd.f32 %v1142, %v1287
      %1300 = vst.msk [vmem:[#allocation2] sm:$0xff] %vm179, %v1290
      %1301 = vst.msk [vmem:[#allocation2 + $0x8] sm:$0xff] %vm179, %v1291
      %1302 = vst.msk [vmem:[#allocation2 + $0x10] sm:$0xff] %vm179, %v1292
      %1303 = vst.msk [vmem:[#allocation2 + $0x18] sm:$0xff] %vm179, %v1293
      %1304 = vst.msk [vmem:[#allocation2 + $0x20] sm:$0xff] %vm179, %v1294
      %1305 = vst.msk [vmem:[#allocation2 + $0x28] sm:$0xff] %vm179, %v1295
      %1306 = vst.msk [vmem:[#allocation2 + $0x30] sm:$0xff] %vm179, %v1296
      %1307 = vst.msk [vmem:[#allocation2 + $0x38] sm:$0xff] %vm179, %v1297
      %1308 = vst.msk [vmem:[#allocation2 + $0x40] sm:$0xff] %vm179, %v1298
      %1309 = vst.msk [vmem:[#allocation2 + $0x48] sm:$0xff] %vm179, %v1299
      %v1310 = vld [vmem:[#allocation2] sm:$0xff]
      %v1311 = vld [vmem:[#allocation2 + $0x8] sm:$0xff]
      %v1312 = vld [vmem:[#allocation2 + $0x10] sm:$0xff]
      %v1313 = vld [vmem:[#allocation2 + $0x18] sm:$0xff]
      %v1314 = vld [vmem:[#allocation2 + $0x20] sm:$0xff]
      %v1315 = vld [vmem:[#allocation2 + $0x28] sm:$0xff]
      %v1316 = vld [vmem:[#allocation2 + $0x30] sm:$0xff]
      %v1317 = vld [vmem:[#allocation2 + $0x38] sm:$0xff]
      %v1318 = vld [vmem:[#allocation2 + $0x40] sm:$0xff]
      %v1319 = vld [vmem:[#allocation2 + $0x48] sm:$0xff]
      %v1320 = vld [vmem:[%s165 + $0x8] sm:$0xc]
      %v1321 = vld [vmem:[%s165 + $0xc] sm:$0xf]
      %v1322 = vld [vmem:[%s165 + $0x10] sm:$0xf]
      %v1323 = vld [vmem:[%s165 + $0x14] sm:$0xf]
      %v1324 = vld [vmem:[%s165 + $0x18] sm:$0xf]
      %v1325 = vld [vmem:[%s165 + $0x1c] sm:$0xf]
      %v1326 = vld [vmem:[%s165 + $0x20] sm:$0xf]
      %v1327 = vld [vmem:[%s165 + $0x24] sm:$0xf]
      %v1328 = vld [vmem:[%s165 + $0x28] sm:$0xf]
      %v1329 = vld [vmem:[%s165 + $0x2c] sm:$0xf]
      %v1330 = vld [vmem:[%s165 + $0x30] sm:$0x3]
      %v1331 = vld [vmem:[%s1 + $0x30] sm:$0xf]
      %v1332 = vld [vmem:[%s1 + $0x34] sm:$0xf]
      %v1344 = vunpack.c.l.b16 %v1320
      %v1345 = vunpack.c.l.b16 %v1321
      %v1346 = vunpack.c.l.b16 %v1322
      %v1347 = vunpack.c.l.b16 %v1323
      %v1348 = vunpack.c.l.b16 %v1324
      %v1349 = vunpack.c.l.b16 %v1325
      %v1350 = vunpack.c.l.b16 %v1326
      %v1351 = vunpack.c.l.b16 %v1327
      %v1352 = vunpack.c.l.b16 %v1328
      %v1353 = vunpack.c.l.b16 %v1329
      %v1354 = vunpack.c.l.b16 %v1330
      %v1355 = vpack.c.b16 %v1345, %v1344
      %v1356 = vpack.c.b16 %v1347, %v1346
      %v1357 = vpack.c.b16 %v1349, %v1348
      %v1358 = vpack.c.b16 %v1351, %v1350
      %v1359 = vpack.c.b16 %v1353, %v1352
      %v1360 = vpack.c.b16 %v1354, %v1354
      %v1361 = vrot.slane %v1355, 2
      %v1362 = vrot.slane %v1356, 2
      %v1363 = vsel %vm1184, %v1361, %v1362
      %v1364 = vrot.slane %v1357, 2
      %v1365 = vsel %vm1184, %v1362, %v1364
      %v1366 = vrot.slane %v1358, 2
      %v1367 = vsel %vm1184, %v1364, %v1366
      %v1368 = vrot.slane %v1359, 2
      %v1369 = vsel %vm1184, %v1366, %v1368
      %v1370 = vrot.slane %v1360, 2
      %v1371 = vsel %vm1184, %v1368, %v1370
      %v1374 = vunpack.c.l.b16 %v1331
      %v1375 = vunpack.c.l.b16 %v1332
      %v1376 = vpack.c.b16 %v1375, %v1374
      %v1379 = vsel %vm179, %v1363, 0
      %v1382 = vsel %vm179, %v1365, 0
      %v1385 = vsel %vm179, %v1367, 0
      %v1388 = vsel %vm179, %v1369, 0
      %v1391 = vsel %vm179, %v1371, 0
      %1393 = vmatprep.subr.bf16.mxu0 0
      %1394 = vmatpush1.bf16.msra.mxu0 0
      %1395 = vmatprep.subr.bf16.mxu0 0
      %1396 = vmatpush1.bf16.msra.mxu0 0
      %1397 = vmatprep.subr.bf16.mxu0 0
      %1398 = vmatpush1.bf16.msra.mxu0 0
      %1399 = vmatprep.subr.bf16.mxu0 0
      %1400 = vmatpush1.bf16.msra.mxu0 0
      %1401 = vmatprep.subr.bf16.mxu0 0
      %1402 = vmatpush1.bf16.msra.mxu0 0
      %1403 = vmatprep.subr.bf16.mxu0 0
      %1404 = vmatpush1.bf16.msra.mxu0 0
      %1405 = vmatprep.subr.bf16.mxu0 0
      %1406 = vmatpush1.bf16.msra.mxu0 0
      %1407 = vmatprep.subr.bf16.mxu0 0
      %1408 = vmatpush1.bf16.msra.mxu0 %v1376
      %1409 = vmatprep.subr.bf16.mxu0 0
      %1410 = vmatpush2.bf16.msra.mxu0 0
      %1411 = vmatprep.subr.bf16.mxu0 0
      %1412 = vmatpush2.bf16.msra.mxu0 0
      %1413 = vmatprep.subr.bf16.mxu0 0
      %1414 = vmatpush2.bf16.msra.mxu0 0
      %1415 = vmatprep.subr.bf16.mxu0 0
      %1416 = vmatpush2.bf16.msra.mxu0 0
      %1417 = vmatprep.subr.bf16.mxu0 0
      %1418 = vmatpush2.bf16.msra.mxu0 0
      %1419 = vmatprep.subr.bf16.mxu0 0
      %1420 = vmatpush2.bf16.msra.mxu0 0
      %1421 = vmatprep.subr.bf16.mxu0 0
      %1422 = vmatpush2.bf16.msra.mxu0 0
      %1423 = vmatprep.subr.bf16.mxu0 0
      %1424 = vmatpush2.bf16.msra.mxu0 0
      %1425 = vmatprep.mubr.bf16.mxu0 0
      %1426 = vmatmul.mubr.bf16.gmra.mxu0 %v1379
      %v1427 = vpop.f32.mrf.mxu0
      %v1428 = vadd.f32 0.0, %v1427
      %v1429 = vpop.f32.mrf.mxu0
      %v1430 = vpop.f32.mrf.mxu0
      %v1431 = vadd.f32 0.0, %v1430
      %v1432 = vpop.f32.mrf.mxu0
      %1433 = vmatprep.mubr.bf16.mxu0 0
      %1434 = vmatmul.mubr.bf16.gmra.mxu0 %v1382
      %v1435 = vpop.f32.mrf.mxu0
      %v1436 = vadd.f32 0.0, %v1435
      %v1437 = vpop.f32.mrf.mxu0
      %v1438 = vpop.f32.mrf.mxu0
      %v1439 = vadd.f32 0.0, %v1438
      %v1440 = vpop.f32.mrf.mxu0
      %1441 = vmatprep.mubr.bf16.mxu0 0
      %1442 = vmatmul.mubr.bf16.gmra.mxu0 %v1385
      %v1443 = vpop.f32.mrf.mxu0
      %v1444 = vadd.f32 0.0, %v1443
      %v1445 = vpop.f32.mrf.mxu0
      %v1446 = vpop.f32.mrf.mxu0
      %v1447 = vadd.f32 0.0, %v1446
      %v1448 = vpop.f32.mrf.mxu0
      %1449 = vmatprep.mubr.bf16.mxu0 0
      %1450 = vmatmul.mubr.bf16.gmra.mxu0 %v1388
      %v1451 = vpop.f32.mrf.mxu0
      %v1452 = vadd.f32 0.0, %v1451
      %v1453 = vpop.f32.mrf.mxu0
      %v1454 = vpop.f32.mrf.mxu0
      %v1455 = vadd.f32 0.0, %v1454
      %v1456 = vpop.f32.mrf.mxu0
      %1457 = vmatprep.mubr.bf16.mxu0 0
      %1458 = vmatmul.mubr.bf16.gmra.mxu0 %v1391
      %v1459 = vpop.f32.mrf.mxu0
      %v1460 = vadd.f32 0.0, %v1459
      %v1461 = vpop.f32.mrf.mxu0
      %v1462 = vpop.f32.mrf.mxu0
      %v1463 = vadd.f32 0.0, %v1462
      %v1464 = vpop.f32.mrf.mxu0
      %1465 = vdwg.mxu0
      %v1466 = vadd.f32 %v1310, %v1428
      %v1467 = vadd.f32 %v1311, %v1431
      %v1468 = vadd.f32 %v1312, %v1436
      %v1469 = vadd.f32 %v1313, %v1439
      %v1470 = vadd.f32 %v1314, %v1444
      %v1471 = vadd.f32 %v1315, %v1447
      %v1472 = vadd.f32 %v1316, %v1452
      %v1473 = vadd.f32 %v1317, %v1455
      %v1474 = vadd.f32 %v1318, %v1460
      %v1475 = vadd.f32 %v1319, %v1463
      %1476 = vst.msk [vmem:[#allocation2] sm:$0xff] %vm179, %v1466
      %1477 = vst.msk [vmem:[#allocation2 + $0x8] sm:$0xff] %vm179, %v1467
      %1478 = vst.msk [vmem:[#allocation2 + $0x10] sm:$0xff] %vm179, %v1468
      %1479 = vst.msk [vmem:[#allocation2 + $0x18] sm:$0xff] %vm179, %v1469
      %1480 = vst.msk [vmem:[#allocation2 + $0x20] sm:$0xff] %vm179, %v1470
      %1481 = vst.msk [vmem:[#allocation2 + $0x28] sm:$0xff] %vm179, %v1471
      %1482 = vst.msk [vmem:[#allocation2 + $0x30] sm:$0xff] %vm179, %v1472
      %1483 = vst.msk [vmem:[#allocation2 + $0x38] sm:$0xff] %vm179, %v1473
      %1484 = vst.msk [vmem:[#allocation2 + $0x40] sm:$0xff] %vm179, %v1474
      %1485 = vst.msk [vmem:[#allocation2 + $0x48] sm:$0xff] %vm179, %v1475
      %v1486 = vld [vmem:[#allocation2] sm:$0xff]
      %v1487 = vld [vmem:[#allocation2 + $0x8] sm:$0xff]
      %v1488 = vld [vmem:[#allocation2 + $0x10] sm:$0xff]
      %v1489 = vld [vmem:[#allocation2 + $0x18] sm:$0xff]
      %v1490 = vld [vmem:[#allocation2 + $0x20] sm:$0xff]
      %v1491 = vld [vmem:[#allocation2 + $0x28] sm:$0xff]
      %v1492 = vld [vmem:[#allocation2 + $0x30] sm:$0xff]
      %v1493 = vld [vmem:[#allocation2 + $0x38] sm:$0xff]
      %v1494 = vld [vmem:[#allocation2 + $0x40] sm:$0xff]
      %v1495 = vld [vmem:[#allocation2 + $0x48] sm:$0xff]
      %v1496 = vld [vmem:[%s165 + $0x8] sm:$0xc]
      %v1497 = vld [vmem:[%s165 + $0xc] sm:$0xf]
      %v1498 = vld [vmem:[%s165 + $0x10] sm:$0xf]
      %v1499 = vld [vmem:[%s165 + $0x14] sm:$0xf]
      %v1500 = vld [vmem:[%s165 + $0x18] sm:$0xf]
      %v1501 = vld [vmem:[%s165 + $0x1c] sm:$0xf]
      %v1502 = vld [vmem:[%s165 + $0x20] sm:$0xf]
      %v1503 = vld [vmem:[%s165 + $0x24] sm:$0xf]
      %v1504 = vld [vmem:[%s165 + $0x28] sm:$0xf]
      %v1505 = vld [vmem:[%s165 + $0x2c] sm:$0xf]
      %v1506 = vld [vmem:[%s165 + $0x30] sm:$0x7]
      %v1507 = vld [vmem:[%s1 + $0x38] sm:$0xf]
      %v1508 = vld [vmem:[%s1 + $0x3c] sm:$0xf]
      %v1520 = vunpack.c.l.b16 %v1496
      %v1521 = vunpack.c.l.b16 %v1497
      %v1522 = vunpack.c.l.b16 %v1498
      %v1523 = vunpack.c.l.b16 %v1499
      %v1524 = vunpack.c.l.b16 %v1500
      %v1525 = vunpack.c.l.b16 %v1501
      %v1526 = vunpack.c.l.b16 %v1502
      %v1527 = vunpack.c.l.b16 %v1503
      %v1528 = vunpack.c.l.b16 %v1504
      %v1529 = vunpack.c.l.b16 %v1505
      %v1530 = vunpack.c.l.b16 %v1506
      %v1531 = vpack.c.b16 %v1521, %v1520
      %v1532 = vpack.c.b16 %v1523, %v1522
      %v1533 = vpack.c.b16 %v1525, %v1524
      %v1534 = vpack.c.b16 %v1527, %v1526
      %v1535 = vpack.c.b16 %v1529, %v1528
      %v1536 = vpack.c.b16 %v1530, %v1530
      %vm1537 = vsmask.f32 5376
      %v1539 = vshrl.u32 %v1531, 16
      %v1541 = vrot.slane %v1539, 2
      %v1542 = vshll.u32 %v1531, 16
      %v1544 = vrot.slane %v1542, 3
      %v1545 = vor.u32 %v1541, %v1544
      %v1547 = vshrl.u32 %v1532, 16
      %v1549 = vrot.slane %v1547, 2
      %v1550 = vshll.u32 %v1532, 16
      %v1552 = vrot.slane %v1550, 3
      %v1553 = vor.u32 %v1549, %v1552
      %v1554 = vsel %vm1537, %v1545, %v1553
      %v1556 = vshrl.u32 %v1533, 16
      %v1558 = vrot.slane %v1556, 2
      %v1559 = vshll.u32 %v1533, 16
      %v1561 = vrot.slane %v1559, 3
      %v1562 = vor.u32 %v1558, %v1561
      %v1563 = vsel %vm1537, %v1553, %v1562
      %v1565 = vshrl.u32 %v1534, 16
      %v1567 = vrot.slane %v1565, 2
      %v1568 = vshll.u32 %v1534, 16
      %v1570 = vrot.slane %v1568, 3
      %v1571 = vor.u32 %v1567, %v1570
      %v1572 = vsel %vm1537, %v1562, %v1571
      %v1574 = vshrl.u32 %v1535, 16
      %v1576 = vrot.slane %v1574, 2
      %v1577 = vshll.u32 %v1535, 16
      %v1579 = vrot.slane %v1577, 3
      %v1580 = vor.u32 %v1576, %v1579
      %v1581 = vsel %vm1537, %v1571, %v1580
      %v1583 = vshrl.u32 %v1536, 16
      %v1585 = vrot.slane %v1583, 2
      %v1586 = vshll.u32 %v1536, 16
      %v1588 = vrot.slane %v1586, 3
      %v1589 = vor.u32 %v1585, %v1588
      %v1590 = vsel %vm1537, %v1580, %v1589
      %v1593 = vunpack.c.l.b16 %v1507
      %v1594 = vunpack.c.l.b16 %v1508
      %v1595 = vpack.c.b16 %v1594, %v1593
      %v1598 = vsel %vm179, %v1554, 0
      %v1601 = vsel %vm179, %v1563, 0
      %v1604 = vsel %vm179, %v1572, 0
      %v1607 = vsel %vm179, %v1581, 0
      %v1610 = vsel %vm179, %v1590, 0
      %1612 = vmatprep.subr.bf16.mxu0 0
      %1613 = vmatpush1.bf16.msra.mxu0 0
      %1614 = vmatprep.subr.bf16.mxu0 0
      %1615 = vmatpush1.bf16.msra.mxu0 0
      %1616 = vmatprep.subr.bf16.mxu0 0
      %1617 = vmatpush1.bf16.msra.mxu0 0
      %1618 = vmatprep.subr.bf16.mxu0 0
      %1619 = vmatpush1.bf16.msra.mxu0 0
      %1620 = vmatprep.subr.bf16.mxu0 0
      %1621 = vmatpush1.bf16.msra.mxu0 0
      %1622 = vmatprep.subr.bf16.mxu0 0
      %1623 = vmatpush1.bf16.msra.mxu0 0
      %1624 = vmatprep.subr.bf16.mxu0 0
      %1625 = vmatpush1.bf16.msra.mxu0 0
      %1626 = vmatprep.subr.bf16.mxu0 0
      %1627 = vmatpush1.bf16.msra.mxu0 %v1595
      %1628 = vmatprep.subr.bf16.mxu0 0
      %1629 = vmatpush2.bf16.msra.mxu0 0
      %1630 = vmatprep.subr.bf16.mxu0 0
      %1631 = vmatpush2.bf16.msra.mxu0 0
      %1632 = vmatprep.subr.bf16.mxu0 0
      %1633 = vmatpush2.bf16.msra.mxu0 0
      %1634 = vmatprep.subr.bf16.mxu0 0
      %1635 = vmatpush2.bf16.msra.mxu0 0
      %1636 = vmatprep.subr.bf16.mxu0 0
      %1637 = vmatpush2.bf16.msra.mxu0 0
      %1638 = vmatprep.subr.bf16.mxu0 0
      %1639 = vmatpush2.bf16.msra.mxu0 0
      %1640 = vmatprep.subr.bf16.mxu0 0
      %1641 = vmatpush2.bf16.msra.mxu0 0
      %1642 = vmatprep.subr.bf16.mxu0 0
      %1643 = vmatpush2.bf16.msra.mxu0 0
      %1644 = vmatprep.mubr.bf16.mxu0 0
      %1645 = vmatmul.mubr.bf16.gmra.mxu0 %v1598
      %v1646 = vpop.f32.mrf.mxu0
      %v1647 = vadd.f32 0.0, %v1646
      %v1648 = vpop.f32.mrf.mxu0
      %v1649 = vpop.f32.mrf.mxu0
      %v1650 = vadd.f32 0.0, %v1649
      %v1651 = vpop.f32.mrf.mxu0
      %1652 = vmatprep.mubr.bf16.mxu0 0
      %1653 = vmatmul.mubr.bf16.gmra.mxu0 %v1601
      %v1654 = vpop.f32.mrf.mxu0
      %v1655 = vadd.f32 0.0, %v1654
      %v1656 = vpop.f32.mrf.mxu0
      %v1657 = vpop.f32.mrf.mxu0
      %v1658 = vadd.f32 0.0, %v1657
      %v1659 = vpop.f32.mrf.mxu0
      %1660 = vmatprep.mubr.bf16.mxu0 0
      %1661 = vmatmul.mubr.bf16.gmra.mxu0 %v1604
      %v1662 = vpop.f32.mrf.mxu0
      %v1663 = vadd.f32 0.0, %v1662
      %v1664 = vpop.f32.mrf.mxu0
      %v1665 = vpop.f32.mrf.mxu0
      %v1666 = vadd.f32 0.0, %v1665
      %v1667 = vpop.f32.mrf.mxu0
      %1668 = vmatprep.mubr.bf16.mxu0 0
      %1669 = vmatmul.mubr.bf16.gmra.mxu0 %v1607
      %v1670 = vpop.f32.mrf.mxu0
      %v1671 = vadd.f32 0.0, %v1670
      %v1672 = vpop.f32.mrf.mxu0
      %v1673 = vpop.f32.mrf.mxu0
      %v1674 = vadd.f32 0.0, %v1673
      %v1675 = vpop.f32.mrf.mxu0
      %1676 = vmatprep.mubr.bf16.mxu0 0
      %1677 = vmatmul.mubr.bf16.gmra.mxu0 %v1610
      %v1678 = vpop.f32.mrf.mxu0
      %v1679 = vadd.f32 0.0, %v1678
      %v1680 = vpop.f32.mrf.mxu0
      %v1681 = vpop.f32.mrf.mxu0
      %v1682 = vadd.f32 0.0, %v1681
      %v1683 = vpop.f32.mrf.mxu0
      %1684 = vdwg.mxu0
      %v1685 = vadd.f32 %v1486, %v1647
      %v1686 = vadd.f32 %v1487, %v1650
      %v1687 = vadd.f32 %v1488, %v1655
      %v1688 = vadd.f32 %v1489, %v1658
      %v1689 = vadd.f32 %v1490, %v1663
      %v1690 = vadd.f32 %v1491, %v1666
      %v1691 = vadd.f32 %v1492, %v1671
      %v1692 = vadd.f32 %v1493, %v1674
      %v1693 = vadd.f32 %v1494, %v1679
      %v1694 = vadd.f32 %v1495, %v1682
      %1695 = vst.msk [vmem:[#allocation2] sm:$0xff] %vm179, %v1685
      %1696 = vst.msk [vmem:[#allocation2 + $0x8] sm:$0xff] %vm179, %v1686
      %1697 = vst.msk [vmem:[#allocation2 + $0x10] sm:$0xff] %vm179, %v1687
      %1698 = vst.msk [vmem:[#allocation2 + $0x18] sm:$0xff] %vm179, %v1688
      %1699 = vst.msk [vmem:[#allocation2 + $0x20] sm:$0xff] %vm179, %v1689
      %1700 = vst.msk [vmem:[#allocation2 + $0x28] sm:$0xff] %vm179, %v1690
      %1701 = vst.msk [vmem:[#allocation2 + $0x30] sm:$0xff] %vm179, %v1691
      %1702 = vst.msk [vmem:[#allocation2 + $0x38] sm:$0xff] %vm179, %v1692
      %1703 = vst.msk [vmem:[#allocation2 + $0x40] sm:$0xff] %vm179, %v1693
      %1704 = vst.msk [vmem:[#allocation2 + $0x48] sm:$0xff] %vm179, %v1694
      %v1705 = vld [vmem:[#allocation2] sm:$0xff]
      %v1706 = vld [vmem:[#allocation2 + $0x8] sm:$0xff]
      %v1707 = vld [vmem:[#allocation2 + $0x10] sm:$0xff]
      %v1708 = vld [vmem:[#allocation2 + $0x18] sm:$0xff]
      %v1709 = vld [vmem:[#allocation2 + $0x20] sm:$0xff]
      %v1710 = vld [vmem:[#allocation2 + $0x28] sm:$0xff]
      %v1711 = vld [vmem:[#allocation2 + $0x30] sm:$0xff]
      %v1712 = vld [vmem:[#allocation2 + $0x38] sm:$0xff]
      %v1713 = vld [vmem:[#allocation2 + $0x40] sm:$0xff]
      %v1714 = vld [vmem:[#allocation2 + $0x48] sm:$0xff]
      %v1715 = vld [vmem:[%s165 + $0x8] sm:$0x8]
      %v1716 = vld [vmem:[%s165 + $0xc] sm:$0xf]
      %v1717 = vld [vmem:[%s165 + $0x10] sm:$0xf]
      %v1718 = vld [vmem:[%s165 + $0x14] sm:$0xf]
      %v1719 = vld [vmem:[%s165 + $0x18] sm:$0xf]
      %v1720 = vld [vmem:[%s165 + $0x1c] sm:$0xf]
      %v1721 = vld [vmem:[%s165 + $0x20] sm:$0xf]
      %v1722 = vld [vmem:[%s165 + $0x24] sm:$0xf]
      %v1723 = vld [vmem:[%s165 + $0x28] sm:$0xf]
      %v1724 = vld [vmem:[%s165 + $0x2c] sm:$0xf]
      %v1725 = vld [vmem:[%s165 + $0x30] sm:$0x7]
      %v1726 = vld [vmem:[%s1 + $0x40] sm:$0xf]
      %v1727 = vld [vmem:[%s1 + $0x44] sm:$0xf]
      %v1739 = vunpack.c.l.b16 %v1715
      %v1740 = vunpack.c.l.b16 %v1716
      %v1741 = vunpack.c.l.b16 %v1717
      %v1742 = vunpack.c.l.b16 %v1718
      %v1743 = vunpack.c.l.b16 %v1719
      %v1744 = vunpack.c.l.b16 %v1720
      %v1745 = vunpack.c.l.b16 %v1721
      %v1746 = vunpack.c.l.b16 %v1722
      %v1747 = vunpack.c.l.b16 %v1723
      %v1748 = vunpack.c.l.b16 %v1724
      %v1749 = vunpack.c.l.b16 %v1725
      %v1750 = vpack.c.b16 %v1740, %v1739
      %v1751 = vpack.c.b16 %v1742, %v1741
      %v1752 = vpack.c.b16 %v1744, %v1743
      %v1753 = vpack.c.b16 %v1746, %v1745
      %v1754 = vpack.c.b16 %v1748, %v1747
      %v1755 = vpack.c.b16 %v1749, %v1749
      %vm1756 = vcmask 1044480
      %v1757 = vrot.slane %v1750, 3
      %v1758 = vrot.slane %v1751, 3
      %v1759 = vsel %vm1756, %v1757, %v1758
      %v1760 = vrot.slane %v1752, 3
      %v1761 = vsel %vm1756, %v1758, %v1760
      %v1762 = vrot.slane %v1753, 3
      %v1763 = vsel %vm1756, %v1760, %v1762
      %v1764 = vrot.slane %v1754, 3
      %v1765 = vsel %vm1756, %v1762, %v1764
      %v1766 = vrot.slane %v1755, 3
      %v1767 = vsel %vm1756, %v1764, %v1766
      %v1770 = vunpack.c.l.b16 %v1726
      %v1771 = vunpack.c.l.b16 %v1727
      %v1772 = vpack.c.b16 %v1771, %v1770
      %v1775 = vsel %vm179, %v1759, 0
      %v1778 = vsel %vm179, %v1761, 0
      %v1781 = vsel %vm179, %v1763, 0
      %v1784 = vsel %vm179, %v1765, 0
      %v1787 = vsel %vm179, %v1767, 0
      %1789 = vmatprep.subr.bf16.mxu0 0
      %1790 = vmatpush1.bf16.msra.mxu0 0
      %1791 = vmatprep.subr.bf16.mxu0 0
      %1792 = vmatpush1.bf16.msra.mxu0 0
      %1793 = vmatprep.subr.bf16.mxu0 0
      %1794 = vmatpush1.bf16.msra.mxu0 0
      %1795 = vmatprep.subr.bf16.mxu0 0
      %1796 = vmatpush1.bf16.msra.mxu0 0
      %1797 = vmatprep.subr.bf16.mxu0 0
      %1798 = vmatpush1.bf16.msra.mxu0 0
      %1799 = vmatprep.subr.bf16.mxu0 0
      %1800 = vmatpush1.bf16.msra.mxu0 0
      %1801 = vmatprep.subr.bf16.mxu0 0
      %1802 = vmatpush1.bf16.msra.mxu0 0
      %1803 = vmatprep.subr.bf16.mxu0 0
      %1804 = vmatpush1.bf16.msra.mxu0 %v1772
      %1805 = vmatprep.subr.bf16.mxu0 0
      %1806 = vmatpush2.bf16.msra.mxu0 0
      %1807 = vmatprep.subr.bf16.mxu0 0
      %1808 = vmatpush2.bf16.msra.mxu0 0
      %1809 = vmatprep.subr.bf16.mxu0 0
      %1810 = vmatpush2.bf16.msra.mxu0 0
      %1811 = vmatprep.subr.bf16.mxu0 0
      %1812 = vmatpush2.bf16.msra.mxu0 0
      %1813 = vmatprep.subr.bf16.mxu0 0
      %1814 = vmatpush2.bf16.msra.mxu0 0
      %1815 = vmatprep.subr.bf16.mxu0 0
      %1816 = vmatpush2.bf16.msra.mxu0 0
      %1817 = vmatprep.subr.bf16.mxu0 0
      %1818 = vmatpush2.bf16.msra.mxu0 0
      %1819 = vmatprep.subr.bf16.mxu0 0
      %1820 = vmatpush2.bf16.msra.mxu0 0
      %1821 = vmatprep.mubr.bf16.mxu0 0
      %1822 = vmatmul.mubr.bf16.gmra.mxu0 %v1775
      %v1823 = vpop.f32.mrf.mxu0
      %v1824 = vadd.f32 0.0, %v1823
      %v1825 = vpop.f32.mrf.mxu0
      %v1826 = vpop.f32.mrf.mxu0
      %v1827 = vadd.f32 0.0, %v1826
      %v1828 = vpop.f32.mrf.mxu0
      %1829 = vmatprep.mubr.bf16.mxu0 0
      %1830 = vmatmul.mubr.bf16.gmra.mxu0 %v1778
      %v1831 = vpop.f32.mrf.mxu0
      %v1832 = vadd.f32 0.0, %v1831
      %v1833 = vpop.f32.mrf.mxu0
      %v1834 = vpop.f32.mrf.mxu0
      %v1835 = vadd.f32 0.0, %v1834
      %v1836 = vpop.f32.mrf.mxu0
      %1837 = vmatprep.mubr.bf16.mxu0 0
      %1838 = vmatmul.mubr.bf16.gmra.mxu0 %v1781
      %v1839 = vpop.f32.mrf.mxu0
      %v1840 = vadd.f32 0.0, %v1839
      %v1841 = vpop.f32.mrf.mxu0
      %v1842 = vpop.f32.mrf.mxu0
      %v1843 = vadd.f32 0.0, %v1842
      %v1844 = vpop.f32.mrf.mxu0
      %1845 = vmatprep.mubr.bf16.mxu0 0
      %1846 = vmatmul.mubr.bf16.gmra.mxu0 %v1784
      %v1847 = vpop.f32.mrf.mxu0
      %v1848 = vadd.f32 0.0, %v1847
      %v1849 = vpop.f32.mrf.mxu0
      %v1850 = vpop.f32.mrf.mxu0
      %v1851 = vadd.f32 0.0, %v1850
      %v1852 = vpop.f32.mrf.mxu0
      %1853 = vmatprep.mubr.bf16.mxu0 0
      %1854 = vmatmul.mubr.bf16.gmra.mxu0 %v1787
      %v1855 = vpop.f32.mrf.mxu0
      %v1856 = vadd.f32 0.0, %v1855
      %v1857 = vpop.f32.mrf.mxu0
      %v1858 = vpop.f32.mrf.mxu0
      %v1859 = vadd.f32 0.0, %v1858
      %v1860 = vpop.f32.mrf.mxu0
      %1861 = vdwg.mxu0
      %v1862 = vadd.f32 %v1705, %v1824
      %v1863 = vadd.f32 %v1706, %v1827
      %v1864 = vadd.f32 %v1707, %v1832
      %v1865 = vadd.f32 %v1708, %v1835
      %v1866 = vadd.f32 %v1709, %v1840
      %v1867 = vadd.f32 %v1710, %v1843
      %v1868 = vadd.f32 %v1711, %v1848
      %v1869 = vadd.f32 %v1712, %v1851
      %v1870 = vadd.f32 %v1713, %v1856
      %v1871 = vadd.f32 %v1714, %v1859
      %1872 = vst.msk [vmem:[#allocation2] sm:$0xff] %vm179, %v1862
      %1873 = vst.msk [vmem:[#allocation2 + $0x8] sm:$0xff] %vm179, %v1863
      %1874 = vst.msk [vmem:[#allocation2 + $0x10] sm:$0xff] %vm179, %v1864
      %1875 = vst.msk [vmem:[#allocation2 + $0x18] sm:$0xff] %vm179, %v1865
      %1876 = vst.msk [vmem:[#allocation2 + $0x20] sm:$0xff] %vm179, %v1866
      %1877 = vst.msk [vmem:[#allocation2 + $0x28] sm:$0xff] %vm179, %v1867
      %1878 = vst.msk [vmem:[#allocation2 + $0x30] sm:$0xff] %vm179, %v1868
      %1879 = vst.msk [vmem:[#allocation2 + $0x38] sm:$0xff] %vm179, %v1869
      %1880 = vst.msk [vmem:[#allocation2 + $0x40] sm:$0xff] %vm179, %v1870
      %1881 = vst.msk [vmem:[#allocation2 + $0x48] sm:$0xff] %vm179, %v1871
      %v1882 = vld [vmem:[#allocation2] sm:$0xff]
      %v1883 = vld [vmem:[#allocation2 + $0x8] sm:$0xff]
      %v1884 = vld [vmem:[#allocation2 + $0x10] sm:$0xff]
      %v1885 = vld [vmem:[#allocation2 + $0x18] sm:$0xff]
      %v1886 = vld [vmem:[#allocation2 + $0x20] sm:$0xff]
      %v1887 = vld [vmem:[#allocation2 + $0x28] sm:$0xff]
      %v1888 = vld [vmem:[#allocation2 + $0x30] sm:$0xff]
      %v1889 = vld [vmem:[#allocation2 + $0x38] sm:$0xff]
      %v1890 = vld [vmem:[#allocation2 + $0x40] sm:$0xff]
      %v1891 = vld [vmem:[#allocation2 + $0x48] sm:$0xff]
      %v1892 = vmax.f32 %v1882, 0.0
      %v1893 = vmax.f32 %v1883, 0.0
      %v1894 = vmax.f32 %v1884, 0.0
      %v1895 = vmax.f32 %v1885, 0.0
      %v1896 = vmax.f32 %v1886, 0.0
      %v1897 = vmax.f32 %v1887, 0.0
      %v1898 = vmax.f32 %v1888, 0.0
      %v1899 = vmax.f32 %v1889, 0.0
      %v1900 = vmax.f32 %v1890, 0.0
      %v1901 = vmax.f32 %v1891, 0.0
      %v1902 = vpack.c.bf16 %v1893, %v1892
      %v1903 = vpack.c.bf16 %v1895, %v1894
      %v1904 = vpack.c.bf16 %v1897, %v1896
      %v1905 = vpack.c.bf16 %v1899, %v1898
      %v1906 = vpack.c.bf16 %v1901, %v1900
      %v1912 = vunpack.c.l.b16 %v1902
      %v1913 = vunpack.c.h.b16 %v1902
      %v1914 = vunpack.c.l.b16 %v1903
      %v1915 = vunpack.c.h.b16 %v1903
      %v1916 = vunpack.c.l.b16 %v1904
      %v1917 = vunpack.c.h.b16 %v1904
      %v1918 = vunpack.c.l.b16 %v1905
      %v1919 = vunpack.c.h.b16 %v1905
      %v1920 = vunpack.c.l.b16 %v1906
      %v1921 = vunpack.c.h.b16 %v1906
      %v1922 = vpack.c.b16 %v1912, %v1912
      %v1923 = vpack.c.b16 %v1913, %v1913
      %v1924 = vpack.c.b16 %v1914, %v1914
      %v1925 = vpack.c.b16 %v1915, %v1915
      %v1926 = vpack.c.b16 %v1916, %v1916
      %v1927 = vpack.c.b16 %v1917, %v1917
      %v1928 = vpack.c.b16 %v1918, %v1918
      %v1929 = vpack.c.b16 %v1919, %v1919
      %v1930 = vpack.c.b16 %v1920, %v1920
      %v1931 = vpack.c.b16 %v1921, %v1921
      %vm1942 = vcmask 125952
      %1943 = vst.msk [vmem:[%s170] sm:$0xf] %vm1942, %v1922
      %1944 = vst.msk [vmem:[%s170 + $0x4] sm:$0xf] %vm1942, %v1923
      %1945 = vst.msk [vmem:[%s170 + $0x8] sm:$0xf] %vm1942, %v1924
      %1946 = vst.msk [vmem:[%s170 + $0xc] sm:$0xf] %vm1942, %v1925
      %1947 = vst.msk [vmem:[%s170 + $0x10] sm:$0xf] %vm1942, %v1926
      %1948 = vst.msk [vmem:[%s170 + $0x14] sm:$0xf] %vm1942, %v1927
      %1949 = vst.msk [vmem:[%s170 + $0x18] sm:$0xf] %vm1942, %v1928
      %1950 = vst.msk [vmem:[%s170 + $0x1c] sm:$0xf] %vm1942, %v1929
      %1951 = vst.msk [vmem:[%s170 + $0x20] sm:$0xf] %vm1942, %v1930
      %1952 = vst.msk [vmem:[%s170 + $0x24] sm:$0xf] %vm1942, %v1931
      %p1953 = scmp.lt.s32.totalorder %s14, 1
      %s1954 = scalar_select %p1953, %s14, 1
      %s1955 = smul.addr %s1954, 10
      %s1956 = smul.addr %s1955, 4
      %s1957 = scalar_lea.vmem %s3, %s1956
      // Predicated region
      $region33: #{center_back_forward.15} parent=31 // pred_check
        %p1958 = pneg %p100
      $region34: #{center_back_forward.15} parent=31 // pred_check_branch
        %1960 = sbr.rel (%p1958) target = $region36
      $region35: #{center_back_forward.15} parent=31 // pred_region
        _
      $region36: #{center_back_forward.15} parent=31 // pred_fallthru
        _
    $region32: #{center_back_forward.15} parent=5 // pred_fallthru
      _
    %p1961 = scmp.le.s32.totalorder 2, %s9
    // Predicated region
    $region37: #{center_back_forward.15} parent=5 // pred_check
      %p1962 = pneg %p1961
    $region38: #{center_back_forward.15} parent=5 // pred_check_branch
      %1964 = sbr.rel (%p1962) target = $region40
    $region39: #{center_back_forward.15} parent=5 // pred_region
      %s1965 = ssub.s32 %s9, 2
      // Predicated region
      $region41: #{center_back_forward.15} parent=39 // pred_check
        %p1966 = pneg %p106
      $region42: #{center_back_forward.15} parent=39 // pred_check_branch
        %1968 = sbr.rel (%p1966) target = $region44
      $region43: #{center_back_forward.15} parent=39 // pred_region
        %p1969 = scmp.lt.s32.totalorder %s15, 1
        %s1970 = scalar_select %p1969, %s15, 1
        %s1971 = smul.addr %s1970, 10
        %s1972 = smul.addr %s1971, 4
        %s1973 = scalar_lea.vmem %s3, %s1972
      $region44: #{center_back_forward.15} parent=39 // pred_fallthru
        _
    $region40: #{center_back_forward.15} parent=5 // pred_fallthru
      _
  $region6: #{center_back_forward.15} parent=0 // loop_footer
    %s13 = sadd.s32 1, %s9
  $region7: #{center_back_forward.15} parent=0 // loop_footer_branch
    %8 = sbr.rel target = $region3
  $region8: #{center_back_forward.15} parent=0 // loop_exit
    _

</llo_original>
